<compile_context>
chip_gen: v5e
topology: v5e:2x2
jax: 0.10.0
libtpu: 0.0.40
codegen_flags: <defaults>
</compile_context>

<pallas_src>
import functools

import jax
import jax.numpy as jnp
from jax.experimental import pallas as pl
from jax.experimental.pallas import tpu as pltpu

_LANE = 128
_SUBLANE = 8


def _cdiv(a, b):
    return -(-a // b)


def _round_up(x, m):
    return _cdiv(x, m) * m


def _logsigmoid(x):
    # numerically stable log(sigmoid(x)) = min(x, 0) - log1p(exp(-|x|))
    return jnp.minimum(x, 0.0) - jnp.log1p(jnp.exp(-jnp.abs(x)))


# ----------------------------------------------------------------------------
# VMEM budgeting (generation-gated via get_tpu_info, conservative fallback).
# ----------------------------------------------------------------------------
def _vmem_capacity_bytes():
    try:
        info = pltpu.get_tpu_info()
        cap = getattr(info, "vmem_capacity_bytes", None)
        if cap:
            return int(cap)
    except Exception:
        pass
    return 64 * 1024 * 1024  # conservative (v7x per-core VMEM)


def _vmem_limit_bytes():
    cap = _vmem_capacity_bytes()
    return int(min(cap * 3 // 4, 100 * 1024 * 1024))


def _padded_table_bytes(rows, cols, itemsize):
    # VMEM layout pads the last dim to 128 lanes and the second-to-last to the
    # dtype's sublane packing (8 for f32, 16 for bf16).
    sub = _SUBLANE * max(1, 4 // itemsize)
    return _round_up(rows, sub) * _round_up(cols, _LANE) * itemsize


def _tables_fit_vmem(syn0, syn1, headroom=8 * 1024 * 1024):
    limit = _vmem_limit_bytes()
    tbl = (_padded_table_bytes(*syn0.shape, jnp.dtype(syn0.dtype).itemsize)
           + _padded_table_bytes(*syn1.shape, jnp.dtype(syn1.dtype).itemsize))
    # 2x: resident copy + a possible value copy made by the in-kernel gather.
    return 2 * tbl + headroom < limit


# ----------------------------------------------------------------------------
# Route A: fused kernel — tables resident in VMEM, gather happens in-kernel.
# ----------------------------------------------------------------------------
def _sgns_fused_kernel(cidx_ref, oidx_ref, mask_ref, syn0_ref, syn1_ref,
                       out_ref, *, num_slots, apply_mask):
    # cidx_ref : (1, TB)  int32   center-word indices for this batch tile
    # oidx_ref : (K+1, TB) int32  slot 0 = context, 1..K = negatives
    # mask_ref : (1, TB)  f32     1.0 for real rows, 0.0 for padded rows
    # syn0_ref / syn1_ref : (V, D)  whole tables, VMEM-resident across the grid
    # out_ref  : (1, 1, 128)      lane-dense per-tile partial loss
    syn0 = syn0_ref[...]
    syn1 = syn1_ref[...]

    cidx = cidx_ref[0, :]                                           # (TB,)
    c_rows = jnp.take(syn0, cidx, axis=0, mode="promise_in_bounds")  # (TB, D)

    if apply_mask:
        mask = mask_ref[0, :]                                       # (TB,)

    loss = jnp.float32(0.0)
    # Statically-unrolled per-slot loop: never materializes a (K+1, TB, D)
    # temporary; multiply in the parameter dtype, accumulate the D-reduce in f32.
    for k in range(num_slots):
        oidx = oidx_ref[k, :]                                       # (TB,)
        o_rows = jnp.take(syn1, oidx, axis=0, mode="promise_in_bounds")
        s = jnp.sum(c_rows * o_rows, axis=-1, dtype=jnp.float32)    # (TB,)
        ls = _logsigmoid(s if k == 0 else -s)
        if apply_mask:
            ls = ls * mask          # padded rows hold valid index 0 -> finite
        loss = loss + jnp.sum(ls)

    out_ref[...] = jnp.full(out_ref.shape, -loss, dtype=jnp.float32)


def _fused_pick_tile(B, D, K1, vmem_budget, batch_tile):
    """Batch tile (multiple of 128) for the fused path."""
    if batch_tile is not None:
        return int(max(_LANE, (int(batch_tile) // _LANE) * _LANE))
    lane_d = _round_up(D, _LANE)
    # Per-row VMEM: double-buffered lane-dense index/mask tiles plus ~4 live
    # (TB, lane_d) f32 temporaries inside the kernel body.
    per_row = 2 * 4 * (K1 + 2) + 4 * 4 * lane_d
    tb = max(vmem_budget // per_row, _LANE)
    tb = min(tb, 8192)                                  # raised cap (was 2048)
    tb = min(tb, _round_up(_cdiv(B, 2), _LANE))         # >= 2 steps when possible
    return int(max(_LANE, (tb // _LANE) * _LANE))


def sgns_loss_fused(syn0, syn1, center_word, context_word, neg_sampling_words,
                    batch_tile=None):
    """Fused SGNS loss: in-kernel gather from VMEM-resident syn0/syn1."""
    V, D = syn0.shape
    B = center_word.shape[0]
    K1 = neg_sampling_words.shape[1] + 1

    itemsize = jnp.dtype(syn0.dtype).itemsize
    vmem_limit = _vmem_limit_bytes()
    tbl_bytes = 2 * _padded_table_bytes(V, D, itemsize)
    budget = vmem_limit - 2 * tbl_bytes - 4 * 1024 * 1024
    if budget < 1 * 1024 * 1024:
        raise ValueError("embedding tables do not fit the VMEM budget")

    tb = _fused_pick_tile(B, D, K1, budget, batch_tile)
    num_tiles = _cdiv(B, tb)
    b_pad = num_tiles * tb
    pad = b_pad - B
    apply_mask = pad > 0

    # Lane-dense index / mask arrays, padded with valid index 0 (masked out).
    cidx = jnp.pad(center_word.astype(jnp.int32)[None, :], ((0, 0), (0, pad)))
    oidx = jnp.concatenate(
        [context_word.astype(jnp.int32)[None, :],
         jnp.transpose(neg_sampling_words.astype(jnp.int32))], axis=0)
    oidx = jnp.pad(oidx, ((0, 0), (0, pad)))
    mask = jnp.pad(jnp.ones((1, B), jnp.float32), ((0, 0), (0, pad)))

    kernel = functools.partial(_sgns_fused_kernel, num_slots=K1,
                               apply_mask=apply_mask)

    partials = pl.pallas_call(
        kernel,
        out_shape=jax.ShapeDtypeStruct((num_tiles, 1, 128), jnp.float32),
        grid=(num_tiles,),
        in_specs=[
            pl.BlockSpec((1, tb), lambda i: (0, i)),       # center indices
            pl.BlockSpec((K1, tb), lambda i: (0, i)),      # context+neg indices
            pl.BlockSpec((1, tb), lambda i: (0, i)),       # row-validity mask
            pl.BlockSpec(memory_space=pltpu.MemorySpace.VMEM),  # syn0 resident
            pl.BlockSpec(memory_space=pltpu.MemorySpace.VMEM),  # syn1 resident
        ],
        out_specs=pl.BlockSpec((1, 1, 128), lambda i: (i, 0, 0)),
        compiler_params=pltpu.CompilerParams(
            dimension_semantics=("parallel",),             # megacore on v7x
            vmem_limit_bytes=vmem_limit,
        ),
    )(cidx, oidx, mask, syn0, syn1)

    return jnp.sum(partials[:, 0, 0])


# ----------------------------------------------------------------------------
# Fallback: wrapper gather (XLA) + tiled compute kernel (large-vocab path).
# ----------------------------------------------------------------------------
def _sgns_tiled_kernel(center_ref, other_ref, out_ref, *, total_rows,
                       tile_rows, apply_mask):
    # center_ref : (TB, D)        center-word embeddings for this batch tile
    # other_ref  : (K+1, TB, D)   slot 0 = context, 1..K = negatives
    # out_ref    : (1, 1, 128)    lane-dense per-tile partial loss
    c = center_ref[...].astype(jnp.float32)
    o = other_ref[...].astype(jnp.float32)

    scores = jnp.sum(o * c[None, :, :], axis=-1)              # (K+1, TB)
    slot = jax.lax.broadcasted_iota(jnp.int32, scores.shape, 0)
    ls = _logsigmoid(jnp.where(slot == 0, scores, -scores))

    if apply_mask:
        # Ragged last tile: out-of-range block rows hold unspecified data, so
        # mask with a select (safe against NaN/Inf) rather than a multiply.
        row = (jax.lax.broadcasted_iota(jnp.int32, scores.shape, 1)
               + pl.program_id(0) * tile_rows)
        ls = jnp.where(row < total_rows, ls, 0.0)

    out_ref[...] = jnp.full(out_ref.shape, -jnp.sum(ls), dtype=jnp.float32)


def _tiled_pick_tile(B, D, K1, itemsize, vmem_budget, batch_tile):
    if batch_tile is not None:
        tb = min(int(batch_tile), B)
        if tb < B:
            tb = max(_SUBLANE, (tb // _SUBLANE) * _SUBLANE)
        return int(tb)
    lane_d = _round_up(D, _LANE)
    per_row = 2 * itemsize * lane_d * (K1 + 1) + 8 * lane_d
    tb = max(_SUBLANE, vmem_budget // per_row)
    tb = min(tb, 8192, _round_up(_cdiv(B, 2), _SUBLANE))
    tb = max(_SUBLANE, (tb // _SUBLANE) * _SUBLANE)
    return int(B if tb >= B else tb)


def sgns_loss_tiled(emb_center, emb_other, batch_tile=None):
    """Fallback: emb_center (B, D), emb_other (K+1, B, D) already gathered."""
    B, D = emb_center.shape
    K1 = emb_other.shape[0]
    itemsize = jnp.dtype(emb_center.dtype).itemsize
    vmem_limit = _vmem_limit_bytes()
    tb = _tiled_pick_tile(B, D, K1, itemsize, vmem_limit // 2, batch_tile)
    num_tiles = _cdiv(B, tb)
    apply_mask = (B % tb) != 0

    kernel = functools.partial(_sgns_tiled_kernel, total_rows=B, tile_rows=tb,
                               apply_mask=apply_mask)

    partials = pl.pallas_call(
        kernel,
        out_shape=jax.ShapeDtypeStruct((num_tiles, 1, 128), jnp.float32),
        grid=(num_tiles,),
        in_specs=[
            pl.BlockSpec((tb, D), lambda i: (i, 0)),
            pl.BlockSpec((K1, tb, D), lambda i: (0, i, 0)),
        ],
        out_specs=pl.BlockSpec((1, 1, 128), lambda i: (i, 0, 0)),
        compiler_params=pltpu.CompilerParams(
            dimension_semantics=("parallel",),
            vmem_limit_bytes=vmem_limit,
        ),
    )(emb_center, emb_other)

    return jnp.sum(partials[:, 0, 0])


# ----------------------------------------------------------------------------
# Model wrapper (forward pass only).
# ----------------------------------------------------------------------------
class SkipGramModelPallas:
    """JAX/Pallas port of skip_gram_model (forward pass only)."""

    def __init__(self, emb_size, emb_dim, key, param_dtype=jnp.float32):
        self.emb_size = emb_size
        self.emb_dim = emb_dim
        init_range = 0.5 / emb_dim
        # syn0 ~ U(-0.5/D, 0.5/D), syn1 = 0 — matches the PyTorch init.
        # param_dtype=bfloat16 is supported (kernel accumulates in f32), but
        # with the fused gather the tables are read from HBM only once per
        # call, so f32 stays the default.
        self.syn0 = jax.random.uniform(
            key, (emb_size, emb_dim), jnp.float32, -init_range, init_range
        ).astype(param_dtype)
        self.syn1 = jnp.zeros((emb_size, emb_dim), param_dtype)
        self._fused_ok = True

    def forward(self, center_word, context_word, neg_sampling_words,
                batch_tile=None, force_fallback=False):
        syn0, syn1 = self.syn0, self.syn1

        if (not force_fallback and self._fused_ok
                and _tables_fit_vmem(syn0, syn1)):
            try:
                out = sgns_loss_fused(syn0, syn1, center_word, context_word,
                                      neg_sampling_words,
                                      batch_tile=batch_tile)
                return jax.block_until_ready(out)
            except Exception:
                # TODO(synk): if the in-kernel gather fails to lower on some
                # backend/dtype combination, we fall back to the wrapper-gather
                # path instead of a manual-DMA row gather (Route B).
                self._fused_ok = False

        # Fallback: XLA gather in the wrapper (one extra HBM round trip of the
        # (K+1, B, D) intermediate) + tiled compute kernel.
        emb_center = jnp.take(syn0, center_word, axis=0)
        idx_all = jnp.concatenate(
            [context_word[None, :], jnp.transpose(neg_sampling_words)], axis=0)
        emb_other = jnp.take(syn1, idx_all, axis=0)
        out = sgns_loss_tiled(emb_center, emb_other, batch_tile=batch_tile)
        return jax.block_until_ready(out)


def reference_loss(syn0, syn1, center_word, context_word, neg_sampling_words):
    emb_center = jnp.take(syn0, center_word, axis=0).astype(jnp.float32)
    emb_context = jnp.take(syn1, context_word, axis=0).astype(jnp.float32)
    emb_neg = jnp.take(syn1, neg_sampling_words, axis=0).astype(jnp.float32)
    y = _logsigmoid(jnp.sum(emb_center * emb_context, axis=1))
    neg_y = _logsigmoid(-jnp.einsum("bkd,bd->bk", emb_neg, emb_center))
    return -(jnp.sum(y) + jnp.sum(neg_y))


if __name__ == "__main__":
    emb_size, emb_dim = 512, 32
    num_neg = 5

    key = jax.random.PRNGKey(0)
    k_w0, k_w1, k_b1, k_b2 = jax.random.split(key, 4)

    model = SkipGramModelPallas(emb_size, emb_dim, k_w0)
    # Spec init leaves syn1 == 0 (degenerate scores); give it a trained-like
    # value so the numerical check actually exercises the kernel math.
    model.syn1 = 0.1 * jax.random.normal(k_w1, (emb_size, emb_dim), jnp.float32)

    def make_batch(k, batch):
        kc, kx, kn = jax.random.split(k, 3)
        c = jax.random.randint(kc, (batch,), 0, emb_size, jnp.int32)
        x = jax.random.randint(kx, (batch,), 0, emb_size, jnp.int32)
        n = jax.random.randint(kn, (batch, num_neg), 0, emb_size, jnp.int32)
        return c, x, n

    def check(loss, c, x, n, tag):
        ref = reference_loss(model.syn0, model.syn1, c, x, n)
        assert jnp.allclose(loss, ref, rtol=2e-5, atol=1e-3), (tag, loss, ref)

    # 1) fused path, auto tile -> 2 grid steps (keeps both v7x cores busy).
    c1, x1, n1 = make_batch(k_b1, 512)
    loss1 = model.forward(c1, x1, n1)
    check(loss1, c1, x1, n1, "fused-auto")

    # 2) fused path, explicit tile with a ragged batch (B % tile != 0 masking).
    c2, x2, n2 = make_batch(k_b2, 320)
    loss2 = model.forward(c2, x2, n2, batch_tile=128)
    check(loss2, c2, x2, n2, "fused-masked")

    # 3) large-vocab fallback path (wrapper gather + tiled compute kernel),
    #    with a tile that does not divide B to exercise the ragged-tile mask.
    loss3 = model.forward(c1, x1, n1, batch_tile=120, force_fallback=True)
    check(loss3, c1, x1, n1, "fallback-tiled")

    print("KERNEL_OK")
</pallas_src>

<mosaic_0001>
module attributes {stable_mosaic.version = 11 : i64} {
  func.func @_sgns_tiled_kernel(%arg0: i32, %arg1: memref<256x32xf32, #tpu.memory_space<vmem>>, %arg2: memref<6x256x32xf32, #tpu.memory_space<vmem>>, %arg3: memref<1x1x128xf32, #tpu.memory_space<vmem>>) attributes {dimension_semantics = [#tpu.dimension_semantics<parallel>], iteration_bounds = array<i64: 2>, scalar_prefetch = 0 : i64, scratch_operands = 0 : i64, tpu.core_type = #tpu.core_type<tc>, window_params = [{transform_indices = @transform_0, window_bounds = array<i64: 256, 32>}, {transform_indices = @transform_1, window_bounds = array<i64: 6, 256, 32>}, {transform_indices = @transform_2, window_bounds = array<i64: 1, 1, 128>}]} {
    %c0 = arith.constant 0 : index
    %c0_0 = arith.constant 0 : index
    %0 = vector.load %arg1[%c0, %c0_0] : memref<256x32xf32, #tpu.memory_space<vmem>>, vector<256x32xf32>
    %c0_1 = arith.constant 0 : index
    %c0_2 = arith.constant 0 : index
    %c0_3 = arith.constant 0 : index
    %1 = vector.load %arg2[%c0_1, %c0_2, %c0_3] : memref<6x256x32xf32, #tpu.memory_space<vmem>>, vector<6x256x32xf32>
    %2 = vector.shape_cast %0 : vector<256x32xf32> to vector<1x256x32xf32>
    %3 = vector.broadcast %2 : vector<1x256x32xf32> to vector<6x256x32xf32>
    %4 = arith.mulf %1, %3 : vector<6x256x32xf32>
    %cst = arith.constant dense<0.000000e+00> : vector<6x256xf32>
    %5 = vector.multi_reduction <add>, %4, %cst [2] : vector<6x256x32xf32> to vector<6x256xf32>
    %6 = tpu.iota {dimensions = array<i32: 0>} : vector<6x256xi32>
    %c0_i32 = arith.constant 0 : i32
    %7 = vector.broadcast %c0_i32 : i32 to vector<6x256xi32>
    %8 = arith.cmpi eq, %6, %7 : vector<6x256xi32>
    %cst_4 = arith.constant 0.000000e+00 : f32
    %9 = vector.broadcast %cst_4 : f32 to vector<6x256xf32>
    %10 = arith.subf %9, %5 : vector<6x256xf32>
    %11 = arith.select %8, %5, %10 : vector<6x256xi1>, vector<6x256xf32>
    %cst_5 = arith.constant 0.000000e+00 : f32
    %12 = vector.broadcast %cst_5 : f32 to vector<6x256xf32>
    %13 = arith.minimumf %11, %12 : vector<6x256xf32>
    %14 = math.absf %11 : vector<6x256xf32>
    %cst_6 = arith.constant 0.000000e+00 : f32
    %15 = vector.broadcast %cst_6 : f32 to vector<6x256xf32>
    %16 = arith.subf %15, %14 : vector<6x256xf32>
    %17 = math.exp %16 : vector<6x256xf32>
    %18 = math.log1p %17 : vector<6x256xf32>
    %19 = arith.subf %13, %18 : vector<6x256xf32>
    %20 = vector.shape_cast %19 : vector<6x256xf32> to vector<1x6x256xf32>
    %cst_7 = arith.constant dense<0.000000e+00> : vector<1xf32>
    %21 = vector.multi_reduction <add>, %20, %cst_7 [1, 2] : vector<1x6x256xf32> to vector<1xf32>
    %22 = vector.shape_cast %21 : vector<1xf32> to vector<1x1x1xf32>
    %23 = vector.extract %22[0, 0, 0] : f32 from vector<1x1x1xf32>
    %cst_8 = arith.constant 0.000000e+00 : f32
    %24 = arith.subf %cst_8, %23 : f32
    %25 = vector.broadcast %24 : f32 to vector<1x1x128xf32>
    %c0_9 = arith.constant 0 : index
    %c0_10 = arith.constant 0 : index
    %c0_11 = arith.constant 0 : index
    %26 = vector.load %arg3[%c0_9, %c0_10, %c0_11] : memref<1x1x128xf32, #tpu.memory_space<vmem>>, vector<1x1x128xf32>
    tpu.vector_store %arg3[%c0_9, %c0_10, %c0_11], %25 {strides = array<i32>} : memref<1x1x128xf32, #tpu.memory_space<vmem>>, vector<1x1x128xf32>,
    return
  }
  func.func @transform_0(%arg0: i32) -> (i32, i32) {
    %c0_i32 = arith.constant 0 : i32
    %c0_i32_0 = arith.constant 0 : i32
    return %arg0, %c0_i32 : i32, i32
  }
  func.func @transform_1(%arg0: i32) -> (i32, i32, i32) {
    %c0_i32 = arith.constant 0 : i32
    %c0_i32_0 = arith.constant 0 : i32
    %c0_i32_1 = arith.constant 0 : i32
    return %c0_i32, %arg0, %c0_i32_0 : i32, i32, i32
  }
  func.func @transform_2(%arg0: i32) -> (i32, i32, i32) {
    %c0_i32 = arith.constant 0 : i32
    %c0_i32_0 = arith.constant 0 : i32
    %c0_i32_1 = arith.constant 0 : i32
    return %arg0, %c0_i32, %c0_i32_0 : i32, i32, i32
  }
}

</mosaic_0001>

<llo_original>
// kernel: tpu_custom_call.1
$region0: #{tpu_custom_call.1}
  #allocation0 [shape = 'u32[]', space=smem, size = 0x4, offset = 0x4, fixed_abs, tag = 'smem constant byte address 0x4 - core index']
  #allocation1 [shape = 'u32[72,128]{1,0:T(1,128)}', space=vmem, size = 0x9000, scoped, tag = 'internal scratch']
  %s0 = inlined_call_operand.vmem [shape: f32[512,32], index: 0, kind: input, shape index: {}]
  %s1 = inlined_call_operand.vmem [shape: f32[6,512,32], index: 1, kind: input, shape index: {}]
  %s2 = inlined_call_operand.hbm [shape: f32[2,1,128], index: 2, kind: output, shape index: {}]
  %s3 = sld [smem:[#allocation0]]
  $region79: #{tpu_custom_call.1} parent=0
    _
  %s5 = ssub.s32 1, %s3
  %s6 = scalar_select 0, %s5, %s3
  $region1: #{tpu_custom_call.1} parent=0
    #allocation2 [shape = 'u8[1572864]{0}', space=vmem, size = 0x180000, scoped, tag = 'input window, operand 1']
    #allocation3 [shape = 'u8[1024]{0}', space=vmem, size = 0x400, scoped, tag = 'output window, operand 0']
    #allocation4 [shape = 's32[2]{0}', space=sflag, size = 0x8, scoped, tag = 'scoped memory for tpu_custom_call.1']
    %7 = vsyncpa [#allocation4], 0
    %s8 = scalar_lea.sflag [#allocation4], 1
    %9 = vsyncpa %s8, 0
    loop: start=0, step=1, limit=4
    $region2: #{tpu_custom_call.1} parent=1 // loop_pre_header
      _
    $region3: #{tpu_custom_call.1} parent=1 // loop_header
      %s11 = sphi 0, %s15
      %p12 = scmp.ge.s32.totalorder %s11, 4
      %s21 = sphi 0, %s23
      %s24 = sphi 0, %s21
      %s25 = sphi 0, %s24
      %s41 = sphi 0, %s25
      %s47 = sphi 0, %s49
      %s50 = sphi 0, %s47
      %s51 = sphi 0, %s50
      %s67 = sphi 0, %s51
      %s73 = sphi 0, %s75
      %s76 = sphi 0, %s73
      %s77 = sphi 0, %s76
      %s93 = sphi 0, %s77
    $region4: #{tpu_custom_call.1} parent=1 // loop_header_branch
      %14 = sbr.rel (%p12) target = $region8
    $region5: #{tpu_custom_call.1} parent=1 // loop_body
      %s16 = ssub.s32 %s11, 1
      %s17 = ssub.s32 %s11, 2
      %s18 = sadd.s32 %s11, 1
      %s19 = ssub.s32 %s11, %s18
      %p20 = scmp.eq.s32.totalorder %s19, 0
      %s22 = sadd.s32 %s21, 1
      %s23 = scalar_select %p20, %s21, %s22
      %p26 = pneg %p20
      %p27 = scmp.eq.s32.totalorder %s11, 1
      %p28 = por %p26, %p27
      %p29 = scmp.ne.s32.totalorder %s21, %s24
      %p30 = scmp.eq.s32.totalorder %s11, 0
      %p31 = por %p29, %p30
      %p32 = scmp.ne.s32.totalorder %s21, %s24
      %p33 = scmp.eq.s32.totalorder %s16, 1
      %p34 = por %p32, %p33
      %p35 = scmp.ne.s32.totalorder %s24, %s25
      %p36 = scmp.eq.s32.totalorder %s16, 0
      %p37 = por %p35, %p36
      %p38 = scmp.ne.s32.totalorder %s24, %s25
      %p39 = scmp.eq.s32.totalorder %s17, 1
      %p40 = por %p38, %p39
      %p42 = scmp.ne.s32.totalorder %s25, %s41
      %p43 = scmp.eq.s32.totalorder %s17, 0
      %p44 = por %p42, %p43
      %s45 = ssub.s32 %s11, %s18
      %p46 = scmp.eq.s32.totalorder %s45, 0
      %s48 = sadd.s32 %s47, 1
      %s49 = scalar_select %p46, %s47, %s48
      %p52 = pneg %p46
      %p53 = scmp.eq.s32.totalorder %s11, 1
      %p54 = por %p52, %p53
      %p55 = scmp.ne.s32.totalorder %s47, %s50
      %p56 = scmp.eq.s32.totalorder %s11, 0
      %p57 = por %p55, %p56
      %p58 = scmp.ne.s32.totalorder %s47, %s50
      %p59 = scmp.eq.s32.totalorder %s16, 1
      %p60 = por %p58, %p59
      %p61 = scmp.ne.s32.totalorder %s50, %s51
      %p62 = scmp.eq.s32.totalorder %s16, 0
      %p63 = por %p61, %p62
      %p64 = scmp.ne.s32.totalorder %s50, %s51
      %p65 = scmp.eq.s32.totalorder %s17, 1
      %p66 = por %p64, %p65
      %p68 = scmp.ne.s32.totalorder %s51, %s67
      %p69 = scmp.eq.s32.totalorder %s17, 0
      %p70 = por %p68, %p69
      %s71 = ssub.s32 %s11, %s18
      %p72 = scmp.eq.s32.totalorder %s71, 0
      %s74 = sadd.s32 %s73, 1
      %s75 = scalar_select %p72, %s73, %s74
      %p78 = pneg %p72
      %p79 = scmp.eq.s32.totalorder %s11, 1
      %p80 = por %p78, %p79
      %p81 = scmp.ne.s32.totalorder %s73, %s76
      %p82 = scmp.eq.s32.totalorder %s11, 0
      %p83 = por %p81, %p82
      %p84 = scmp.ne.s32.totalorder %s73, %s76
      %p85 = scmp.eq.s32.totalorder %s16, 1
      %p86 = por %p84, %p85
      %p87 = scmp.ne.s32.totalorder %s76, %s77
      %p88 = scmp.eq.s32.totalorder %s16, 0
      %p89 = por %p87, %p88
      %p90 = scmp.ne.s32.totalorder %s76, %s77
      %p91 = scmp.eq.s32.totalorder %s17, 1
      %p92 = por %p90, %p91
      %p94 = scmp.ne.s32.totalorder %s77, %s93
      %p95 = scmp.eq.s32.totalorder %s17, 0
      %p96 = por %p94, %p95
      %p97 = scmp.le.s32.totalorder 1, %s11
      %p98 = scmp.lt.s32.totalorder %s11, 3
      %p99 = pnand %p97, %p98
      %p100 = pneg %p99
      // Predicated region
      $region9: #{tpu_custom_call.1} parent=5 // pred_check
        _
      $region10: #{tpu_custom_call.1} parent=5 // pred_check_branch
        %102 = sbr.rel (%p99) target = $region12
      $region11: #{tpu_custom_call.1} parent=5 // pred_region
        %s103 = ssub.s32 %s11, 1
      $region12: #{tpu_custom_call.1} parent=5 // pred_fallthru
        _
      %p104 = scmp.lt.s32.totalorder %s11, 2
      // Predicated region
      $region13: #{tpu_custom_call.1} parent=5 // pred_check
        %p105 = pneg %p104
      $region14: #{tpu_custom_call.1} parent=5 // pred_check_branch
        %107 = sbr.rel (%p105) target = $region16
      $region15: #{tpu_custom_call.1} parent=5 // pred_region
        // Predicated region
        $region17: #{tpu_custom_call.1} parent=15 // pred_check
          %p108 = pneg %p31
        $region18: #{tpu_custom_call.1} parent=15 // pred_check_branch
          %110 = sbr.rel (%p108) target = $region20
        $region19: #{tpu_custom_call.1} parent=15 // pred_region
          %s111 = smul.u32 32, %s11
          %p112 = scmp.lt.s32.totalorder %s111, 63
          %s113 = scalar_select %p112, %s111, 63
          %s114 = smul.addr %s113, 8
          %s115 = scalar_lea.vmem %s0, %s114
          %s116 = smul.u32 32, %s11
        $region20: #{tpu_custom_call.1} parent=15 // pred_fallthru
          _
        // Predicated region
        $region21: #{tpu_custom_call.1} parent=15 // pred_check
          %p117 = pneg %p57
        $region22: #{tpu_custom_call.1} parent=15 // pred_check_branch
          %119 = sbr.rel (%p117) target = $region24
        $region23: #{tpu_custom_call.1} parent=15 // pred_region
          %s120 = sand.u32 %s47, 1
          %s121 = sand.u32 %s47, 1
          %s122 = smul.addr %s121, 1536
          %s123 = scalar_lea.vmem [#allocation2], %s122
          %s124 = smul.u32 32, %s11
          %s125 = smul.addr %s124, 8
          %s126 = scalar_lea.vmem %s1, %s125
          // Predicated region
          $region25: #{tpu_custom_call.1} parent=23 // pred_check
            _
          $region26: #{tpu_custom_call.1} parent=23 // pred_check_branch
            %128 = sbr.rel (0) target = $region28
          $region27: #{tpu_custom_call.1} parent=23 // pred_region
            // Predicated region
            $region29: #{tpu_custom_call.1} parent=27 // pred_check
              _
            $region30: #{tpu_custom_call.1} parent=27 // pred_check_branch
              %130 = sbr.rel (0) target = $region32
            $region31: #{tpu_custom_call.1} parent=27 // pred_region
              // Predicated region
              $region44: #{tpu_custom_call.1} parent=31 // pred_check
                _
              $region45: #{tpu_custom_call.1} parent=31 // pred_check_branch
                %528 = sbr.rel (0) target = $region47
              $region46: #{tpu_custom_call.1} parent=31 // pred_region
                loop: start=0, step=1, limit=1
                $region48: #{tpu_custom_call.1} parent=46 // loop_pre_header
                  _
                $region49: #{tpu_custom_call.1} parent=46 // loop_header
                  %s530 = sphi 0, %s534
                  %p531 = scmp.ge.s32.totalorder %s530, 1
                  %s535 = sphi %s126, %s126
                  %s536 = sphi %s123, %s123
                $region50: #{tpu_custom_call.1} parent=46 // loop_header_branch
                  %533 = sbr.rel (%p531) target = $region54
                $region51: #{tpu_custom_call.1} parent=46 // loop_body
                  %v537 = vld [vmem:[%s535] sm:$0xff]
                  %538 = vst [vmem:[%s536] sm:$0xff] %v537
                  %v539 = vld [vmem:[%s535 + $0x8] sm:$0xff]
                  %540 = vst [vmem:[%s536 + $0x8] sm:$0xff] %v539
                  %v541 = vld [vmem:[%s535 + $0x10] sm:$0xff]
                  %542 = vst [vmem:[%s536 + $0x10] sm:$0xff] %v541
                  %v543 = vld [vmem:[%s535 + $0x18] sm:$0xff]
                  %544 = vst [vmem:[%s536 + $0x18] sm:$0xff] %v543
                  %v545 = vld [vmem:[%s535 + $0x20] sm:$0xff]
                  %546 = vst [vmem:[%s536 + $0x20] sm:$0xff] %v545
                  %v547 = vld [vmem:[%s535 + $0x28] sm:$0xff]
                  %548 = vst [vmem:[%s536 + $0x28] sm:$0xff] %v547
                  %v549 = vld [vmem:[%s535 + $0x30] sm:$0xff]
                  %550 = vst [vmem:[%s536 + $0x30] sm:$0xff] %v549
                  %v551 = vld [vmem:[%s535 + $0x38] sm:$0xff]
                  %552 = vst [vmem:[%s536 + $0x38] sm:$0xff] %v551
                  %v553 = vld [vmem:[%s535 + $0x40] sm:$0xff]
                  %554 = vst [vmem:[%s536 + $0x40] sm:$0xff] %v553
                  %v555 = vld [vmem:[%s535 + $0x48] sm:$0xff]
                  %556 = vst [vmem:[%s536 + $0x48] sm:$0xff] %v555
                  %v557 = vld [vmem:[%s535 + $0x50] sm:$0xff]
                  %558 = vst [vmem:[%s536 + $0x50] sm:$0xff] %v557
                  %v559 = vld [vmem:[%s535 + $0x58] sm:$0xff]
                  %560 = vst [vmem:[%s536 + $0x58] sm:$0xff] %v559
                  %v561 = vld [vmem:[%s535 + $0x60] sm:$0xff]
                  %562 = vst [vmem:[%s536 + $0x60] sm:$0xff] %v561
                  %v563 = vld [vmem:[%s535 + $0x68] sm:$0xff]
                  %564 = vst [vmem:[%s536 + $0x68] sm:$0xff] %v563
                  %v565 = vld [vmem:[%s535 + $0x70] sm:$0xff]
                  %566 = vst [vmem:[%s536 + $0x70] sm:$0xff] %v565
                  %v567 = vld [vmem:[%s535 + $0x78] sm:$0xff]
                  %568 = vst [vmem:[%s536 + $0x78] sm:$0xff] %v567
                  %v569 = vld [vmem:[%s535 + $0x80] sm:$0xff]
                  %570 = vst [vmem:[%s536 + $0x80] sm:$0xff] %v569
                  %v571 = vld [vmem:[%s535 + $0x88] sm:$0xff]
                  %572 = vst [vmem:[%s536 + $0x88] sm:$0xff] %v571
                  %v573 = vld [vmem:[%s535 + $0x90] sm:$0xff]
                  %574 = vst [vmem:[%s536 + $0x90] sm:$0xff] %v573
                  %v575 = vld [vmem:[%s535 + $0x98] sm:$0xff]
                  %576 = vst [vmem:[%s536 + $0x98] sm:$0xff] %v575
                  %v577 = vld [vmem:[%s535 + $0xa0] sm:$0xff]
                  %578 = vst [vmem:[%s536 + $0xa0] sm:$0xff] %v577
                  %v579 = vld [vmem:[%s535 + $0xa8] sm:$0xff]
                  %580 = vst [vmem:[%s536 + $0xa8] sm:$0xff] %v579
                  %v581 = vld [vmem:[%s535 + $0xb0] sm:$0xff]
                  %582 = vst [vmem:[%s536 + $0xb0] sm:$0xff] %v581
                  %v583 = vld [vmem:[%s535 + $0xb8] sm:$0xff]
                  %584 = vst [vmem:[%s536 + $0xb8] sm:$0xff] %v583
                  %v585 = vld [vmem:[%s535 + $0xc0] sm:$0xff]
                  %586 = vst [vmem:[%s536 + $0xc0] sm:$0xff] %v585
                  %v587 = vld [vmem:[%s535 + $0xc8] sm:$0xff]
                  %588 = vst [vmem:[%s536 + $0xc8] sm:$0xff] %v587
                  %v589 = vld [vmem:[%s535 + $0xd0] sm:$0xff]
                  %590 = vst [vmem:[%s536 + $0xd0] sm:$0xff] %v589
                  %v591 = vld [vmem:[%s535 + $0xd8] sm:$0xff]
                  %592 = vst [vmem:[%s536 + $0xd8] sm:$0xff] %v591
                  %v593 = vld [vmem:[%s535 + $0xe0] sm:$0xff]
                  %594 = vst [vmem:[%s536 + $0xe0] sm:$0xff] %v593
                  %v595 = vld [vmem:[%s535 + $0xe8] sm:$0xff]
                  %596 = vst [vmem:[%s536 + $0xe8] sm:$0xff] %v595
                  %v597 = vld [vmem:[%s535 + $0xf0] sm:$0xff]
                  %598 = vst [vmem:[%s536 + $0xf0] sm:$0xff] %v597
                  %v599 = vld [vmem:[%s535 + $0xf8] sm:$0xff]
                  %600 = vst [vmem:[%s536 + $0xf8] sm:$0xff] %v599
                  %v601 = vld [vmem:[%s535 + $0x200] sm:$0xff]
                  %602 = vst [vmem:[%s536 + $0x100] sm:$0xff] %v601
                  %v603 = vld [vmem:[%s535 + $0x208] sm:$0xff]
                  %604 = vst [vmem:[%s536 + $0x108] sm:$0xff] %v603
                  %v605 = vld [vmem:[%s535 + $0x210] sm:$0xff]
                  %606 = vst [vmem:[%s536 + $0x110] sm:$0xff] %v605
                  %v607 = vld [vmem:[%s535 + $0x218] sm:$0xff]
                  %608 = vst [vmem:[%s536 + $0x118] sm:$0xff] %v607
                  %v609 = vld [vmem:[%s535 + $0x220] sm:$0xff]
                  %610 = vst [vmem:[%s536 + $0x120] sm:$0xff] %v609
                  %v611 = vld [vmem:[%s535 + $0x228] sm:$0xff]
                  %612 = vst [vmem:[%s536 + $0x128] sm:$0xff] %v611
                  %v613 = vld [vmem:[%s535 + $0x230] sm:$0xff]
                  %614 = vst [vmem:[%s536 + $0x130] sm:$0xff] %v613
                  %v615 = vld [vmem:[%s535 + $0x238] sm:$0xff]
                  %616 = vst [vmem:[%s536 + $0x138] sm:$0xff] %v615
                  %v617 = vld [vmem:[%s535 + $0x240] sm:$0xff]
                  %618 = vst [vmem:[%s536 + $0x140] sm:$0xff] %v617
                  %v619 = vld [vmem:[%s535 + $0x248] sm:$0xff]
                  %620 = vst [vmem:[%s536 + $0x148] sm:$0xff] %v619
                  %v621 = vld [vmem:[%s535 + $0x250] sm:$0xff]
                  %622 = vst [vmem:[%s536 + $0x150] sm:$0xff] %v621
                  %v623 = vld [vmem:[%s535 + $0x258] sm:$0xff]
                  %624 = vst [vmem:[%s536 + $0x158] sm:$0xff] %v623
                  %v625 = vld [vmem:[%s535 + $0x260] sm:$0xff]
                  %626 = vst [vmem:[%s536 + $0x160] sm:$0xff] %v625
                  %v627 = vld [vmem:[%s535 + $0x268] sm:$0xff]
                  %628 = vst [vmem:[%s536 + $0x168] sm:$0xff] %v627
                  %v629 = vld [vmem:[%s535 + $0x270] sm:$0xff]
                  %630 = vst [vmem:[%s536 + $0x170] sm:$0xff] %v629
                  %v631 = vld [vmem:[%s535 + $0x278] sm:$0xff]
                  %632 = vst [vmem:[%s536 + $0x178] sm:$0xff] %v631
                  %v633 = vld [vmem:[%s535 + $0x280] sm:$0xff]
                  %634 = vst [vmem:[%s536 + $0x180] sm:$0xff] %v633
                  %v635 = vld [vmem:[%s535 + $0x288] sm:$0xff]
                  %636 = vst [vmem:[%s536 + $0x188] sm:$0xff] %v635
                  %v637 = vld [vmem:[%s535 + $0x290] sm:$0xff]
                  %638 = vst [vmem:[%s536 + $0x190] sm:$0xff] %v637
                  %v639 = vld [vmem:[%s535 + $0x298] sm:$0xff]
                  %640 = vst [vmem:[%s536 + $0x198] sm:$0xff] %v639
                  %v641 = vld [vmem:[%s535 + $0x2a0] sm:$0xff]
                  %642 = vst [vmem:[%s536 + $0x1a0] sm:$0xff] %v641
                  %v643 = vld [vmem:[%s535 + $0x2a8] sm:$0xff]
                  %644 = vst [vmem:[%s536 + $0x1a8] sm:$0xff] %v643
                  %v645 = vld [vmem:[%s535 + $0x2b0] sm:$0xff]
                  %646 = vst [vmem:[%s536 + $0x1b0] sm:$0xff] %v645
                  %v647 = vld [vmem:[%s535 + $0x2b8] sm:$0xff]
                  %648 = vst [vmem:[%s536 + $0x1b8] sm:$0xff] %v647
                  %v649 = vld [vmem:[%s535 + $0x2c0] sm:$0xff]
                  %650 = vst [vmem:[%s536 + $0x1c0] sm:$0xff] %v649
                  %v651 = vld [vmem:[%s535 + $0x2c8] sm:$0xff]
                  %652 = vst [vmem:[%s536 + $0x1c8] sm:$0xff] %v651
                  %v653 = vld [vmem:[%s535 + $0x2d0] sm:$0xff]
                  %654 = vst [vmem:[%s536 + $0x1d0] sm:$0xff] %v653
                  %v655 = vld [vmem:[%s535 + $0x2d8] sm:$0xff]
                  %656 = vst [vmem:[%s536 + $0x1d8] sm:$0xff] %v655
                  %v657 = vld [vmem:[%s535 + $0x2e0] sm:$0xff]
                  %658 = vst [vmem:[%s536 + $0x1e0] sm:$0xff] %v657
                  %v659 = vld [vmem:[%s535 + $0x2e8] sm:$0xff]
                  %660 = vst [vmem:[%s536 + $0x1e8] sm:$0xff] %v659
                  %v661 = vld [vmem:[%s535 + $0x2f0] sm:$0xff]
                  %662 = vst [vmem:[%s536 + $0x1f0] sm:$0xff] %v661
                  %v663 = vld [vmem:[%s535 + $0x2f8] sm:$0xff]
                  %664 = vst [vmem:[%s536 + $0x1f8] sm:$0xff] %v663
                  %v665 = vld [vmem:[%s535 + $0x400] sm:$0xff]
                  %666 = vst [vmem:[%s536 + $0x200] sm:$0xff] %v665
                  %v667 = vld [vmem:[%s535 + $0x408] sm:$0xff]
                  %668 = vst [vmem:[%s536 + $0x208] sm:$0xff] %v667
                  %v669 = vld [vmem:[%s535 + $0x410] sm:$0xff]
                  %670 = vst [vmem:[%s536 + $0x210] sm:$0xff] %v669
                  %v671 = vld [vmem:[%s535 + $0x418] sm:$0xff]
                  %672 = vst [vmem:[%s536 + $0x218] sm:$0xff] %v671
                  %v673 = vld [vmem:[%s535 + $0x420] sm:$0xff]
                  %674 = vst [vmem:[%s536 + $0x220] sm:$0xff] %v673
                  %v675 = vld [vmem:[%s535 + $0x428] sm:$0xff]
                  %676 = vst [vmem:[%s536 + $0x228] sm:$0xff] %v675
                  %v677 = vld [vmem:[%s535 + $0x430] sm:$0xff]
                  %678 = vst [vmem:[%s536 + $0x230] sm:$0xff] %v677
                  %v679 = vld [vmem:[%s535 + $0x438] sm:$0xff]
                  %680 = vst [vmem:[%s536 + $0x238] sm:$0xff] %v679
                  %v681 = vld [vmem:[%s535 + $0x440] sm:$0xff]
                  %682 = vst [vmem:[%s536 + $0x240] sm:$0xff] %v681
                  %v683 = vld [vmem:[%s535 + $0x448] sm:$0xff]
                  %684 = vst [vmem:[%s536 + $0x248] sm:$0xff] %v683
                  %v685 = vld [vmem:[%s535 + $0x450] sm:$0xff]
                  %686 = vst [vmem:[%s536 + $0x250] sm:$0xff] %v685
                  %v687 = vld [vmem:[%s535 + $0x458] sm:$0xff]
                  %688 = vst [vmem:[%s536 + $0x258] sm:$0xff] %v687
                  %v689 = vld [vmem:[%s535 + $0x460] sm:$0xff]
                  %690 = vst [vmem:[%s536 + $0x260] sm:$0xff] %v689
                  %v691 = vld [vmem:[%s535 + $0x468] sm:$0xff]
                  %692 = vst [vmem:[%s536 + $0x268] sm:$0xff] %v691
                  %v693 = vld [vmem:[%s535 + $0x470] sm:$0xff]
                  %694 = vst [vmem:[%s536 + $0x270] sm:$0xff] %v693
                  %v695 = vld [vmem:[%s535 + $0x478] sm:$0xff]
                  %696 = vst [vmem:[%s536 + $0x278] sm:$0xff] %v695
                  %v697 = vld [vmem:[%s535 + $0x480] sm:$0xff]
                  %698 = vst [vmem:[%s536 + $0x280] sm:$0xff] %v697
                  %v699 = vld [vmem:[%s535 + $0x488] sm:$0xff]
                  %700 = vst [vmem:[%s536 + $0x288] sm:$0xff] %v699
                  %v701 = vld [vmem:[%s535 + $0x490] sm:$0xff]
                  %702 = vst [vmem:[%s536 + $0x290] sm:$0xff] %v701
                  %v703 = vld [vmem:[%s535 + $0x498] sm:$0xff]
                  %704 = vst [vmem:[%s536 + $0x298] sm:$0xff] %v703
                  %v705 = vld [vmem:[%s535 + $0x4a0] sm:$0xff]
                  %706 = vst [vmem:[%s536 + $0x2a0] sm:$0xff] %v705
                  %v707 = vld [vmem:[%s535 + $0x4a8] sm:$0xff]
                  %708 = vst [vmem:[%s536 + $0x2a8] sm:$0xff] %v707
                  %v709 = vld [vmem:[%s535 + $0x4b0] sm:$0xff]
                  %710 = vst [vmem:[%s536 + $0x2b0] sm:$0xff] %v709
                  %v711 = vld [vmem:[%s535 + $0x4b8] sm:$0xff]
                  %712 = vst [vmem:[%s536 + $0x2b8] sm:$0xff] %v711
                  %v713 = vld [vmem:[%s535 + $0x4c0] sm:$0xff]
                  %714 = vst [vmem:[%s536 + $0x2c0] sm:$0xff] %v713
                  %v715 = vld [vmem:[%s535 + $0x4c8] sm:$0xff]
                  %716 = vst [vmem:[%s536 + $0x2c8] sm:$0xff] %v715
                  %v717 = vld [vmem:[%s535 + $0x4d0] sm:$0xff]
                  %718 = vst [vmem:[%s536 + $0x2d0] sm:$0xff] %v717
                  %v719 = vld [vmem:[%s535 + $0x4d8] sm:$0xff]
                  %720 = vst [vmem:[%s536 + $0x2d8] sm:$0xff] %v719
                  %v721 = vld [vmem:[%s535 + $0x4e0] sm:$0xff]
                  %722 = vst [vmem:[%s536 + $0x2e0] sm:$0xff] %v721
                  %v723 = vld [vmem:[%s535 + $0x4e8] sm:$0xff]
                  %724 = vst [vmem:[%s536 + $0x2e8] sm:$0xff] %v723
                  %v725 = vld [vmem:[%s535 + $0x4f0] sm:$0xff]
                  %726 = vst [vmem:[%s536 + $0x2f0] sm:$0xff] %v725
                  %v727 = vld [vmem:[%s535 + $0x4f8] sm:$0xff]
                  %728 = vst [vmem:[%s536 + $0x2f8] sm:$0xff] %v727
                  %v729 = vld [vmem:[%s535 + $0x600] sm:$0xff]
                  %730 = vst [vmem:[%s536 + $0x300] sm:$0xff] %v729
                  %v731 = vld [vmem:[%s535 + $0x608] sm:$0xff]
                  %732 = vst [vmem:[%s536 + $0x308] sm:$0xff] %v731
                  %v733 = vld [vmem:[%s535 + $0x610] sm:$0xff]
                  %734 = vst [vmem:[%s536 + $0x310] sm:$0xff] %v733
                  %v735 = vld [vmem:[%s535 + $0x618] sm:$0xff]
                  %736 = vst [vmem:[%s536 + $0x318] sm:$0xff] %v735
                  %v737 = vld [vmem:[%s535 + $0x620] sm:$0xff]
                  %738 = vst [vmem:[%s536 + $0x320] sm:$0xff] %v737
                  %v739 = vld [vmem:[%s535 + $0x628] sm:$0xff]
                  %740 = vst [vmem:[%s536 + $0x328] sm:$0xff] %v739
                  %v741 = vld [vmem:[%s535 + $0x630] sm:$0xff]
                  %742 = vst [vmem:[%s536 + $0x330] sm:$0xff] %v741
                  %v743 = vld [vmem:[%s535 + $0x638] sm:$0xff]
                  %744 = vst [vmem:[%s536 + $0x338] sm:$0xff] %v743
                  %v745 = vld [vmem:[%s535 + $0x640] sm:$0xff]
                  %746 = vst [vmem:[%s536 + $0x340] sm:$0xff] %v745
                  %v747 = vld [vmem:[%s535 + $0x648] sm:$0xff]
                  %748 = vst [vmem:[%s536 + $0x348] sm:$0xff] %v747
                  %v749 = vld [vmem:[%s535 + $0x650] sm:$0xff]
                  %750 = vst [vmem:[%s536 + $0x350] sm:$0xff] %v749
                  %v751 = vld [vmem:[%s535 + $0x658] sm:$0xff]
                  %752 = vst [vmem:[%s536 + $0x358] sm:$0xff] %v751
                  %v753 = vld [vmem:[%s535 + $0x660] sm:$0xff]
                  %754 = vst [vmem:[%s536 + $0x360] sm:$0xff] %v753
                  %v755 = vld [vmem:[%s535 + $0x668] sm:$0xff]
                  %756 = vst [vmem:[%s536 + $0x368] sm:$0xff] %v755
                  %v757 = vld [vmem:[%s535 + $0x670] sm:$0xff]
                  %758 = vst [vmem:[%s536 + $0x370] sm:$0xff] %v757
                  %v759 = vld [vmem:[%s535 + $0x678] sm:$0xff]
                  %760 = vst [vmem:[%s536 + $0x378] sm:$0xff] %v759
                  %v761 = vld [vmem:[%s535 + $0x680] sm:$0xff]
                  %762 = vst [vmem:[%s536 + $0x380] sm:$0xff] %v761
                  %v763 = vld [vmem:[%s535 + $0x688] sm:$0xff]
                  %764 = vst [vmem:[%s536 + $0x388] sm:$0xff] %v763
                  %v765 = vld [vmem:[%s535 + $0x690] sm:$0xff]
                  %766 = vst [vmem:[%s536 + $0x390] sm:$0xff] %v765
                  %v767 = vld [vmem:[%s535 + $0x698] sm:$0xff]
                  %768 = vst [vmem:[%s536 + $0x398] sm:$0xff] %v767
                  %v769 = vld [vmem:[%s535 + $0x6a0] sm:$0xff]
                  %770 = vst [vmem:[%s536 + $0x3a0] sm:$0xff] %v769
                  %v771 = vld [vmem:[%s535 + $0x6a8] sm:$0xff]
                  %772 = vst [vmem:[%s536 + $0x3a8] sm:$0xff] %v771
                  %v773 = vld [vmem:[%s535 + $0x6b0] sm:$0xff]
                  %774 = vst [vmem:[%s536 + $0x3b0] sm:$0xff] %v773
                  %v775 = vld [vmem:[%s535 + $0x6b8] sm:$0xff]
                  %776 = vst [vmem:[%s536 + $0x3b8] sm:$0xff] %v775
                  %v777 = vld [vmem:[%s535 + $0x6c0] sm:$0xff]
                  %778 = vst [vmem:[%s536 + $0x3c0] sm:$0xff] %v777
                  %v779 = vld [vmem:[%s535 + $0x6c8] sm:$0xff]
                  %780 = vst [vmem:[%s536 + $0x3c8] sm:$0xff] %v779
                  %v781 = vld [vmem:[%s535 + $0x6d0] sm:$0xff]
                  %782 = vst [vmem:[%s536 + $0x3d0] sm:$0xff] %v781
                  %v783 = vld [vmem:[%s535 + $0x6d8] sm:$0xff]
                  %784 = vst [vmem:[%s536 + $0x3d8] sm:$0xff] %v783
                  %v785 = vld [vmem:[%s535 + $0x6e0] sm:$0xff]
                  %786 = vst [vmem:[%s536 + $0x3e0] sm:$0xff] %v785
                  %v787 = vld [vmem:[%s535 + $0x6e8] sm:$0xff]
                  %788 = vst [vmem:[%s536 + $0x3e8] sm:$0xff] %v787
                  %v789 = vld [vmem:[%s535 + $0x6f0] sm:$0xff]
                  %790 = vst [vmem:[%s536 + $0x3f0] sm:$0xff] %v789
                  %v791 = vld [vmem:[%s535 + $0x6f8] sm:$0xff]
                  %792 = vst [vmem:[%s536 + $0x3f8] sm:$0xff] %v791
                  %v793 = vld [vmem:[%s535 + $0x800] sm:$0xff]
                  %794 = vst [vmem:[%s536 + $0x400] sm:$0xff] %v793
                  %v795 = vld [vmem:[%s535 + $0x808] sm:$0xff]
                  %796 = vst [vmem:[%s536 + $0x408] sm:$0xff] %v795
                  %v797 = vld [vmem:[%s535 + $0x810] sm:$0xff]
                  %798 = vst [vmem:[%s536 + $0x410] sm:$0xff] %v797
                  %v799 = vld [vmem:[%s535 + $0x818] sm:$0xff]
                  %800 = vst [vmem:[%s536 + $0x418] sm:$0xff] %v799
                  %v801 = vld [vmem:[%s535 + $0x820] sm:$0xff]
                  %802 = vst [vmem:[%s536 + $0x420] sm:$0xff] %v801
                  %v803 = vld [vmem:[%s535 + $0x828] sm:$0xff]
                  %804 = vst [vmem:[%s536 + $0x428] sm:$0xff] %v803
                  %v805 = vld [vmem:[%s535 + $0x830] sm:$0xff]
                  %806 = vst [vmem:[%s536 + $0x430] sm:$0xff] %v805
                  %v807 = vld [vmem:[%s535 + $0x838] sm:$0xff]
                  %808 = vst [vmem:[%s536 + $0x438] sm:$0xff] %v807
                  %v809 = vld [vmem:[%s535 + $0x840] sm:$0xff]
                  %810 = vst [vmem:[%s536 + $0x440] sm:$0xff] %v809
                  %v811 = vld [vmem:[%s535 + $0x848] sm:$0xff]
                  %812 = vst [vmem:[%s536 + $0x448] sm:$0xff] %v811
                  %v813 = vld [vmem:[%s535 + $0x850] sm:$0xff]
                  %814 = vst [vmem:[%s536 + $0x450] sm:$0xff] %v813
                  %v815 = vld [vmem:[%s535 + $0x858] sm:$0xff]
                  %816 = vst [vmem:[%s536 + $0x458] sm:$0xff] %v815
                  %v817 = vld [vmem:[%s535 + $0x860] sm:$0xff]
                  %818 = vst [vmem:[%s536 + $0x460] sm:$0xff] %v817
                  %v819 = vld [vmem:[%s535 + $0x868] sm:$0xff]
                  %820 = vst [vmem:[%s536 + $0x468] sm:$0xff] %v819
                  %v821 = vld [vmem:[%s535 + $0x870] sm:$0xff]
                  %822 = vst [vmem:[%s536 + $0x470] sm:$0xff] %v821
                  %v823 = vld [vmem:[%s535 + $0x878] sm:$0xff]
                  %824 = vst [vmem:[%s536 + $0x478] sm:$0xff] %v823
                  %v825 = vld [vmem:[%s535 + $0x880] sm:$0xff]
                  %826 = vst [vmem:[%s536 + $0x480] sm:$0xff] %v825
                  %v827 = vld [vmem:[%s535 + $0x888] sm:$0xff]
                  %828 = vst [vmem:[%s536 + $0x488] sm:$0xff] %v827
                  %v829 = vld [vmem:[%s535 + $0x890] sm:$0xff]
                  %830 = vst [vmem:[%s536 + $0x490] sm:$0xff] %v829
                  %v831 = vld [vmem:[%s535 + $0x898] sm:$0xff]
                  %832 = vst [vmem:[%s536 + $0x498] sm:$0xff] %v831
                  %v833 = vld [vmem:[%s535 + $0x8a0] sm:$0xff]
                  %834 = vst [vmem:[%s536 + $0x4a0] sm:$0xff] %v833
                  %v835 = vld [vmem:[%s535 + $0x8a8] sm:$0xff]
                  %836 = vst [vmem:[%s536 + $0x4a8] sm:$0xff] %v835
                  %v837 = vld [vmem:[%s535 + $0x8b0] sm:$0xff]
                  %838 = vst [vmem:[%s536 + $0x4b0] sm:$0xff] %v837
                  %v839 = vld [vmem:[%s535 + $0x8b8] sm:$0xff]
                  %840 = vst [vmem:[%s536 + $0x4b8] sm:$0xff] %v839
                  %v841 = vld [vmem:[%s535 + $0x8c0] sm:$0xff]
                  %842 = vst [vmem:[%s536 + $0x4c0] sm:$0xff] %v841
                  %v843 = vld [vmem:[%s535 + $0x8c8] sm:$0xff]
                  %844 = vst [vmem:[%s536 + $0x4c8] sm:$0xff] %v843
                  %v845 = vld [vmem:[%s535 + $0x8d0] sm:$0xff]
                  %846 = vst [vmem:[%s536 + $0x4d0] sm:$0xff] %v845
                  %v847 = vld [vmem:[%s535 + $0x8d8] sm:$0xff]
                  %848 = vst [vmem:[%s536 + $0x4d8] sm:$0xff] %v847
                  %v849 = vld [vmem:[%s535 + $0x8e0] sm:$0xff]
                  %850 = vst [vmem:[%s536 + $0x4e0] sm:$0xff] %v849
                  %v851 = vld [vmem:[%s535 + $0x8e8] sm:$0xff]
                  %852 = vst [vmem:[%s536 + $0x4e8] sm:$0xff] %v851
                  %v853 = vld [vmem:[%s535 + $0x8f0] sm:$0xff]
                  %854 = vst [vmem:[%s536 + $0x4f0] sm:$0xff] %v853
                  %v855 = vld [vmem:[%s535 + $0x8f8] sm:$0xff]
                  %856 = vst [vmem:[%s536 + $0x4f8] sm:$0xff] %v855
                  %v857 = vld [vmem:[%s535 + $0xa00] sm:$0xff]
                  %858 = vst [vmem:[%s536 + $0x500] sm:$0xff] %v857
                  %v859 = vld [vmem:[%s535 + $0xa08] sm:$0xff]
                  %860 = vst [vmem:[%s536 + $0x508] sm:$0xff] %v859
                  %v861 = vld [vmem:[%s535 + $0xa10] sm:$0xff]
                  %862 = vst [vmem:[%s536 + $0x510] sm:$0xff] %v861
                  %v863 = vld [vmem:[%s535 + $0xa18] sm:$0xff]
                  %864 = vst [vmem:[%s536 + $0x518] sm:$0xff] %v863
                  %v865 = vld [vmem:[%s535 + $0xa20] sm:$0xff]
                  %866 = vst [vmem:[%s536 + $0x520] sm:$0xff] %v865
                  %v867 = vld [vmem:[%s535 + $0xa28] sm:$0xff]
                  %868 = vst [vmem:[%s536 + $0x528] sm:$0xff] %v867
                  %v869 = vld [vmem:[%s535 + $0xa30] sm:$0xff]
                  %870 = vst [vmem:[%s536 + $0x530] sm:$0xff] %v869
                  %v871 = vld [vmem:[%s535 + $0xa38] sm:$0xff]
                  %872 = vst [vmem:[%s536 + $0x538] sm:$0xff] %v871
                  %v873 = vld [vmem:[%s535 + $0xa40] sm:$0xff]
                  %874 = vst [vmem:[%s536 + $0x540] sm:$0xff] %v873
                  %v875 = vld [vmem:[%s535 + $0xa48] sm:$0xff]
                  %876 = vst [vmem:[%s536 + $0x548] sm:$0xff] %v875
                  %v877 = vld [vmem:[%s535 + $0xa50] sm:$0xff]
                  %878 = vst [vmem:[%s536 + $0x550] sm:$0xff] %v877
                  %v879 = vld [vmem:[%s535 + $0xa58] sm:$0xff]
                  %880 = vst [vmem:[%s536 + $0x558] sm:$0xff] %v879
                  %v881 = vld [vmem:[%s535 + $0xa60] sm:$0xff]
                  %882 = vst [vmem:[%s536 + $0x560] sm:$0xff] %v881
                  %v883 = vld [vmem:[%s535 + $0xa68] sm:$0xff]
                  %884 = vst [vmem:[%s536 + $0x568] sm:$0xff] %v883
                  %v885 = vld [vmem:[%s535 + $0xa70] sm:$0xff]
                  %886 = vst [vmem:[%s536 + $0x570] sm:$0xff] %v885
                  %v887 = vld [vmem:[%s535 + $0xa78] sm:$0xff]
                  %888 = vst [vmem:[%s536 + $0x578] sm:$0xff] %v887
                  %v889 = vld [vmem:[%s535 + $0xa80] sm:$0xff]
                  %890 = vst [vmem:[%s536 + $0x580] sm:$0xff] %v889
                  %v891 = vld [vmem:[%s535 + $0xa88] sm:$0xff]
                  %892 = vst [vmem:[%s536 + $0x588] sm:$0xff] %v891
                  %v893 = vld [vmem:[%s535 + $0xa90] sm:$0xff]
                  %894 = vst [vmem:[%s536 + $0x590] sm:$0xff] %v893
                  %v895 = vld [vmem:[%s535 + $0xa98] sm:$0xff]
                  %896 = vst [vmem:[%s536 + $0x598] sm:$0xff] %v895
                  %v897 = vld [vmem:[%s535 + $0xaa0] sm:$0xff]
                  %898 = vst [vmem:[%s536 + $0x5a0] sm:$0xff] %v897
                  %v899 = vld [vmem:[%s535 + $0xaa8] sm:$0xff]
                  %900 = vst [vmem:[%s536 + $0x5a8] sm:$0xff] %v899
                  %v901 = vld [vmem:[%s535 + $0xab0] sm:$0xff]
                  %902 = vst [vmem:[%s536 + $0x5b0] sm:$0xff] %v901
                  %v903 = vld [vmem:[%s535 + $0xab8] sm:$0xff]
                  %904 = vst [vmem:[%s536 + $0x5b8] sm:$0xff] %v903
                  %v905 = vld [vmem:[%s535 + $0xac0] sm:$0xff]
                  %906 = vst [vmem:[%s536 + $0x5c0] sm:$0xff] %v905
                  %v907 = vld [vmem:[%s535 + $0xac8] sm:$0xff]
                  %908 = vst [vmem:[%s536 + $0x5c8] sm:$0xff] %v907
                  %v909 = vld [vmem:[%s535 + $0xad0] sm:$0xff]
                  %910 = vst [vmem:[%s536 + $0x5d0] sm:$0xff] %v909
                  %v911 = vld [vmem:[%s535 + $0xad8] sm:$0xff]
                  %912 = vst [vmem:[%s536 + $0x5d8] sm:$0xff] %v911
                  %v913 = vld [vmem:[%s535 + $0xae0] sm:$0xff]
                  %914 = vst [vmem:[%s536 + $0x5e0] sm:$0xff] %v913
                  %v915 = vld [vmem:[%s535 + $0xae8] sm:$0xff]
                  %916 = vst [vmem:[%s536 + $0x5e8] sm:$0xff] %v915
                  %v917 = vld [vmem:[%s535 + $0xaf0] sm:$0xff]
                  %918 = vst [vmem:[%s536 + $0x5f0] sm:$0xff] %v917
                  %v919 = vld [vmem:[%s535 + $0xaf8] sm:$0xff]
                  %920 = vst [vmem:[%s536 + $0x5f8] sm:$0xff] %v919
                $region52: #{tpu_custom_call.1} parent=46 // loop_footer
                  %s534 = sadd.s32 1, %s530
                $region53: #{tpu_custom_call.1} parent=46 // loop_footer_branch
                  %529 = sbr.rel target = $region49
                $region54: #{tpu_custom_call.1} parent=46 // loop_exit
                  _
              $region47: #{tpu_custom_call.1} parent=31 // pred_fallthru
                _
              // Predicated region
              $region55: #{tpu_custom_call.1} parent=31 // pred_check
                _
              $region56: #{tpu_custom_call.1} parent=31 // pred_check_branch
                %922 = sbr.rel target = $region58
              $region57: #{tpu_custom_call.1} parent=31 // pred_region
                _
              $region58: #{tpu_custom_call.1} parent=31 // pred_fallthru
                _
            $region32: #{tpu_custom_call.1} parent=27 // pred_fallthru
              _
            // Predicated region
            $region33: #{tpu_custom_call.1} parent=27 // pred_check
              _
            $region34: #{tpu_custom_call.1} parent=27 // pred_check_branch
              %132 = sbr.rel target = $region36
            $region35: #{tpu_custom_call.1} parent=27 // pred_region
              %s134 = ssub.s32 256, 1
              loop: start=0, step=1, limit=1
              $region37: #{tpu_custom_call.1} parent=35 // loop_pre_header
                _
              $region38: #{tpu_custom_call.1} parent=35 // loop_header
                %s136 = sphi 0, %s140
                %p137 = scmp.ge.s32.totalorder %s136, 1
                %s141 = sphi %s126, %s126
                %s142 = sphi %s123, %s123
              $region39: #{tpu_custom_call.1} parent=35 // loop_header_branch
                %139 = sbr.rel (%p137) target = $region43
              $region40: #{tpu_custom_call.1} parent=35 // loop_body
                %v143 = vld [vmem:[%s141] sm:%s134]
                %144 = vst [vmem:[%s142] sm:%s134] %v143
                %v145 = vld [vmem:[%s141 + $0x8] sm:%s134]
                %146 = vst [vmem:[%s142 + $0x8] sm:%s134] %v145
                %v147 = vld [vmem:[%s141 + $0x10] sm:%s134]
                %148 = vst [vmem:[%s142 + $0x10] sm:%s134] %v147
                %v149 = vld [vmem:[%s141 + $0x18] sm:%s134]
                %150 = vst [vmem:[%s142 + $0x18] sm:%s134] %v149
                %v151 = vld [vmem:[%s141 + $0x20] sm:%s134]
                %152 = vst [vmem:[%s142 + $0x20] sm:%s134] %v151
                %v153 = vld [vmem:[%s141 + $0x28] sm:%s134]
                %154 = vst [vmem:[%s142 + $0x28] sm:%s134] %v153
                %v155 = vld [vmem:[%s141 + $0x30] sm:%s134]
                %156 = vst [vmem:[%s142 + $0x30] sm:%s134] %v155
                %v157 = vld [vmem:[%s141 + $0x38] sm:%s134]
                %158 = vst [vmem:[%s142 + $0x38] sm:%s134] %v157
                %v159 = vld [vmem:[%s141 + $0x40] sm:%s134]
                %160 = vst [vmem:[%s142 + $0x40] sm:%s134] %v159
                %v161 = vld [vmem:[%s141 + $0x48] sm:%s134]
                %162 = vst [vmem:[%s142 + $0x48] sm:%s134] %v161
                %v163 = vld [vmem:[%s141 + $0x50] sm:%s134]
                %164 = vst [vmem:[%s142 + $0x50] sm:%s134] %v163
                %v165 = vld [vmem:[%s141 + $0x58] sm:%s134]
                %166 = vst [vmem:[%s142 + $0x58] sm:%s134] %v165
                %v167 = vld [vmem:[%s141 + $0x60] sm:%s134]
                %168 = vst [vmem:[%s142 + $0x60] sm:%s134] %v167
                %v169 = vld [vmem:[%s141 + $0x68] sm:%s134]
                %170 = vst [vmem:[%s142 + $0x68] sm:%s134] %v169
                %v171 = vld [vmem:[%s141 + $0x70] sm:%s134]
                %172 = vst [vmem:[%s142 + $0x70] sm:%s134] %v171
                %v173 = vld [vmem:[%s141 + $0x78] sm:%s134]
                %174 = vst [vmem:[%s142 + $0x78] sm:%s134] %v173
                %v175 = vld [vmem:[%s141 + $0x80] sm:%s134]
                %176 = vst [vmem:[%s142 + $0x80] sm:%s134] %v175
                %v177 = vld [vmem:[%s141 + $0x88] sm:%s134]
                %178 = vst [vmem:[%s142 + $0x88] sm:%s134] %v177
                %v179 = vld [vmem:[%s141 + $0x90] sm:%s134]
                %180 = vst [vmem:[%s142 + $0x90] sm:%s134] %v179
                %v181 = vld [vmem:[%s141 + $0x98] sm:%s134]
                %182 = vst [vmem:[%s142 + $0x98] sm:%s134] %v181
                %v183 = vld [vmem:[%s141 + $0xa0] sm:%s134]
                %184 = vst [vmem:[%s142 + $0xa0] sm:%s134] %v183
                %v185 = vld [vmem:[%s141 + $0xa8] sm:%s134]
                %186 = vst [vmem:[%s142 + $0xa8] sm:%s134] %v185
                %v187 = vld [vmem:[%s141 + $0xb0] sm:%s134]
                %188 = vst [vmem:[%s142 + $0xb0] sm:%s134] %v187
                %v189 = vld [vmem:[%s141 + $0xb8] sm:%s134]
                %190 = vst [vmem:[%s142 + $0xb8] sm:%s134] %v189
                %v191 = vld [vmem:[%s141 + $0xc0] sm:%s134]
                %192 = vst [vmem:[%s142 + $0xc0] sm:%s134] %v191
                %v193 = vld [vmem:[%s141 + $0xc8] sm:%s134]
                %194 = vst [vmem:[%s142 + $0xc8] sm:%s134] %v193
                %v195 = vld [vmem:[%s141 + $0xd0] sm:%s134]
                %196 = vst [vmem:[%s142 + $0xd0] sm:%s134] %v195
                %v197 = vld [vmem:[%s141 + $0xd8] sm:%s134]
                %198 = vst [vmem:[%s142 + $0xd8] sm:%s134] %v197
                %v199 = vld [vmem:[%s141 + $0xe0] sm:%s134]
                %200 = vst [vmem:[%s142 + $0xe0] sm:%s134] %v199
                %v201 = vld [vmem:[%s141 + $0xe8] sm:%s134]
                %202 = vst [vmem:[%s142 + $0xe8] sm:%s134] %v201
                %v203 = vld [vmem:[%s141 + $0xf0] sm:%s134]
                %204 = vst [vmem:[%s142 + $0xf0] sm:%s134] %v203
                %v205 = vld [vmem:[%s141 + $0xf8] sm:%s134]
                %206 = vst [vmem:[%s142 + $0xf8] sm:%s134] %v205
                %v207 = vld [vmem:[%s141 + $0x200] sm:%s134]
                %208 = vst [vmem:[%s142 + $0x100] sm:%s134] %v207
                %v209 = vld [vmem:[%s141 + $0x208] sm:%s134]
                %210 = vst [vmem:[%s142 + $0x108] sm:%s134] %v209
                %v211 = vld [vmem:[%s141 + $0x210] sm:%s134]
                %212 = vst [vmem:[%s142 + $0x110] sm:%s134] %v211
                %v213 = vld [vmem:[%s141 + $0x218] sm:%s134]
                %214 = vst [vmem:[%s142 + $0x118] sm:%s134] %v213
                %v215 = vld [vmem:[%s141 + $0x220] sm:%s134]
                %216 = vst [vmem:[%s142 + $0x120] sm:%s134] %v215
                %v217 = vld [vmem:[%s141 + $0x228] sm:%s134]
                %218 = vst [vmem:[%s142 + $0x128] sm:%s134] %v217
                %v219 = vld [vmem:[%s141 + $0x230] sm:%s134]
                %220 = vst [vmem:[%s142 + $0x130] sm:%s134] %v219
                %v221 = vld [vmem:[%s141 + $0x238] sm:%s134]
                %222 = vst [vmem:[%s142 + $0x138] sm:%s134] %v221
                %v223 = vld [vmem:[%s141 + $0x240] sm:%s134]
                %224 = vst [vmem:[%s142 + $0x140] sm:%s134] %v223
                %v225 = vld [vmem:[%s141 + $0x248] sm:%s134]
                %226 = vst [vmem:[%s142 + $0x148] sm:%s134] %v225
                %v227 = vld [vmem:[%s141 + $0x250] sm:%s134]
                %228 = vst [vmem:[%s142 + $0x150] sm:%s134] %v227
                %v229 = vld [vmem:[%s141 + $0x258] sm:%s134]
                %230 = vst [vmem:[%s142 + $0x158] sm:%s134] %v229
                %v231 = vld [vmem:[%s141 + $0x260] sm:%s134]
                %232 = vst [vmem:[%s142 + $0x160] sm:%s134] %v231
                %v233 = vld [vmem:[%s141 + $0x268] sm:%s134]
                %234 = vst [vmem:[%s142 + $0x168] sm:%s134] %v233
                %v235 = vld [vmem:[%s141 + $0x270] sm:%s134]
                %236 = vst [vmem:[%s142 + $0x170] sm:%s134] %v235
                %v237 = vld [vmem:[%s141 + $0x278] sm:%s134]
                %238 = vst [vmem:[%s142 + $0x178] sm:%s134] %v237
                %v239 = vld [vmem:[%s141 + $0x280] sm:%s134]
                %240 = vst [vmem:[%s142 + $0x180] sm:%s134] %v239
                %v241 = vld [vmem:[%s141 + $0x288] sm:%s134]
                %242 = vst [vmem:[%s142 + $0x188] sm:%s134] %v241
                %v243 = vld [vmem:[%s141 + $0x290] sm:%s134]
                %244 = vst [vmem:[%s142 + $0x190] sm:%s134] %v243
                %v245 = vld [vmem:[%s141 + $0x298] sm:%s134]
                %246 = vst [vmem:[%s142 + $0x198] sm:%s134] %v245
                %v247 = vld [vmem:[%s141 + $0x2a0] sm:%s134]
                %248 = vst [vmem:[%s142 + $0x1a0] sm:%s134] %v247
                %v249 = vld [vmem:[%s141 + $0x2a8] sm:%s134]
                %250 = vst [vmem:[%s142 + $0x1a8] sm:%s134] %v249
                %v251 = vld [vmem:[%s141 + $0x2b0] sm:%s134]
                %252 = vst [vmem:[%s142 + $0x1b0] sm:%s134] %v251
                %v253 = vld [vmem:[%s141 + $0x2b8] sm:%s134]
                %254 = vst [vmem:[%s142 + $0x1b8] sm:%s134] %v253
                %v255 = vld [vmem:[%s141 + $0x2c0] sm:%s134]
                %256 = vst [vmem:[%s142 + $0x1c0] sm:%s134] %v255
                %v257 = vld [vmem:[%s141 + $0x2c8] sm:%s134]
                %258 = vst [vmem:[%s142 + $0x1c8] sm:%s134] %v257
                %v259 = vld [vmem:[%s141 + $0x2d0] sm:%s134]
                %260 = vst [vmem:[%s142 + $0x1d0] sm:%s134] %v259
                %v261 = vld [vmem:[%s141 + $0x2d8] sm:%s134]
                %262 = vst [vmem:[%s142 + $0x1d8] sm:%s134] %v261
                %v263 = vld [vmem:[%s141 + $0x2e0] sm:%s134]
                %264 = vst [vmem:[%s142 + $0x1e0] sm:%s134] %v263
                %v265 = vld [vmem:[%s141 + $0x2e8] sm:%s134]
                %266 = vst [vmem:[%s142 + $0x1e8] sm:%s134] %v265
                %v267 = vld [vmem:[%s141 + $0x2f0] sm:%s134]
                %268 = vst [vmem:[%s142 + $0x1f0] sm:%s134] %v267
                %v269 = vld [vmem:[%s141 + $0x2f8] sm:%s134]
                %270 = vst [vmem:[%s142 + $0x1f8] sm:%s134] %v269
                %v271 = vld [vmem:[%s141 + $0x400] sm:%s134]
                %272 = vst [vmem:[%s142 + $0x200] sm:%s134] %v271
                %v273 = vld [vmem:[%s141 + $0x408] sm:%s134]
                %274 = vst [vmem:[%s142 + $0x208] sm:%s134] %v273
                %v275 = vld [vmem:[%s141 + $0x410] sm:%s134]
                %276 = vst [vmem:[%s142 + $0x210] sm:%s134] %v275
                %v277 = vld [vmem:[%s141 + $0x418] sm:%s134]
                %278 = vst [vmem:[%s142 + $0x218] sm:%s134] %v277
                %v279 = vld [vmem:[%s141 + $0x420] sm:%s134]
                %280 = vst [vmem:[%s142 + $0x220] sm:%s134] %v279
                %v281 = vld [vmem:[%s141 + $0x428] sm:%s134]
                %282 = vst [vmem:[%s142 + $0x228] sm:%s134] %v281
                %v283 = vld [vmem:[%s141 + $0x430] sm:%s134]
                %284 = vst [vmem:[%s142 + $0x230] sm:%s134] %v283
                %v285 = vld [vmem:[%s141 + $0x438] sm:%s134]
                %286 = vst [vmem:[%s142 + $0x238] sm:%s134] %v285
                %v287 = vld [vmem:[%s141 + $0x440] sm:%s134]
                %288 = vst [vmem:[%s142 + $0x240] sm:%s134] %v287
                %v289 = vld [vmem:[%s141 + $0x448] sm:%s134]
                %290 = vst [vmem:[%s142 + $0x248] sm:%s134] %v289
                %v291 = vld [vmem:[%s141 + $0x450] sm:%s134]
                %292 = vst [vmem:[%s142 + $0x250] sm:%s134] %v291
                %v293 = vld [vmem:[%s141 + $0x458] sm:%s134]
                %294 = vst [vmem:[%s142 + $0x258] sm:%s134] %v293
                %v295 = vld [vmem:[%s141 + $0x460] sm:%s134]
                %296 = vst [vmem:[%s142 + $0x260] sm:%s134] %v295
                %v297 = vld [vmem:[%s141 + $0x468] sm:%s134]
                %298 = vst [vmem:[%s142 + $0x268] sm:%s134] %v297
                %v299 = vld [vmem:[%s141 + $0x470] sm:%s134]
                %300 = vst [vmem:[%s142 + $0x270] sm:%s134] %v299
                %v301 = vld [vmem:[%s141 + $0x478] sm:%s134]
                %302 = vst [vmem:[%s142 + $0x278] sm:%s134] %v301
                %v303 = vld [vmem:[%s141 + $0x480] sm:%s134]
                %304 = vst [vmem:[%s142 + $0x280] sm:%s134] %v303
                %v305 = vld [vmem:[%s141 + $0x488] sm:%s134]
                %306 = vst [vmem:[%s142 + $0x288] sm:%s134] %v305
                %v307 = vld [vmem:[%s141 + $0x490] sm:%s134]
                %308 = vst [vmem:[%s142 + $0x290] sm:%s134] %v307
                %v309 = vld [vmem:[%s141 + $0x498] sm:%s134]
                %310 = vst [vmem:[%s142 + $0x298] sm:%s134] %v309
                %v311 = vld [vmem:[%s141 + $0x4a0] sm:%s134]
                %312 = vst [vmem:[%s142 + $0x2a0] sm:%s134] %v311
                %v313 = vld [vmem:[%s141 + $0x4a8] sm:%s134]
                %314 = vst [vmem:[%s142 + $0x2a8] sm:%s134] %v313
                %v315 = vld [vmem:[%s141 + $0x4b0] sm:%s134]
                %316 = vst [vmem:[%s142 + $0x2b0] sm:%s134] %v315
                %v317 = vld [vmem:[%s141 + $0x4b8] sm:%s134]
                %318 = vst [vmem:[%s142 + $0x2b8] sm:%s134] %v317
                %v319 = vld [vmem:[%s141 + $0x4c0] sm:%s134]
                %320 = vst [vmem:[%s142 + $0x2c0] sm:%s134] %v319
                %v321 = vld [vmem:[%s141 + $0x4c8] sm:%s134]
                %322 = vst [vmem:[%s142 + $0x2c8] sm:%s134] %v321
                %v323 = vld [vmem:[%s141 + $0x4d0] sm:%s134]
                %324 = vst [vmem:[%s142 + $0x2d0] sm:%s134] %v323
                %v325 = vld [vmem:[%s141 + $0x4d8] sm:%s134]
                %326 = vst [vmem:[%s142 + $0x2d8] sm:%s134] %v325
                %v327 = vld [vmem:[%s141 + $0x4e0] sm:%s134]
                %328 = vst [vmem:[%s142 + $0x2e0] sm:%s134] %v327
                %v329 = vld [vmem:[%s141 + $0x4e8] sm:%s134]
                %330 = vst [vmem:[%s142 + $0x2e8] sm:%s134] %v329
                %v331 = vld [vmem:[%s141 + $0x4f0] sm:%s134]
                %332 = vst [vmem:[%s142 + $0x2f0] sm:%s134] %v331
                %v333 = vld [vmem:[%s141 + $0x4f8] sm:%s134]
                %334 = vst [vmem:[%s142 + $0x2f8] sm:%s134] %v333
                %v335 = vld [vmem:[%s141 + $0x600] sm:%s134]
                %336 = vst [vmem:[%s142 + $0x300] sm:%s134] %v335
                %v337 = vld [vmem:[%s141 + $0x608] sm:%s134]
                %338 = vst [vmem:[%s142 + $0x308] sm:%s134] %v337
                %v339 = vld [vmem:[%s141 + $0x610] sm:%s134]
                %340 = vst [vmem:[%s142 + $0x310] sm:%s134] %v339
                %v341 = vld [vmem:[%s141 + $0x618] sm:%s134]
                %342 = vst [vmem:[%s142 + $0x318] sm:%s134] %v341
                %v343 = vld [vmem:[%s141 + $0x620] sm:%s134]
                %344 = vst [vmem:[%s142 + $0x320] sm:%s134] %v343
                %v345 = vld [vmem:[%s141 + $0x628] sm:%s134]
                %346 = vst [vmem:[%s142 + $0x328] sm:%s134] %v345
                %v347 = vld [vmem:[%s141 + $0x630] sm:%s134]
                %348 = vst [vmem:[%s142 + $0x330] sm:%s134] %v347
                %v349 = vld [vmem:[%s141 + $0x638] sm:%s134]
                %350 = vst [vmem:[%s142 + $0x338] sm:%s134] %v349
                %v351 = vld [vmem:[%s141 + $0x640] sm:%s134]
                %352 = vst [vmem:[%s142 + $0x340] sm:%s134] %v351
                %v353 = vld [vmem:[%s141 + $0x648] sm:%s134]
                %354 = vst [vmem:[%s142 + $0x348] sm:%s134] %v353
                %v355 = vld [vmem:[%s141 + $0x650] sm:%s134]
                %356 = vst [vmem:[%s142 + $0x350] sm:%s134] %v355
                %v357 = vld [vmem:[%s141 + $0x658] sm:%s134]
                %358 = vst [vmem:[%s142 + $0x358] sm:%s134] %v357
                %v359 = vld [vmem:[%s141 + $0x660] sm:%s134]
                %360 = vst [vmem:[%s142 + $0x360] sm:%s134] %v359
                %v361 = vld [vmem:[%s141 + $0x668] sm:%s134]
                %362 = vst [vmem:[%s142 + $0x368] sm:%s134] %v361
                %v363 = vld [vmem:[%s141 + $0x670] sm:%s134]
                %364 = vst [vmem:[%s142 + $0x370] sm:%s134] %v363
                %v365 = vld [vmem:[%s141 + $0x678] sm:%s134]
                %366 = vst [vmem:[%s142 + $0x378] sm:%s134] %v365
                %v367 = vld [vmem:[%s141 + $0x680] sm:%s134]
                %368 = vst [vmem:[%s142 + $0x380] sm:%s134] %v367
                %v369 = vld [vmem:[%s141 + $0x688] sm:%s134]
                %370 = vst [vmem:[%s142 + $0x388] sm:%s134] %v369
                %v371 = vld [vmem:[%s141 + $0x690] sm:%s134]
                %372 = vst [vmem:[%s142 + $0x390] sm:%s134] %v371
                %v373 = vld [vmem:[%s141 + $0x698] sm:%s134]
                %374 = vst [vmem:[%s142 + $0x398] sm:%s134] %v373
                %v375 = vld [vmem:[%s141 + $0x6a0] sm:%s134]
                %376 = vst [vmem:[%s142 + $0x3a0] sm:%s134] %v375
                %v377 = vld [vmem:[%s141 + $0x6a8] sm:%s134]
                %378 = vst [vmem:[%s142 + $0x3a8] sm:%s134] %v377
                %v379 = vld [vmem:[%s141 + $0x6b0] sm:%s134]
                %380 = vst [vmem:[%s142 + $0x3b0] sm:%s134] %v379
                %v381 = vld [vmem:[%s141 + $0x6b8] sm:%s134]
                %382 = vst [vmem:[%s142 + $0x3b8] sm:%s134] %v381
                %v383 = vld [vmem:[%s141 + $0x6c0] sm:%s134]
                %384 = vst [vmem:[%s142 + $0x3c0] sm:%s134] %v383
                %v385 = vld [vmem:[%s141 + $0x6c8] sm:%s134]
                %386 = vst [vmem:[%s142 + $0x3c8] sm:%s134] %v385
                %v387 = vld [vmem:[%s141 + $0x6d0] sm:%s134]
                %388 = vst [vmem:[%s142 + $0x3d0] sm:%s134] %v387
                %v389 = vld [vmem:[%s141 + $0x6d8] sm:%s134]
                %390 = vst [vmem:[%s142 + $0x3d8] sm:%s134] %v389
                %v391 = vld [vmem:[%s141 + $0x6e0] sm:%s134]
                %392 = vst [vmem:[%s142 + $0x3e0] sm:%s134] %v391
                %v393 = vld [vmem:[%s141 + $0x6e8] sm:%s134]
                %394 = vst [vmem:[%s142 + $0x3e8] sm:%s134] %v393
                %v395 = vld [vmem:[%s141 + $0x6f0] sm:%s134]
                %396 = vst [vmem:[%s142 + $0x3f0] sm:%s134] %v395
                %v397 = vld [vmem:[%s141 + $0x6f8] sm:%s134]
                %398 = vst [vmem:[%s142 + $0x3f8] sm:%s134] %v397
                %v399 = vld [vmem:[%s141 + $0x800] sm:%s134]
                %400 = vst [vmem:[%s142 + $0x400] sm:%s134] %v399
                %v401 = vld [vmem:[%s141 + $0x808] sm:%s134]
                %402 = vst [vmem:[%s142 + $0x408] sm:%s134] %v401
                %v403 = vld [vmem:[%s141 + $0x810] sm:%s134]
                %404 = vst [vmem:[%s142 + $0x410] sm:%s134] %v403
                %v405 = vld [vmem:[%s141 + $0x818] sm:%s134]
                %406 = vst [vmem:[%s142 + $0x418] sm:%s134] %v405
                %v407 = vld [vmem:[%s141 + $0x820] sm:%s134]
                %408 = vst [vmem:[%s142 + $0x420] sm:%s134] %v407
                %v409 = vld [vmem:[%s141 + $0x828] sm:%s134]
                %410 = vst [vmem:[%s142 + $0x428] sm:%s134] %v409
                %v411 = vld [vmem:[%s141 + $0x830] sm:%s134]
                %412 = vst [vmem:[%s142 + $0x430] sm:%s134] %v411
                %v413 = vld [vmem:[%s141 + $0x838] sm:%s134]
                %414 = vst [vmem:[%s142 + $0x438] sm:%s134] %v413
                %v415 = vld [vmem:[%s141 + $0x840] sm:%s134]
                %416 = vst [vmem:[%s142 + $0x440] sm:%s134] %v415
                %v417 = vld [vmem:[%s141 + $0x848] sm:%s134]
                %418 = vst [vmem:[%s142 + $0x448] sm:%s134] %v417
                %v419 = vld [vmem:[%s141 + $0x850] sm:%s134]
                %420 = vst [vmem:[%s142 + $0x450] sm:%s134] %v419
                %v421 = vld [vmem:[%s141 + $0x858] sm:%s134]
                %422 = vst [vmem:[%s142 + $0x458] sm:%s134] %v421
                %v423 = vld [vmem:[%s141 + $0x860] sm:%s134]
                %424 = vst [vmem:[%s142 + $0x460] sm:%s134] %v423
                %v425 = vld [vmem:[%s141 + $0x868] sm:%s134]
                %426 = vst [vmem:[%s142 + $0x468] sm:%s134] %v425
                %v427 = vld [vmem:[%s141 + $0x870] sm:%s134]
                %428 = vst [vmem:[%s142 + $0x470] sm:%s134] %v427
                %v429 = vld [vmem:[%s141 + $0x878] sm:%s134]
                %430 = vst [vmem:[%s142 + $0x478] sm:%s134] %v429
                %v431 = vld [vmem:[%s141 + $0x880] sm:%s134]
                %432 = vst [vmem:[%s142 + $0x480] sm:%s134] %v431
                %v433 = vld [vmem:[%s141 + $0x888] sm:%s134]
                %434 = vst [vmem:[%s142 + $0x488] sm:%s134] %v433
                %v435 = vld [vmem:[%s141 + $0x890] sm:%s134]
                %436 = vst [vmem:[%s142 + $0x490] sm:%s134] %v435
                %v437 = vld [vmem:[%s141 + $0x898] sm:%s134]
                %438 = vst [vmem:[%s142 + $0x498] sm:%s134] %v437
                %v439 = vld [vmem:[%s141 + $0x8a0] sm:%s134]
                %440 = vst [vmem:[%s142 + $0x4a0] sm:%s134] %v439
                %v441 = vld [vmem:[%s141 + $0x8a8] sm:%s134]
                %442 = vst [vmem:[%s142 + $0x4a8] sm:%s134] %v441
                %v443 = vld [vmem:[%s141 + $0x8b0] sm:%s134]
                %444 = vst [vmem:[%s142 + $0x4b0] sm:%s134] %v443
                %v445 = vld [vmem:[%s141 + $0x8b8] sm:%s134]
                %446 = vst [vmem:[%s142 + $0x4b8] sm:%s134] %v445
                %v447 = vld [vmem:[%s141 + $0x8c0] sm:%s134]
                %448 = vst [vmem:[%s142 + $0x4c0] sm:%s134] %v447
                %v449 = vld [vmem:[%s141 + $0x8c8] sm:%s134]
                %450 = vst [vmem:[%s142 + $0x4c8] sm:%s134] %v449
                %v451 = vld [vmem:[%s141 + $0x8d0] sm:%s134]
                %452 = vst [vmem:[%s142 + $0x4d0] sm:%s134] %v451
                %v453 = vld [vmem:[%s141 + $0x8d8] sm:%s134]
                %454 = vst [vmem:[%s142 + $0x4d8] sm:%s134] %v453
                %v455 = vld [vmem:[%s141 + $0x8e0] sm:%s134]
                %456 = vst [vmem:[%s142 + $0x4e0] sm:%s134] %v455
                %v457 = vld [vmem:[%s141 + $0x8e8] sm:%s134]
                %458 = vst [vmem:[%s142 + $0x4e8] sm:%s134] %v457
                %v459 = vld [vmem:[%s141 + $0x8f0] sm:%s134]
                %460 = vst [vmem:[%s142 + $0x4f0] sm:%s134] %v459
                %v461 = vld [vmem:[%s141 + $0x8f8] sm:%s134]
                %462 = vst [vmem:[%s142 + $0x4f8] sm:%s134] %v461
                %v463 = vld [vmem:[%s141 + $0xa00] sm:%s134]
                %464 = vst [vmem:[%s142 + $0x500] sm:%s134] %v463
                %v465 = vld [vmem:[%s141 + $0xa08] sm:%s134]
                %466 = vst [vmem:[%s142 + $0x508] sm:%s134] %v465
                %v467 = vld [vmem:[%s141 + $0xa10] sm:%s134]
                %468 = vst [vmem:[%s142 + $0x510] sm:%s134] %v467
                %v469 = vld [vmem:[%s141 + $0xa18] sm:%s134]
                %470 = vst [vmem:[%s142 + $0x518] sm:%s134] %v469
                %v471 = vld [vmem:[%s141 + $0xa20] sm:%s134]
                %472 = vst [vmem:[%s142 + $0x520] sm:%s134] %v471
                %v473 = vld [vmem:[%s141 + $0xa28] sm:%s134]
                %474 = vst [vmem:[%s142 + $0x528] sm:%s134] %v473
                %v475 = vld [vmem:[%s141 + $0xa30] sm:%s134]
                %476 = vst [vmem:[%s142 + $0x530] sm:%s134] %v475
                %v477 = vld [vmem:[%s141 + $0xa38] sm:%s134]
                %478 = vst [vmem:[%s142 + $0x538] sm:%s134] %v477
                %v479 = vld [vmem:[%s141 + $0xa40] sm:%s134]
                %480 = vst [vmem:[%s142 + $0x540] sm:%s134] %v479
                %v481 = vld [vmem:[%s141 + $0xa48] sm:%s134]
                %482 = vst [vmem:[%s142 + $0x548] sm:%s134] %v481
                %v483 = vld [vmem:[%s141 + $0xa50] sm:%s134]
                %484 = vst [vmem:[%s142 + $0x550] sm:%s134] %v483
                %v485 = vld [vmem:[%s141 + $0xa58] sm:%s134]
                %486 = vst [vmem:[%s142 + $0x558] sm:%s134] %v485
                %v487 = vld [vmem:[%s141 + $0xa60] sm:%s134]
                %488 = vst [vmem:[%s142 + $0x560] sm:%s134] %v487
                %v489 = vld [vmem:[%s141 + $0xa68] sm:%s134]
                %490 = vst [vmem:[%s142 + $0x568] sm:%s134] %v489
                %v491 = vld [vmem:[%s141 + $0xa70] sm:%s134]
                %492 = vst [vmem:[%s142 + $0x570] sm:%s134] %v491
                %v493 = vld [vmem:[%s141 + $0xa78] sm:%s134]
                %494 = vst [vmem:[%s142 + $0x578] sm:%s134] %v493
                %v495 = vld [vmem:[%s141 + $0xa80] sm:%s134]
                %496 = vst [vmem:[%s142 + $0x580] sm:%s134] %v495
                %v497 = vld [vmem:[%s141 + $0xa88] sm:%s134]
                %498 = vst [vmem:[%s142 + $0x588] sm:%s134] %v497
                %v499 = vld [vmem:[%s141 + $0xa90] sm:%s134]
                %500 = vst [vmem:[%s142 + $0x590] sm:%s134] %v499
                %v501 = vld [vmem:[%s141 + $0xa98] sm:%s134]
                %502 = vst [vmem:[%s142 + $0x598] sm:%s134] %v501
                %v503 = vld [vmem:[%s141 + $0xaa0] sm:%s134]
                %504 = vst [vmem:[%s142 + $0x5a0] sm:%s134] %v503
                %v505 = vld [vmem:[%s141 + $0xaa8] sm:%s134]
                %506 = vst [vmem:[%s142 + $0x5a8] sm:%s134] %v505
                %v507 = vld [vmem:[%s141 + $0xab0] sm:%s134]
                %508 = vst [vmem:[%s142 + $0x5b0] sm:%s134] %v507
                %v509 = vld [vmem:[%s141 + $0xab8] sm:%s134]
                %510 = vst [vmem:[%s142 + $0x5b8] sm:%s134] %v509
                %v511 = vld [vmem:[%s141 + $0xac0] sm:%s134]
                %512 = vst [vmem:[%s142 + $0x5c0] sm:%s134] %v511
                %v513 = vld [vmem:[%s141 + $0xac8] sm:%s134]
                %514 = vst [vmem:[%s142 + $0x5c8] sm:%s134] %v513
                %v515 = vld [vmem:[%s141 + $0xad0] sm:%s134]
                %516 = vst [vmem:[%s142 + $0x5d0] sm:%s134] %v515
                %v517 = vld [vmem:[%s141 + $0xad8] sm:%s134]
                %518 = vst [vmem:[%s142 + $0x5d8] sm:%s134] %v517
                %v519 = vld [vmem:[%s141 + $0xae0] sm:%s134]
                %520 = vst [vmem:[%s142 + $0x5e0] sm:%s134] %v519
                %v521 = vld [vmem:[%s141 + $0xae8] sm:%s134]
                %522 = vst [vmem:[%s142 + $0x5e8] sm:%s134] %v521
                %v523 = vld [vmem:[%s141 + $0xaf0] sm:%s134]
                %524 = vst [vmem:[%s142 + $0x5f0] sm:%s134] %v523
                %v525 = vld [vmem:[%s141 + $0xaf8] sm:%s134]
                %526 = vst [vmem:[%s142 + $0x5f8] sm:%s134] %v525
              $region41: #{tpu_custom_call.1} parent=35 // loop_footer
                %s140 = sadd.s32 1, %s136
              $region42: #{tpu_custom_call.1} parent=35 // loop_footer_branch
                %135 = sbr.rel target = $region38
              $region43: #{tpu_custom_call.1} parent=35 // loop_exit
                _
            $region36: #{tpu_custom_call.1} parent=27 // pred_fallthru
              _
          $region28: #{tpu_custom_call.1} parent=23 // pred_fallthru
            _
          %923 = vnop
        $region24: #{tpu_custom_call.1} parent=15 // pred_fallthru
          _
      $region16: #{tpu_custom_call.1} parent=5 // pred_fallthru
        _
      %p924 = scmp.le.s32.totalorder 1, %s11
      %p925 = scmp.lt.s32.totalorder %s11, 3
      %p926 = pnand %p924, %p925
      %p927 = pneg %p926
      // Predicated region
      $region59: #{tpu_custom_call.1} parent=5 // pred_check
        _
      $region60: #{tpu_custom_call.1} parent=5 // pred_check_branch
        %929 = sbr.rel (%p926) target = $region62
      $region61: #{tpu_custom_call.1} parent=5 // pred_region
        %s930 = ssub.s32 %s11, 1
        %s931 = sand.u32 %s50, 1
        %s932 = sand.u32 %s50, 1
        %s933 = smul.addr %s932, 1536
        %s934 = scalar_lea.vmem [#allocation2], %s933
        // Predicated region
        $region63: #{tpu_custom_call.1} parent=61 // pred_check
          %p935 = pneg %p63
        $region64: #{tpu_custom_call.1} parent=61 // pred_check_branch
          %937 = sbr.rel (%p935) target = $region66
        $region65: #{tpu_custom_call.1} parent=61 // pred_region
          _
        $region66: #{tpu_custom_call.1} parent=61 // pred_fallthru
          _
        %s938 = smul.u32 32, %s16
        %p939 = scmp.lt.s32.totalorder %s938, 63
        %s940 = scalar_select %p939, %s938, 63
        %s941 = smul.addr %s940, 8
        %s942 = scalar_lea.vmem %s0, %s941
        %p943 = pneg %p37
        %p944 = pneg %p34
        %s945 = sand.u32 %s50, 1
        %s946 = sand.u32 %s50, 1
        %s947 = smul.addr %s946, 1536
        %s948 = scalar_lea.vmem [#allocation2], %s947
        %p949 = pneg %p63
        %p950 = pneg %p60
        %p951 = pneg %p89
        %p952 = pneg %p86
        %s953 = sand.u32 %s76, 1
        %s954 = scalar_lea.sflag [#allocation4], %s953
        %s955 = sand.u32 %s76, 1
        %s956 = scalar_lea.vmem [#allocation3], %s955
        %s957 = smul.u32 32, %s16
        %p958 = scmp.lt.s32.totalorder %s957, 63
        %s959 = scalar_select %p958, %s957, 63
        %s960 = smul.addr %s959, 8
        %s961 = scalar_lea.vmem %s0, %s960
        %s962 = smul.u32 32, %s16
        %s963 = smul.u32 32, %s16
        %v964 = vld [vmem:[%s961] sm:$0xff]
        %v965 = vld [vmem:[%s961 + $0x8] sm:$0xff]
        %v966 = vld [vmem:[%s961 + $0x10] sm:$0xff]
        %v967 = vld [vmem:[%s961 + $0x18] sm:$0xff]
        %v968 = vld [vmem:[%s961 + $0x20] sm:$0xff]
        %v969 = vld [vmem:[%s961 + $0x28] sm:$0xff]
        %v970 = vld [vmem:[%s961 + $0x30] sm:$0xff]
        %v971 = vld [vmem:[%s961 + $0x38] sm:$0xff]
        %v972 = vld [vmem:[%s961 + $0x40] sm:$0xff]
        %v973 = vld [vmem:[%s961 + $0x48] sm:$0xff]
        %v974 = vld [vmem:[%s961 + $0x50] sm:$0xff]
        %v975 = vld [vmem:[%s961 + $0x58] sm:$0xff]
        %v976 = vld [vmem:[%s961 + $0x60] sm:$0xff]
        %v977 = vld [vmem:[%s961 + $0x68] sm:$0xff]
        %v978 = vld [vmem:[%s961 + $0x70] sm:$0xff]
        %v979 = vld [vmem:[%s961 + $0x78] sm:$0xff]
        %v980 = vld [vmem:[%s961 + $0x80] sm:$0xff]
        %v981 = vld [vmem:[%s961 + $0x88] sm:$0xff]
        %v982 = vld [vmem:[%s961 + $0x90] sm:$0xff]
        %v983 = vld [vmem:[%s961 + $0x98] sm:$0xff]
        %v984 = vld [vmem:[%s961 + $0xa0] sm:$0xff]
        %v985 = vld [vmem:[%s961 + $0xa8] sm:$0xff]
        %v986 = vld [vmem:[%s961 + $0xb0] sm:$0xff]
        %v987 = vld [vmem:[%s961 + $0xb8] sm:$0xff]
        %v988 = vld [vmem:[%s961 + $0xc0] sm:$0xff]
        %v989 = vld [vmem:[%s961 + $0xc8] sm:$0xff]
        %v990 = vld [vmem:[%s961 + $0xd0] sm:$0xff]
        %v991 = vld [vmem:[%s961 + $0xd8] sm:$0xff]
        %v992 = vld [vmem:[%s961 + $0xe0] sm:$0xff]
        %v993 = vld [vmem:[%s961 + $0xe8] sm:$0xff]
        %v994 = vld [vmem:[%s961 + $0xf0] sm:$0xff]
        %v995 = vld [vmem:[%s961 + $0xf8] sm:$0xff]
        %v996 = vld [vmem:[%s934] sm:$0xff]
        %v997 = vld [vmem:[%s934 + $0x8] sm:$0xff]
        %v998 = vld [vmem:[%s934 + $0x10] sm:$0xff]
        %v999 = vld [vmem:[%s934 + $0x18] sm:$0xff]
        %v1000 = vld [vmem:[%s934 + $0x20] sm:$0xff]
        %v1001 = vld [vmem:[%s934 + $0x28] sm:$0xff]
        %v1002 = vld [vmem:[%s934 + $0x30] sm:$0xff]
        %v1003 = vld [vmem:[%s934 + $0x38] sm:$0xff]
        %v1004 = vld [vmem:[%s934 + $0x40] sm:$0xff]
        %v1005 = vld [vmem:[%s934 + $0x48] sm:$0xff]
        %v1006 = vld [vmem:[%s934 + $0x50] sm:$0xff]
        %v1007 = vld [vmem:[%s934 + $0x58] sm:$0xff]
        %v1008 = vld [vmem:[%s934 + $0x60] sm:$0xff]
        %v1009 = vld [vmem:[%s934 + $0x68] sm:$0xff]
        %v1010 = vld [vmem:[%s934 + $0x70] sm:$0xff]
        %v1011 = vld [vmem:[%s934 + $0x78] sm:$0xff]
        %v1012 = vld [vmem:[%s934 + $0x80] sm:$0xff]
        %v1013 = vld [vmem:[%s934 + $0x88] sm:$0xff]
        %v1014 = vld [vmem:[%s934 + $0x90] sm:$0xff]
        %v1015 = vld [vmem:[%s934 + $0x98] sm:$0xff]
        %v1016 = vld [vmem:[%s934 + $0xa0] sm:$0xff]
        %v1017 = vld [vmem:[%s934 + $0xa8] sm:$0xff]
        %v1018 = vld [vmem:[%s934 + $0xb0] sm:$0xff]
        %v1019 = vld [vmem:[%s934 + $0xb8] sm:$0xff]
        %v1020 = vld [vmem:[%s934 + $0xc0] sm:$0xff]
        %v1021 = vld [vmem:[%s934 + $0xc8] sm:$0xff]
        %v1022 = vld [vmem:[%s934 + $0xd0] sm:$0xff]
        %v1023 = vld [vmem:[%s934 + $0xd8] sm:$0xff]
        %v1024 = vld [vmem:[%s934 + $0xe0] sm:$0xff]
        %v1025 = vld [vmem:[%s934 + $0xe8] sm:$0xff]
        %v1026 = vld [vmem:[%s934 + $0xf0] sm:$0xff]
        %v1027 = vld [vmem:[%s934 + $0xf8] sm:$0xff]
        %v1028 = vld [vmem:[%s934 + $0x100] sm:$0xff]
        %v1029 = vld [vmem:[%s934 + $0x108] sm:$0xff]
        %v1030 = vld [vmem:[%s934 + $0x110] sm:$0xff]
        %v1031 = vld [vmem:[%s934 + $0x118] sm:$0xff]
        %v1032 = vld [vmem:[%s934 + $0x120] sm:$0xff]
        %v1033 = vld [vmem:[%s934 + $0x128] sm:$0xff]
        %v1034 = vld [vmem:[%s934 + $0x130] sm:$0xff]
        %v1035 = vld [vmem:[%s934 + $0x138] sm:$0xff]
        %v1036 = vld [vmem:[%s934 + $0x140] sm:$0xff]
        %v1037 = vld [vmem:[%s934 + $0x148] sm:$0xff]
        %v1038 = vld [vmem:[%s934 + $0x150] sm:$0xff]
        %v1039 = vld [vmem:[%s934 + $0x158] sm:$0xff]
        %v1040 = vld [vmem:[%s934 + $0x160] sm:$0xff]
        %v1041 = vld [vmem:[%s934 + $0x168] sm:$0xff]
        %v1042 = vld [vmem:[%s934 + $0x170] sm:$0xff]
        %v1043 = vld [vmem:[%s934 + $0x178] sm:$0xff]
        %v1044 = vld [vmem:[%s934 + $0x180] sm:$0xff]
        %v1045 = vld [vmem:[%s934 + $0x188] sm:$0xff]
        %v1046 = vld [vmem:[%s934 + $0x190] sm:$0xff]
        %v1047 = vld [vmem:[%s934 + $0x198] sm:$0xff]
        %v1048 = vld [vmem:[%s934 + $0x1a0] sm:$0xff]
        %v1049 = vld [vmem:[%s934 + $0x1a8] sm:$0xff]
        %v1050 = vld [vmem:[%s934 + $0x1b0] sm:$0xff]
        %v1051 = vld [vmem:[%s934 + $0x1b8] sm:$0xff]
        %v1052 = vld [vmem:[%s934 + $0x1c0] sm:$0xff]
        %v1053 = vld [vmem:[%s934 + $0x1c8] sm:$0xff]
        %v1054 = vld [vmem:[%s934 + $0x1d0] sm:$0xff]
        %v1055 = vld [vmem:[%s934 + $0x1d8] sm:$0xff]
        %v1056 = vld [vmem:[%s934 + $0x1e0] sm:$0xff]
        %v1057 = vld [vmem:[%s934 + $0x1e8] sm:$0xff]
        %v1058 = vld [vmem:[%s934 + $0x1f0] sm:$0xff]
        %v1059 = vld [vmem:[%s934 + $0x1f8] sm:$0xff]
        %v1060 = vld [vmem:[%s934 + $0x200] sm:$0xff]
        %v1061 = vld [vmem:[%s934 + $0x208] sm:$0xff]
        %v1062 = vld [vmem:[%s934 + $0x210] sm:$0xff]
        %v1063 = vld [vmem:[%s934 + $0x218] sm:$0xff]
        %v1064 = vld [vmem:[%s934 + $0x220] sm:$0xff]
        %v1065 = vld [vmem:[%s934 + $0x228] sm:$0xff]
        %v1066 = vld [vmem:[%s934 + $0x230] sm:$0xff]
        %v1067 = vld [vmem:[%s934 + $0x238] sm:$0xff]
        %v1068 = vld [vmem:[%s934 + $0x240] sm:$0xff]
        %v1069 = vld [vmem:[%s934 + $0x248] sm:$0xff]
        %v1070 = vld [vmem:[%s934 + $0x250] sm:$0xff]
        %v1071 = vld [vmem:[%s934 + $0x258] sm:$0xff]
        %v1072 = vld [vmem:[%s934 + $0x260] sm:$0xff]
        %v1073 = vld [vmem:[%s934 + $0x268] sm:$0xff]
        %v1074 = vld [vmem:[%s934 + $0x270] sm:$0xff]
        %v1075 = vld [vmem:[%s934 + $0x278] sm:$0xff]
        %v1076 = vld [vmem:[%s934 + $0x280] sm:$0xff]
        %v1077 = vld [vmem:[%s934 + $0x288] sm:$0xff]
        %v1078 = vld [vmem:[%s934 + $0x290] sm:$0xff]
        %v1079 = vld [vmem:[%s934 + $0x298] sm:$0xff]
        %v1080 = vld [vmem:[%s934 + $0x2a0] sm:$0xff]
        %v1081 = vld [vmem:[%s934 + $0x2a8] sm:$0xff]
        %v1082 = vld [vmem:[%s934 + $0x2b0] sm:$0xff]
        %v1083 = vld [vmem:[%s934 + $0x2b8] sm:$0xff]
        %v1084 = vld [vmem:[%s934 + $0x2c0] sm:$0xff]
        %v1085 = vld [vmem:[%s934 + $0x2c8] sm:$0xff]
        %v1086 = vld [vmem:[%s934 + $0x2d0] sm:$0xff]
        %v1087 = vld [vmem:[%s934 + $0x2d8] sm:$0xff]
        %v1088 = vld [vmem:[%s934 + $0x2e0] sm:$0xff]
        %v1089 = vld [vmem:[%s934 + $0x2e8] sm:$0xff]
        %v1090 = vld [vmem:[%s934 + $0x2f0] sm:$0xff]
        %v1091 = vld [vmem:[%s934 + $0x2f8] sm:$0xff]
        %v1092 = vld [vmem:[%s934 + $0x300] sm:$0xff]
        %v1093 = vld [vmem:[%s934 + $0x308] sm:$0xff]
        %v1094 = vld [vmem:[%s934 + $0x310] sm:$0xff]
        %v1095 = vld [vmem:[%s934 + $0x318] sm:$0xff]
        %v1096 = vld [vmem:[%s934 + $0x320] sm:$0xff]
        %v1097 = vld [vmem:[%s934 + $0x328] sm:$0xff]
        %v1098 = vld [vmem:[%s934 + $0x330] sm:$0xff]
        %v1099 = vld [vmem:[%s934 + $0x338] sm:$0xff]
        %v1100 = vld [vmem:[%s934 + $0x340] sm:$0xff]
        %v1101 = vld [vmem:[%s934 + $0x348] sm:$0xff]
        %v1102 = vld [vmem:[%s934 + $0x350] sm:$0xff]
        %v1103 = vld [vmem:[%s934 + $0x358] sm:$0xff]
        %v1104 = vld [vmem:[%s934 + $0x360] sm:$0xff]
        %v1105 = vld [vmem:[%s934 + $0x368] sm:$0xff]
        %v1106 = vld [vmem:[%s934 + $0x370] sm:$0xff]
        %v1107 = vld [vmem:[%s934 + $0x378] sm:$0xff]
        %v1108 = vld [vmem:[%s934 + $0x380] sm:$0xff]
        %v1109 = vld [vmem:[%s934 + $0x388] sm:$0xff]
        %v1110 = vld [vmem:[%s934 + $0x390] sm:$0xff]
        %v1111 = vld [vmem:[%s934 + $0x398] sm:$0xff]
        %v1112 = vld [vmem:[%s934 + $0x3a0] sm:$0xff]
        %v1113 = vld [vmem:[%s934 + $0x3a8] sm:$0xff]
        %v1114 = vld [vmem:[%s934 + $0x3b0] sm:$0xff]
        %v1115 = vld [vmem:[%s934 + $0x3b8] sm:$0xff]
        %v1116 = vld [vmem:[%s934 + $0x3c0] sm:$0xff]
        %v1117 = vld [vmem:[%s934 + $0x3c8] sm:$0xff]
        %v1118 = vld [vmem:[%s934 + $0x3d0] sm:$0xff]
        %v1119 = vld [vmem:[%s934 + $0x3d8] sm:$0xff]
        %v1120 = vld [vmem:[%s934 + $0x3e0] sm:$0xff]
        %v1121 = vld [vmem:[%s934 + $0x3e8] sm:$0xff]
        %v1122 = vld [vmem:[%s934 + $0x3f0] sm:$0xff]
        %v1123 = vld [vmem:[%s934 + $0x3f8] sm:$0xff]
        %v1124 = vld [vmem:[%s934 + $0x400] sm:$0xff]
        %v1125 = vld [vmem:[%s934 + $0x408] sm:$0xff]
        %v1126 = vld [vmem:[%s934 + $0x410] sm:$0xff]
        %v1127 = vld [vmem:[%s934 + $0x418] sm:$0xff]
        %v1128 = vld [vmem:[%s934 + $0x420] sm:$0xff]
        %v1129 = vld [vmem:[%s934 + $0x428] sm:$0xff]
        %v1130 = vld [vmem:[%s934 + $0x430] sm:$0xff]
        %v1131 = vld [vmem:[%s934 + $0x438] sm:$0xff]
        %v1132 = vld [vmem:[%s934 + $0x440] sm:$0xff]
        %v1133 = vld [vmem:[%s934 + $0x448] sm:$0xff]
        %v1134 = vld [vmem:[%s934 + $0x450] sm:$0xff]
        %v1135 = vld [vmem:[%s934 + $0x458] sm:$0xff]
        %v1136 = vld [vmem:[%s934 + $0x460] sm:$0xff]
        %v1137 = vld [vmem:[%s934 + $0x468] sm:$0xff]
        %v1138 = vld [vmem:[%s934 + $0x470] sm:$0xff]
        %v1139 = vld [vmem:[%s934 + $0x478] sm:$0xff]
        %v1140 = vld [vmem:[%s934 + $0x480] sm:$0xff]
        %v1141 = vld [vmem:[%s934 + $0x488] sm:$0xff]
        %v1142 = vld [vmem:[%s934 + $0x490] sm:$0xff]
        %v1143 = vld [vmem:[%s934 + $0x498] sm:$0xff]
        %v1144 = vld [vmem:[%s934 + $0x4a0] sm:$0xff]
        %v1145 = vld [vmem:[%s934 + $0x4a8] sm:$0xff]
        %v1146 = vld [vmem:[%s934 + $0x4b0] sm:$0xff]
        %v1147 = vld [vmem:[%s934 + $0x4b8] sm:$0xff]
        %v1148 = vld [vmem:[%s934 + $0x4c0] sm:$0xff]
        %v1149 = vld [vmem:[%s934 + $0x4c8] sm:$0xff]
        %v1150 = vld [vmem:[%s934 + $0x4d0] sm:$0xff]
        %v1151 = vld [vmem:[%s934 + $0x4d8] sm:$0xff]
        %v1152 = vld [vmem:[%s934 + $0x4e0] sm:$0xff]
        %v1153 = vld [vmem:[%s934 + $0x4e8] sm:$0xff]
        %v1154 = vld [vmem:[%s934 + $0x4f0] sm:$0xff]
        %v1155 = vld [vmem:[%s934 + $0x4f8] sm:$0xff]
        %v1156 = vld [vmem:[%s934 + $0x500] sm:$0xff]
        %v1157 = vld [vmem:[%s934 + $0x508] sm:$0xff]
        %v1158 = vld [vmem:[%s934 + $0x510] sm:$0xff]
        %v1159 = vld [vmem:[%s934 + $0x518] sm:$0xff]
        %v1160 = vld [vmem:[%s934 + $0x520] sm:$0xff]
        %v1161 = vld [vmem:[%s934 + $0x528] sm:$0xff]
        %v1162 = vld [vmem:[%s934 + $0x530] sm:$0xff]
        %v1163 = vld [vmem:[%s934 + $0x538] sm:$0xff]
        %v1164 = vld [vmem:[%s934 + $0x540] sm:$0xff]
        %v1165 = vld [vmem:[%s934 + $0x548] sm:$0xff]
        %v1166 = vld [vmem:[%s934 + $0x550] sm:$0xff]
        %v1167 = vld [vmem:[%s934 + $0x558] sm:$0xff]
        %v1168 = vld [vmem:[%s934 + $0x560] sm:$0xff]
        %v1169 = vld [vmem:[%s934 + $0x568] sm:$0xff]
        %v1170 = vld [vmem:[%s934 + $0x570] sm:$0xff]
        %v1171 = vld [vmem:[%s934 + $0x578] sm:$0xff]
        %v1172 = vld [vmem:[%s934 + $0x580] sm:$0xff]
        %v1173 = vld [vmem:[%s934 + $0x588] sm:$0xff]
        %v1174 = vld [vmem:[%s934 + $0x590] sm:$0xff]
        %v1175 = vld [vmem:[%s934 + $0x598] sm:$0xff]
        %v1176 = vld [vmem:[%s934 + $0x5a0] sm:$0xff]
        %v1177 = vld [vmem:[%s934 + $0x5a8] sm:$0xff]
        %v1178 = vld [vmem:[%s934 + $0x5b0] sm:$0xff]
        %v1179 = vld [vmem:[%s934 + $0x5b8] sm:$0xff]
        %v1180 = vld [vmem:[%s934 + $0x5c0] sm:$0xff]
        %v1181 = vld [vmem:[%s934 + $0x5c8] sm:$0xff]
        %v1182 = vld [vmem:[%s934 + $0x5d0] sm:$0xff]
        %v1183 = vld [vmem:[%s934 + $0x5d8] sm:$0xff]
        %v1184 = vld [vmem:[%s934 + $0x5e0] sm:$0xff]
        %v1185 = vld [vmem:[%s934 + $0x5e8] sm:$0xff]
        %v1186 = vld [vmem:[%s934 + $0x5f0] sm:$0xff]
        %v1187 = vld [vmem:[%s934 + $0x5f8] sm:$0xff]
        %v1188 = vmul.f32 %v996, %v964
        %v1189 = vmul.f32 %v997, %v965
        %v1190 = vmul.f32 %v998, %v966
        %v1191 = vmul.f32 %v999, %v967
        %v1192 = vmul.f32 %v1000, %v968
        %v1193 = vmul.f32 %v1001, %v969
        %v1194 = vmul.f32 %v1002, %v970
        %v1195 = vmul.f32 %v1003, %v971
        %v1196 = vmul.f32 %v1004, %v972
        %v1197 = vmul.f32 %v1005, %v973
        %v1198 = vmul.f32 %v1006, %v974
        %v1199 = vmul.f32 %v1007, %v975
        %v1200 = vmul.f32 %v1008, %v976
        %v1201 = vmul.f32 %v1009, %v977
        %v1202 = vmul.f32 %v1010, %v978
        %v1203 = vmul.f32 %v1011, %v979
        %v1204 = vmul.f32 %v1012, %v980
        %v1205 = vmul.f32 %v1013, %v981
        %v1206 = vmul.f32 %v1014, %v982
        %v1207 = vmul.f32 %v1015, %v983
        %v1208 = vmul.f32 %v1016, %v984
        %v1209 = vmul.f32 %v1017, %v985
        %v1210 = vmul.f32 %v1018, %v986
        %v1211 = vmul.f32 %v1019, %v987
        %v1212 = vmul.f32 %v1020, %v988
        %v1213 = vmul.f32 %v1021, %v989
        %v1214 = vmul.f32 %v1022, %v990
        %v1215 = vmul.f32 %v1023, %v991
        %v1216 = vmul.f32 %v1024, %v992
        %v1217 = vmul.f32 %v1025, %v993
        %v1218 = vmul.f32 %v1026, %v994
        %v1219 = vmul.f32 %v1027, %v995
        %v1220 = vmul.f32 %v1028, %v964
        %v1221 = vmul.f32 %v1029, %v965
        %v1222 = vmul.f32 %v1030, %v966
        %v1223 = vmul.f32 %v1031, %v967
        %v1224 = vmul.f32 %v1032, %v968
        %v1225 = vmul.f32 %v1033, %v969
        %v1226 = vmul.f32 %v1034, %v970
        %v1227 = vmul.f32 %v1035, %v971
        %v1228 = vmul.f32 %v1036, %v972
        %v1229 = vmul.f32 %v1037, %v973
        %v1230 = vmul.f32 %v1038, %v974
        %v1231 = vmul.f32 %v1039, %v975
        %v1232 = vmul.f32 %v1040, %v976
        %v1233 = vmul.f32 %v1041, %v977
        %v1234 = vmul.f32 %v1042, %v978
        %v1235 = vmul.f32 %v1043, %v979
        %v1236 = vmul.f32 %v1044, %v980
        %v1237 = vmul.f32 %v1045, %v981
        %v1238 = vmul.f32 %v1046, %v982
        %v1239 = vmul.f32 %v1047, %v983
        %v1240 = vmul.f32 %v1048, %v984
        %v1241 = vmul.f32 %v1049, %v985
        %v1242 = vmul.f32 %v1050, %v986
        %v1243 = vmul.f32 %v1051, %v987
        %v1244 = vmul.f32 %v1052, %v988
        %v1245 = vmul.f32 %v1053, %v989
        %v1246 = vmul.f32 %v1054, %v990
        %v1247 = vmul.f32 %v1055, %v991
        %v1248 = vmul.f32 %v1056, %v992
        %v1249 = vmul.f32 %v1057, %v993
        %v1250 = vmul.f32 %v1058, %v994
        %v1251 = vmul.f32 %v1059, %v995
        %v1252 = vmul.f32 %v1060, %v964
        %v1253 = vmul.f32 %v1061, %v965
        %v1254 = vmul.f32 %v1062, %v966
        %v1255 = vmul.f32 %v1063, %v967
        %v1256 = vmul.f32 %v1064, %v968
        %v1257 = vmul.f32 %v1065, %v969
        %v1258 = vmul.f32 %v1066, %v970
        %v1259 = vmul.f32 %v1067, %v971
        %v1260 = vmul.f32 %v1068, %v972
        %v1261 = vmul.f32 %v1069, %v973
        %v1262 = vmul.f32 %v1070, %v974
        %v1263 = vmul.f32 %v1071, %v975
        %v1264 = vmul.f32 %v1072, %v976
        %v1265 = vmul.f32 %v1073, %v977
        %v1266 = vmul.f32 %v1074, %v978
        %v1267 = vmul.f32 %v1075, %v979
        %v1268 = vmul.f32 %v1076, %v980
        %v1269 = vmul.f32 %v1077, %v981
        %v1270 = vmul.f32 %v1078, %v982
        %v1271 = vmul.f32 %v1079, %v983
        %v1272 = vmul.f32 %v1080, %v984
        %v1273 = vmul.f32 %v1081, %v985
        %v1274 = vmul.f32 %v1082, %v986
        %v1275 = vmul.f32 %v1083, %v987
        %v1276 = vmul.f32 %v1084, %v988
        %v1277 = vmul.f32 %v1085, %v989
        %v1278 = vmul.f32 %v1086, %v990
        %v1279 = vmul.f32 %v1087, %v991
        %v1280 = vmul.f32 %v1088, %v992
        %v1281 = vmul.f32 %v1089, %v993
        %v1282 = vmul.f32 %v1090, %v994
        %v1283 = vmul.f32 %v1091, %v995
        %v1284 = vmul.f32 %v1092, %v964
        %v1285 = vmul.f32 %v1093, %v965
        %v1286 = vmul.f32 %v1094, %v966
        %v1287 = vmul.f32 %v1095, %v967
        %v1288 = vmul.f32 %v1096, %v968
        %v1289 = vmul.f32 %v1097, %v969
        %v1290 = vmul.f32 %v1098, %v970
        %v1291 = vmul.f32 %v1099, %v971
        %v1292 = vmul.f32 %v1100, %v972
        %v1293 = vmul.f32 %v1101, %v973
        %v1294 = vmul.f32 %v1102, %v974
        %v1295 = vmul.f32 %v1103, %v975
        %v1296 = vmul.f32 %v1104, %v976
        %v1297 = vmul.f32 %v1105, %v977
        %v1298 = vmul.f32 %v1106, %v978
        %v1299 = vmul.f32 %v1107, %v979
        %v1300 = vmul.f32 %v1108, %v980
        %v1301 = vmul.f32 %v1109, %v981
        %v1302 = vmul.f32 %v1110, %v982
        %v1303 = vmul.f32 %v1111, %v983
        %v1304 = vmul.f32 %v1112, %v984
        %v1305 = vmul.f32 %v1113, %v985
        %v1306 = vmul.f32 %v1114, %v986
        %v1307 = vmul.f32 %v1115, %v987
        %v1308 = vmul.f32 %v1116, %v988
        %v1309 = vmul.f32 %v1117, %v989
        %v1310 = vmul.f32 %v1118, %v990
        %v1311 = vmul.f32 %v1119, %v991
        %v1312 = vmul.f32 %v1120, %v992
        %v1313 = vmul.f32 %v1121, %v993
        %v1314 = vmul.f32 %v1122, %v994
        %v1315 = vmul.f32 %v1123, %v995
        %v1316 = vmul.f32 %v1124, %v964
        %v1317 = vmul.f32 %v1125, %v965
        %v1318 = vmul.f32 %v1126, %v966
        %v1319 = vmul.f32 %v1127, %v967
        %v1320 = vmul.f32 %v1128, %v968
        %v1321 = vmul.f32 %v1129, %v969
        %v1322 = vmul.f32 %v1130, %v970
        %v1323 = vmul.f32 %v1131, %v971
        %v1324 = vmul.f32 %v1132, %v972
        %v1325 = vmul.f32 %v1133, %v973
        %v1326 = vmul.f32 %v1134, %v974
        %v1327 = vmul.f32 %v1135, %v975
        %v1328 = vmul.f32 %v1136, %v976
        %v1329 = vmul.f32 %v1137, %v977
        %v1330 = vmul.f32 %v1138, %v978
        %v1331 = vmul.f32 %v1139, %v979
        %v1332 = vmul.f32 %v1140, %v980
        %v1333 = vmul.f32 %v1141, %v981
        %v1334 = vmul.f32 %v1142, %v982
        %v1335 = vmul.f32 %v1143, %v983
        %v1336 = vmul.f32 %v1144, %v984
        %v1337 = vmul.f32 %v1145, %v985
        %v1338 = vmul.f32 %v1146, %v986
        %v1339 = vmul.f32 %v1147, %v987
        %v1340 = vmul.f32 %v1148, %v988
        %v1341 = vmul.f32 %v1149, %v989
        %v1342 = vmul.f32 %v1150, %v990
        %v1343 = vmul.f32 %v1151, %v991
        %v1344 = vmul.f32 %v1152, %v992
        %v1345 = vmul.f32 %v1153, %v993
        %v1346 = vmul.f32 %v1154, %v994
        %v1347 = vmul.f32 %v1155, %v995
        %v1348 = vmul.f32 %v1156, %v964
        %v1349 = vmul.f32 %v1157, %v965
        %v1350 = vmul.f32 %v1158, %v966
        %v1351 = vmul.f32 %v1159, %v967
        %v1352 = vmul.f32 %v1160, %v968
        %v1353 = vmul.f32 %v1161, %v969
        %v1354 = vmul.f32 %v1162, %v970
        %v1355 = vmul.f32 %v1163, %v971
        %v1356 = vmul.f32 %v1164, %v972
        %v1357 = vmul.f32 %v1165, %v973
        %v1358 = vmul.f32 %v1166, %v974
        %v1359 = vmul.f32 %v1167, %v975
        %v1360 = vmul.f32 %v1168, %v976
        %v1361 = vmul.f32 %v1169, %v977
        %v1362 = vmul.f32 %v1170, %v978
        %v1363 = vmul.f32 %v1171, %v979
        %v1364 = vmul.f32 %v1172, %v980
        %v1365 = vmul.f32 %v1173, %v981
        %v1366 = vmul.f32 %v1174, %v982
        %v1367 = vmul.f32 %v1175, %v983
        %v1368 = vmul.f32 %v1176, %v984
        %v1369 = vmul.f32 %v1177, %v985
        %v1370 = vmul.f32 %v1178, %v986
        %v1371 = vmul.f32 %v1179, %v987
        %v1372 = vmul.f32 %v1180, %v988
        %v1373 = vmul.f32 %v1181, %v989
        %v1374 = vmul.f32 %v1182, %v990
        %v1375 = vmul.f32 %v1183, %v991
        %v1376 = vmul.f32 %v1184, %v992
        %v1377 = vmul.f32 %v1185, %v993
        %v1378 = vmul.f32 %v1186, %v994
        %v1379 = vmul.f32 %v1187, %v995
        %vm1380 = vcmask 261120
        %v1381 = vsel %vm1380, %v1188, 0.0
        %1382 = vadd.xlane.f32.xlu0 %v1381
        %v1383 = vpop.xlane.xlu0 %1382
        %v1384 = vsel %vm1380, %v1189, 0.0
        %1385 = vadd.xlane.f32.xlu0 %v1384
        %v1386 = vpop.xlane.xlu0 %1385
        %v1387 = vsel %vm1380, %v1190, 0.0
        %1388 = vadd.xlane.f32.xlu0 %v1387
        %v1389 = vpop.xlane.xlu0 %1388
        %v1390 = vsel %vm1380, %v1191, 0.0
        %1391 = vadd.xlane.f32.xlu0 %v1390
        %v1392 = vpop.xlane.xlu0 %1391
        %v1393 = vsel %vm1380, %v1192, 0.0
        %1394 = vadd.xlane.f32.xlu0 %v1393
        %v1395 = vpop.xlane.xlu0 %1394
        %v1396 = vsel %vm1380, %v1193, 0.0
        %1397 = vadd.xlane.f32.xlu0 %v1396
        %v1398 = vpop.xlane.xlu0 %1397
        %v1399 = vsel %vm1380, %v1194, 0.0
        %1400 = vadd.xlane.f32.xlu0 %v1399
        %v1401 = vpop.xlane.xlu0 %1400
        %v1402 = vsel %vm1380, %v1195, 0.0
        %1403 = vadd.xlane.f32.xlu0 %v1402
        %v1404 = vpop.xlane.xlu0 %1403
        %v1405 = vsel %vm1380, %v1196, 0.0
        %1406 = vadd.xlane.f32.xlu0 %v1405
        %v1407 = vpop.xlane.xlu0 %1406
        %v1408 = vsel %vm1380, %v1197, 0.0
        %1409 = vadd.xlane.f32.xlu0 %v1408
        %v1410 = vpop.xlane.xlu0 %1409
        %v1411 = vsel %vm1380, %v1198, 0.0
        %1412 = vadd.xlane.f32.xlu0 %v1411
        %v1413 = vpop.xlane.xlu0 %1412
        %v1414 = vsel %vm1380, %v1199, 0.0
        %1415 = vadd.xlane.f32.xlu0 %v1414
        %v1416 = vpop.xlane.xlu0 %1415
        %v1417 = vsel %vm1380, %v1200, 0.0
        %1418 = vadd.xlane.f32.xlu0 %v1417
        %v1419 = vpop.xlane.xlu0 %1418
        %v1420 = vsel %vm1380, %v1201, 0.0
        %1421 = vadd.xlane.f32.xlu0 %v1420
        %v1422 = vpop.xlane.xlu0 %1421
        %v1423 = vsel %vm1380, %v1202, 0.0
        %1424 = vadd.xlane.f32.xlu0 %v1423
        %v1425 = vpop.xlane.xlu0 %1424
        %v1426 = vsel %vm1380, %v1203, 0.0
        %1427 = vadd.xlane.f32.xlu0 %v1426
        %v1428 = vpop.xlane.xlu0 %1427
        %v1429 = vsel %vm1380, %v1204, 0.0
        %1430 = vadd.xlane.f32.xlu0 %v1429
        %v1431 = vpop.xlane.xlu0 %1430
        %v1432 = vsel %vm1380, %v1205, 0.0
        %1433 = vadd.xlane.f32.xlu0 %v1432
        %v1434 = vpop.xlane.xlu0 %1433
        %v1435 = vsel %vm1380, %v1206, 0.0
        %1436 = vadd.xlane.f32.xlu0 %v1435
        %v1437 = vpop.xlane.xlu0 %1436
        %v1438 = vsel %vm1380, %v1207, 0.0
        %1439 = vadd.xlane.f32.xlu0 %v1438
        %v1440 = vpop.xlane.xlu0 %1439
        %v1441 = vsel %vm1380, %v1208, 0.0
        %1442 = vadd.xlane.f32.xlu0 %v1441
        %v1443 = vpop.xlane.xlu0 %1442
        %v1444 = vsel %vm1380, %v1209, 0.0
        %1445 = vadd.xlane.f32.xlu0 %v1444
        %v1446 = vpop.xlane.xlu0 %1445
        %v1447 = vsel %vm1380, %v1210, 0.0
        %1448 = vadd.xlane.f32.xlu0 %v1447
        %v1449 = vpop.xlane.xlu0 %1448
        %v1450 = vsel %vm1380, %v1211, 0.0
        %1451 = vadd.xlane.f32.xlu0 %v1450
        %v1452 = vpop.xlane.xlu0 %1451
        %v1453 = vsel %vm1380, %v1212, 0.0
        %1454 = vadd.xlane.f32.xlu0 %v1453
        %v1455 = vpop.xlane.xlu0 %1454
        %v1456 = vsel %vm1380, %v1213, 0.0
        %1457 = vadd.xlane.f32.xlu0 %v1456
        %v1458 = vpop.xlane.xlu0 %1457
        %v1459 = vsel %vm1380, %v1214, 0.0
        %1460 = vadd.xlane.f32.xlu0 %v1459
        %v1461 = vpop.xlane.xlu0 %1460
        %v1462 = vsel %vm1380, %v1215, 0.0
        %1463 = vadd.xlane.f32.xlu0 %v1462
        %v1464 = vpop.xlane.xlu0 %1463
        %v1465 = vsel %vm1380, %v1216, 0.0
        %1466 = vadd.xlane.f32.xlu0 %v1465
        %v1467 = vpop.xlane.xlu0 %1466
        %v1468 = vsel %vm1380, %v1217, 0.0
        %1469 = vadd.xlane.f32.xlu0 %v1468
        %v1470 = vpop.xlane.xlu0 %1469
        %v1471 = vsel %vm1380, %v1218, 0.0
        %1472 = vadd.xlane.f32.xlu0 %v1471
        %v1473 = vpop.xlane.xlu0 %1472
        %v1474 = vsel %vm1380, %v1219, 0.0
        %1475 = vadd.xlane.f32.xlu0 %v1474
        %v1476 = vpop.xlane.xlu0 %1475
        %v1477 = vsel %vm1380, %v1220, 0.0
        %1478 = vadd.xlane.f32.xlu0 %v1477
        %v1479 = vpop.xlane.xlu0 %1478
        %v1480 = vsel %vm1380, %v1221, 0.0
        %1481 = vadd.xlane.f32.xlu0 %v1480
        %v1482 = vpop.xlane.xlu0 %1481
        %v1483 = vsel %vm1380, %v1222, 0.0
        %1484 = vadd.xlane.f32.xlu0 %v1483
        %v1485 = vpop.xlane.xlu0 %1484
        %v1486 = vsel %vm1380, %v1223, 0.0
        %1487 = vadd.xlane.f32.xlu0 %v1486
        %v1488 = vpop.xlane.xlu0 %1487
        %v1489 = vsel %vm1380, %v1224, 0.0
        %1490 = vadd.xlane.f32.xlu0 %v1489
        %v1491 = vpop.xlane.xlu0 %1490
        %v1492 = vsel %vm1380, %v1225, 0.0
        %1493 = vadd.xlane.f32.xlu0 %v1492
        %v1494 = vpop.xlane.xlu0 %1493
        %v1495 = vsel %vm1380, %v1226, 0.0
        %1496 = vadd.xlane.f32.xlu0 %v1495
        %v1497 = vpop.xlane.xlu0 %1496
        %v1498 = vsel %vm1380, %v1227, 0.0
        %1499 = vadd.xlane.f32.xlu0 %v1498
        %v1500 = vpop.xlane.xlu0 %1499
        %v1501 = vsel %vm1380, %v1228, 0.0
        %1502 = vadd.xlane.f32.xlu0 %v1501
        %v1503 = vpop.xlane.xlu0 %1502
        %v1504 = vsel %vm1380, %v1229, 0.0
        %1505 = vadd.xlane.f32.xlu0 %v1504
        %v1506 = vpop.xlane.xlu0 %1505
        %v1507 = vsel %vm1380, %v1230, 0.0
        %1508 = vadd.xlane.f32.xlu0 %v1507
        %v1509 = vpop.xlane.xlu0 %1508
        %v1510 = vsel %vm1380, %v1231, 0.0
        %1511 = vadd.xlane.f32.xlu0 %v1510
        %v1512 = vpop.xlane.xlu0 %1511
        %v1513 = vsel %vm1380, %v1232, 0.0
        %1514 = vadd.xlane.f32.xlu0 %v1513
        %v1515 = vpop.xlane.xlu0 %1514
        %v1516 = vsel %vm1380, %v1233, 0.0
        %1517 = vadd.xlane.f32.xlu0 %v1516
        %v1518 = vpop.xlane.xlu0 %1517
        %v1519 = vsel %vm1380, %v1234, 0.0
        %1520 = vadd.xlane.f32.xlu0 %v1519
        %v1521 = vpop.xlane.xlu0 %1520
        %v1522 = vsel %vm1380, %v1235, 0.0
        %1523 = vadd.xlane.f32.xlu0 %v1522
        %v1524 = vpop.xlane.xlu0 %1523
        %v1525 = vsel %vm1380, %v1236, 0.0
        %1526 = vadd.xlane.f32.xlu0 %v1525
        %v1527 = vpop.xlane.xlu0 %1526
        %v1528 = vsel %vm1380, %v1237, 0.0
        %1529 = vadd.xlane.f32.xlu0 %v1528
        %v1530 = vpop.xlane.xlu0 %1529
        %v1531 = vsel %vm1380, %v1238, 0.0
        %1532 = vadd.xlane.f32.xlu0 %v1531
        %v1533 = vpop.xlane.xlu0 %1532
        %v1534 = vsel %vm1380, %v1239, 0.0
        %1535 = vadd.xlane.f32.xlu0 %v1534
        %v1536 = vpop.xlane.xlu0 %1535
        %v1537 = vsel %vm1380, %v1240, 0.0
        %1538 = vadd.xlane.f32.xlu0 %v1537
        %v1539 = vpop.xlane.xlu0 %1538
        %v1540 = vsel %vm1380, %v1241, 0.0
        %1541 = vadd.xlane.f32.xlu0 %v1540
        %v1542 = vpop.xlane.xlu0 %1541
        %v1543 = vsel %vm1380, %v1242, 0.0
        %1544 = vadd.xlane.f32.xlu0 %v1543
        %v1545 = vpop.xlane.xlu0 %1544
        %v1546 = vsel %vm1380, %v1243, 0.0
        %1547 = vadd.xlane.f32.xlu0 %v1546
        %v1548 = vpop.xlane.xlu0 %1547
        %v1549 = vsel %vm1380, %v1244, 0.0
        %1550 = vadd.xlane.f32.xlu0 %v1549
        %v1551 = vpop.xlane.xlu0 %1550
        %v1552 = vsel %vm1380, %v1245, 0.0
        %1553 = vadd.xlane.f32.xlu0 %v1552
        %v1554 = vpop.xlane.xlu0 %1553
        %v1555 = vsel %vm1380, %v1246, 0.0
        %1556 = vadd.xlane.f32.xlu0 %v1555
        %v1557 = vpop.xlane.xlu0 %1556
        %v1558 = vsel %vm1380, %v1247, 0.0
        %1559 = vadd.xlane.f32.xlu0 %v1558
        %v1560 = vpop.xlane.xlu0 %1559
        %v1561 = vsel %vm1380, %v1248, 0.0
        %1562 = vadd.xlane.f32.xlu0 %v1561
        %v1563 = vpop.xlane.xlu0 %1562
        %v1564 = vsel %vm1380, %v1249, 0.0
        %1565 = vadd.xlane.f32.xlu0 %v1564
        %v1566 = vpop.xlane.xlu0 %1565
        %v1567 = vsel %vm1380, %v1250, 0.0
        %1568 = vadd.xlane.f32.xlu0 %v1567
        %v1569 = vpop.xlane.xlu0 %1568
        %v1570 = vsel %vm1380, %v1251, 0.0
        %1571 = vadd.xlane.f32.xlu0 %v1570
        %v1572 = vpop.xlane.xlu0 %1571
        %v1573 = vsel %vm1380, %v1252, 0.0
        %1574 = vadd.xlane.f32.xlu0 %v1573
        %v1575 = vpop.xlane.xlu0 %1574
        %v1576 = vsel %vm1380, %v1253, 0.0
        %1577 = vadd.xlane.f32.xlu0 %v1576
        %v1578 = vpop.xlane.xlu0 %1577
        %v1579 = vsel %vm1380, %v1254, 0.0
        %1580 = vadd.xlane.f32.xlu0 %v1579
        %v1581 = vpop.xlane.xlu0 %1580
        %v1582 = vsel %vm1380, %v1255, 0.0
        %1583 = vadd.xlane.f32.xlu0 %v1582
        %v1584 = vpop.xlane.xlu0 %1583
        %v1585 = vsel %vm1380, %v1256, 0.0
        %1586 = vadd.xlane.f32.xlu0 %v1585
        %v1587 = vpop.xlane.xlu0 %1586
        %v1588 = vsel %vm1380, %v1257, 0.0
        %1589 = vadd.xlane.f32.xlu0 %v1588
        %v1590 = vpop.xlane.xlu0 %1589
        %v1591 = vsel %vm1380, %v1258, 0.0
        %1592 = vadd.xlane.f32.xlu0 %v1591
        %v1593 = vpop.xlane.xlu0 %1592
        %v1594 = vsel %vm1380, %v1259, 0.0
        %1595 = vadd.xlane.f32.xlu0 %v1594
        %v1596 = vpop.xlane.xlu0 %1595
        %v1597 = vsel %vm1380, %v1260, 0.0
        %1598 = vadd.xlane.f32.xlu0 %v1597
        %v1599 = vpop.xlane.xlu0 %1598
        %v1600 = vsel %vm1380, %v1261, 0.0
        %1601 = vadd.xlane.f32.xlu0 %v1600
        %v1602 = vpop.xlane.xlu0 %1601
        %v1603 = vsel %vm1380, %v1262, 0.0
        %1604 = vadd.xlane.f32.xlu0 %v1603
        %v1605 = vpop.xlane.xlu0 %1604
        %v1606 = vsel %vm1380, %v1263, 0.0
        %1607 = vadd.xlane.f32.xlu0 %v1606
        %v1608 = vpop.xlane.xlu0 %1607
        %v1609 = vsel %vm1380, %v1264, 0.0
        %1610 = vadd.xlane.f32.xlu0 %v1609
        %v1611 = vpop.xlane.xlu0 %1610
        %v1612 = vsel %vm1380, %v1265, 0.0
        %1613 = vadd.xlane.f32.xlu0 %v1612
        %v1614 = vpop.xlane.xlu0 %1613
        %v1615 = vsel %vm1380, %v1266, 0.0
        %1616 = vadd.xlane.f32.xlu0 %v1615
        %v1617 = vpop.xlane.xlu0 %1616
        %v1618 = vsel %vm1380, %v1267, 0.0
        %1619 = vadd.xlane.f32.xlu0 %v1618
        %v1620 = vpop.xlane.xlu0 %1619
        %v1621 = vsel %vm1380, %v1268, 0.0
        %1622 = vadd.xlane.f32.xlu0 %v1621
        %v1623 = vpop.xlane.xlu0 %1622
        %v1624 = vsel %vm1380, %v1269, 0.0
        %1625 = vadd.xlane.f32.xlu0 %v1624
        %v1626 = vpop.xlane.xlu0 %1625
        %v1627 = vsel %vm1380, %v1270, 0.0
        %1628 = vadd.xlane.f32.xlu0 %v1627
        %v1629 = vpop.xlane.xlu0 %1628
        %v1630 = vsel %vm1380, %v1271, 0.0
        %1631 = vadd.xlane.f32.xlu0 %v1630
        %v1632 = vpop.xlane.xlu0 %1631
        %v1633 = vsel %vm1380, %v1272, 0.0
        %1634 = vadd.xlane.f32.xlu0 %v1633
        %v1635 = vpop.xlane.xlu0 %1634
        %v1636 = vsel %vm1380, %v1273, 0.0
        %1637 = vadd.xlane.f32.xlu0 %v1636
        %v1638 = vpop.xlane.xlu0 %1637
        %v1639 = vsel %vm1380, %v1274, 0.0
        %1640 = vadd.xlane.f32.xlu0 %v1639
        %v1641 = vpop.xlane.xlu0 %1640
        %v1642 = vsel %vm1380, %v1275, 0.0
        %1643 = vadd.xlane.f32.xlu0 %v1642
        %v1644 = vpop.xlane.xlu0 %1643
        %v1645 = vsel %vm1380, %v1276, 0.0
        %1646 = vadd.xlane.f32.xlu0 %v1645
        %v1647 = vpop.xlane.xlu0 %1646
        %v1648 = vsel %vm1380, %v1277, 0.0
        %1649 = vadd.xlane.f32.xlu0 %v1648
        %v1650 = vpop.xlane.xlu0 %1649
        %v1651 = vsel %vm1380, %v1278, 0.0
        %1652 = vadd.xlane.f32.xlu0 %v1651
        %v1653 = vpop.xlane.xlu0 %1652
        %v1654 = vsel %vm1380, %v1279, 0.0
        %1655 = vadd.xlane.f32.xlu0 %v1654
        %v1656 = vpop.xlane.xlu0 %1655
        %v1657 = vsel %vm1380, %v1280, 0.0
        %1658 = vadd.xlane.f32.xlu0 %v1657
        %v1659 = vpop.xlane.xlu0 %1658
        %v1660 = vsel %vm1380, %v1281, 0.0
        %1661 = vadd.xlane.f32.xlu0 %v1660
        %v1662 = vpop.xlane.xlu0 %1661
        %v1663 = vsel %vm1380, %v1282, 0.0
        %1664 = vadd.xlane.f32.xlu0 %v1663
        %v1665 = vpop.xlane.xlu0 %1664
        %v1666 = vsel %vm1380, %v1283, 0.0
        %1667 = vadd.xlane.f32.xlu0 %v1666
        %v1668 = vpop.xlane.xlu0 %1667
        %v1669 = vsel %vm1380, %v1284, 0.0
        %1670 = vadd.xlane.f32.xlu0 %v1669
        %v1671 = vpop.xlane.xlu0 %1670
        %v1672 = vsel %vm1380, %v1285, 0.0
        %1673 = vadd.xlane.f32.xlu0 %v1672
        %v1674 = vpop.xlane.xlu0 %1673
        %v1675 = vsel %vm1380, %v1286, 0.0
        %1676 = vadd.xlane.f32.xlu0 %v1675
        %v1677 = vpop.xlane.xlu0 %1676
        %v1678 = vsel %vm1380, %v1287, 0.0
        %1679 = vadd.xlane.f32.xlu0 %v1678
        %v1680 = vpop.xlane.xlu0 %1679
        %v1681 = vsel %vm1380, %v1288, 0.0
        %1682 = vadd.xlane.f32.xlu0 %v1681
        %v1683 = vpop.xlane.xlu0 %1682
        %v1684 = vsel %vm1380, %v1289, 0.0
        %1685 = vadd.xlane.f32.xlu0 %v1684
        %v1686 = vpop.xlane.xlu0 %1685
        %v1687 = vsel %vm1380, %v1290, 0.0
        %1688 = vadd.xlane.f32.xlu0 %v1687
        %v1689 = vpop.xlane.xlu0 %1688
        %v1690 = vsel %vm1380, %v1291, 0.0
        %1691 = vadd.xlane.f32.xlu0 %v1690
        %v1692 = vpop.xlane.xlu0 %1691
        %v1693 = vsel %vm1380, %v1292, 0.0
        %1694 = vadd.xlane.f32.xlu0 %v1693
        %v1695 = vpop.xlane.xlu0 %1694
        %v1696 = vsel %vm1380, %v1293, 0.0
        %1697 = vadd.xlane.f32.xlu0 %v1696
        %v1698 = vpop.xlane.xlu0 %1697
        %v1699 = vsel %vm1380, %v1294, 0.0
        %1700 = vadd.xlane.f32.xlu0 %v1699
        %v1701 = vpop.xlane.xlu0 %1700
        %v1702 = vsel %vm1380, %v1295, 0.0
        %1703 = vadd.xlane.f32.xlu0 %v1702
        %v1704 = vpop.xlane.xlu0 %1703
        %v1705 = vsel %vm1380, %v1296, 0.0
        %1706 = vadd.xlane.f32.xlu0 %v1705
        %v1707 = vpop.xlane.xlu0 %1706
        %v1708 = vsel %vm1380, %v1297, 0.0
        %1709 = vadd.xlane.f32.xlu0 %v1708
        %v1710 = vpop.xlane.xlu0 %1709
        %v1711 = vsel %vm1380, %v1298, 0.0
        %1712 = vadd.xlane.f32.xlu0 %v1711
        %v1713 = vpop.xlane.xlu0 %1712
        %v1714 = vsel %vm1380, %v1299, 0.0
        %1715 = vadd.xlane.f32.xlu0 %v1714
        %v1716 = vpop.xlane.xlu0 %1715
        %v1717 = vsel %vm1380, %v1300, 0.0
        %1718 = vadd.xlane.f32.xlu0 %v1717
        %v1719 = vpop.xlane.xlu0 %1718
        %v1720 = vsel %vm1380, %v1301, 0.0
        %1721 = vadd.xlane.f32.xlu0 %v1720
        %v1722 = vpop.xlane.xlu0 %1721
        %v1723 = vsel %vm1380, %v1302, 0.0
        %1724 = vadd.xlane.f32.xlu0 %v1723
        %v1725 = vpop.xlane.xlu0 %1724
        %v1726 = vsel %vm1380, %v1303, 0.0
        %1727 = vadd.xlane.f32.xlu0 %v1726
        %v1728 = vpop.xlane.xlu0 %1727
        %v1729 = vsel %vm1380, %v1304, 0.0
        %1730 = vadd.xlane.f32.xlu0 %v1729
        %v1731 = vpop.xlane.xlu0 %1730
        %v1732 = vsel %vm1380, %v1305, 0.0
        %1733 = vadd.xlane.f32.xlu0 %v1732
        %v1734 = vpop.xlane.xlu0 %1733
        %v1735 = vsel %vm1380, %v1306, 0.0
        %1736 = vadd.xlane.f32.xlu0 %v1735
        %v1737 = vpop.xlane.xlu0 %1736
        %v1738 = vsel %vm1380, %v1307, 0.0
        %1739 = vadd.xlane.f32.xlu0 %v1738
        %v1740 = vpop.xlane.xlu0 %1739
        %v1741 = vsel %vm1380, %v1308, 0.0
        %1742 = vadd.xlane.f32.xlu0 %v1741
        %v1743 = vpop.xlane.xlu0 %1742
        %v1744 = vsel %vm1380, %v1309, 0.0
        %1745 = vadd.xlane.f32.xlu0 %v1744
        %v1746 = vpop.xlane.xlu0 %1745
        %v1747 = vsel %vm1380, %v1310, 0.0
        %1748 = vadd.xlane.f32.xlu0 %v1747
        %v1749 = vpop.xlane.xlu0 %1748
        %v1750 = vsel %vm1380, %v1311, 0.0
        %1751 = vadd.xlane.f32.xlu0 %v1750
        %v1752 = vpop.xlane.xlu0 %1751
        %v1753 = vsel %vm1380, %v1312, 0.0
        %1754 = vadd.xlane.f32.xlu0 %v1753
        %v1755 = vpop.xlane.xlu0 %1754
        %v1756 = vsel %vm1380, %v1313, 0.0
        %1757 = vadd.xlane.f32.xlu0 %v1756
        %v1758 = vpop.xlane.xlu0 %1757
        %v1759 = vsel %vm1380, %v1314, 0.0
        %1760 = vadd.xlane.f32.xlu0 %v1759
        %v1761 = vpop.xlane.xlu0 %1760
        %v1762 = vsel %vm1380, %v1315, 0.0
        %1763 = vadd.xlane.f32.xlu0 %v1762
        %v1764 = vpop.xlane.xlu0 %1763
        %v1765 = vsel %vm1380, %v1316, 0.0
        %1766 = vadd.xlane.f32.xlu0 %v1765
        %v1767 = vpop.xlane.xlu0 %1766
        %v1768 = vsel %vm1380, %v1317, 0.0
        %1769 = vadd.xlane.f32.xlu0 %v1768
        %v1770 = vpop.xlane.xlu0 %1769
        %v1771 = vsel %vm1380, %v1318, 0.0
        %1772 = vadd.xlane.f32.xlu0 %v1771
        %v1773 = vpop.xlane.xlu0 %1772
        %v1774 = vsel %vm1380, %v1319, 0.0
        %1775 = vadd.xlane.f32.xlu0 %v1774
        %v1776 = vpop.xlane.xlu0 %1775
        %v1777 = vsel %vm1380, %v1320, 0.0
        %1778 = vadd.xlane.f32.xlu0 %v1777
        %v1779 = vpop.xlane.xlu0 %1778
        %v1780 = vsel %vm1380, %v1321, 0.0
        %1781 = vadd.xlane.f32.xlu0 %v1780
        %v1782 = vpop.xlane.xlu0 %1781
        %v1783 = vsel %vm1380, %v1322, 0.0
        %1784 = vadd.xlane.f32.xlu0 %v1783
        %v1785 = vpop.xlane.xlu0 %1784
        %v1786 = vsel %vm1380, %v1323, 0.0
        %1787 = vadd.xlane.f32.xlu0 %v1786
        %v1788 = vpop.xlane.xlu0 %1787
        %v1789 = vsel %vm1380, %v1324, 0.0
        %1790 = vadd.xlane.f32.xlu0 %v1789
        %v1791 = vpop.xlane.xlu0 %1790
        %v1792 = vsel %vm1380, %v1325, 0.0
        %1793 = vadd.xlane.f32.xlu0 %v1792
        %v1794 = vpop.xlane.xlu0 %1793
        %v1795 = vsel %vm1380, %v1326, 0.0
        %1796 = vadd.xlane.f32.xlu0 %v1795
        %v1797 = vpop.xlane.xlu0 %1796
        %v1798 = vsel %vm1380, %v1327, 0.0
        %1799 = vadd.xlane.f32.xlu0 %v1798
        %v1800 = vpop.xlane.xlu0 %1799
        %v1801 = vsel %vm1380, %v1328, 0.0
        %1802 = vadd.xlane.f32.xlu0 %v1801
        %v1803 = vpop.xlane.xlu0 %1802
        %v1804 = vsel %vm1380, %v1329, 0.0
        %1805 = vadd.xlane.f32.xlu0 %v1804
        %v1806 = vpop.xlane.xlu0 %1805
        %v1807 = vsel %vm1380, %v1330, 0.0
        %1808 = vadd.xlane.f32.xlu0 %v1807
        %v1809 = vpop.xlane.xlu0 %1808
        %v1810 = vsel %vm1380, %v1331, 0.0
        %1811 = vadd.xlane.f32.xlu0 %v1810
        %v1812 = vpop.xlane.xlu0 %1811
        %v1813 = vsel %vm1380, %v1332, 0.0
        %1814 = vadd.xlane.f32.xlu0 %v1813
        %v1815 = vpop.xlane.xlu0 %1814
        %v1816 = vsel %vm1380, %v1333, 0.0
        %1817 = vadd.xlane.f32.xlu0 %v1816
        %v1818 = vpop.xlane.xlu0 %1817
        %v1819 = vsel %vm1380, %v1334, 0.0
        %1820 = vadd.xlane.f32.xlu0 %v1819
        %v1821 = vpop.xlane.xlu0 %1820
        %v1822 = vsel %vm1380, %v1335, 0.0
        %1823 = vadd.xlane.f32.xlu0 %v1822
        %v1824 = vpop.xlane.xlu0 %1823
        %v1825 = vsel %vm1380, %v1336, 0.0
        %1826 = vadd.xlane.f32.xlu0 %v1825
        %v1827 = vpop.xlane.xlu0 %1826
        %v1828 = vsel %vm1380, %v1337, 0.0
        %1829 = vadd.xlane.f32.xlu0 %v1828
        %v1830 = vpop.xlane.xlu0 %1829
        %v1831 = vsel %vm1380, %v1338, 0.0
        %1832 = vadd.xlane.f32.xlu0 %v1831
        %v1833 = vpop.xlane.xlu0 %1832
        %v1834 = vsel %vm1380, %v1339, 0.0
        %1835 = vadd.xlane.f32.xlu0 %v1834
        %v1836 = vpop.xlane.xlu0 %1835
        %v1837 = vsel %vm1380, %v1340, 0.0
        %1838 = vadd.xlane.f32.xlu0 %v1837
        %v1839 = vpop.xlane.xlu0 %1838
        %v1840 = vsel %vm1380, %v1341, 0.0
        %1841 = vadd.xlane.f32.xlu0 %v1840
        %v1842 = vpop.xlane.xlu0 %1841
        %v1843 = vsel %vm1380, %v1342, 0.0
        %1844 = vadd.xlane.f32.xlu0 %v1843
        %v1845 = vpop.xlane.xlu0 %1844
        %v1846 = vsel %vm1380, %v1343, 0.0
        %1847 = vadd.xlane.f32.xlu0 %v1846
        %v1848 = vpop.xlane.xlu0 %1847
        %v1849 = vsel %vm1380, %v1344, 0.0
        %1850 = vadd.xlane.f32.xlu0 %v1849
        %v1851 = vpop.xlane.xlu0 %1850
        %v1852 = vsel %vm1380, %v1345, 0.0
        %1853 = vadd.xlane.f32.xlu0 %v1852
        %v1854 = vpop.xlane.xlu0 %1853
        %v1855 = vsel %vm1380, %v1346, 0.0
        %1856 = vadd.xlane.f32.xlu0 %v1855
        %v1857 = vpop.xlane.xlu0 %1856
        %v1858 = vsel %vm1380, %v1347, 0.0
        %1859 = vadd.xlane.f32.xlu0 %v1858
        %v1860 = vpop.xlane.xlu0 %1859
        %v1861 = vsel %vm1380, %v1348, 0.0
        %1862 = vadd.xlane.f32.xlu0 %v1861
        %v1863 = vpop.xlane.xlu0 %1862
        %v1864 = vsel %vm1380, %v1349, 0.0
        %1865 = vadd.xlane.f32.xlu0 %v1864
        %v1866 = vpop.xlane.xlu0 %1865
        %v1867 = vsel %vm1380, %v1350, 0.0
        %1868 = vadd.xlane.f32.xlu0 %v1867
        %v1869 = vpop.xlane.xlu0 %1868
        %v1870 = vsel %vm1380, %v1351, 0.0
        %1871 = vadd.xlane.f32.xlu0 %v1870
        %v1872 = vpop.xlane.xlu0 %1871
        %v1873 = vsel %vm1380, %v1352, 0.0
        %1874 = vadd.xlane.f32.xlu0 %v1873
        %v1875 = vpop.xlane.xlu0 %1874
        %v1876 = vsel %vm1380, %v1353, 0.0
        %1877 = vadd.xlane.f32.xlu0 %v1876
        %v1878 = vpop.xlane.xlu0 %1877
        %v1879 = vsel %vm1380, %v1354, 0.0
        %1880 = vadd.xlane.f32.xlu0 %v1879
        %v1881 = vpop.xlane.xlu0 %1880
        %v1882 = vsel %vm1380, %v1355, 0.0
        %1883 = vadd.xlane.f32.xlu0 %v1882
        %v1884 = vpop.xlane.xlu0 %1883
        %v1885 = vsel %vm1380, %v1356, 0.0
        %1886 = vadd.xlane.f32.xlu0 %v1885
        %v1887 = vpop.xlane.xlu0 %1886
        %v1888 = vsel %vm1380, %v1357, 0.0
        %1889 = vadd.xlane.f32.xlu0 %v1888
        %v1890 = vpop.xlane.xlu0 %1889
        %v1891 = vsel %vm1380, %v1358, 0.0
        %1892 = vadd.xlane.f32.xlu0 %v1891
        %v1893 = vpop.xlane.xlu0 %1892
        %v1894 = vsel %vm1380, %v1359, 0.0
        %1895 = vadd.xlane.f32.xlu0 %v1894
        %v1896 = vpop.xlane.xlu0 %1895
        %v1897 = vsel %vm1380, %v1360, 0.0
        %1898 = vadd.xlane.f32.xlu0 %v1897
        %v1899 = vpop.xlane.xlu0 %1898
        %v1900 = vsel %vm1380, %v1361, 0.0
        %1901 = vadd.xlane.f32.xlu0 %v1900
        %v1902 = vpop.xlane.xlu0 %1901
        %v1903 = vsel %vm1380, %v1362, 0.0
        %1904 = vadd.xlane.f32.xlu0 %v1903
        %v1905 = vpop.xlane.xlu0 %1904
        %v1906 = vsel %vm1380, %v1363, 0.0
        %1907 = vadd.xlane.f32.xlu0 %v1906
        %v1908 = vpop.xlane.xlu0 %1907
        %v1909 = vsel %vm1380, %v1364, 0.0
        %1910 = vadd.xlane.f32.xlu0 %v1909
        %v1911 = vpop.xlane.xlu0 %1910
        %v1912 = vsel %vm1380, %v1365, 0.0
        %1913 = vadd.xlane.f32.xlu0 %v1912
        %v1914 = vpop.xlane.xlu0 %1913
        %v1915 = vsel %vm1380, %v1366, 0.0
        %1916 = vadd.xlane.f32.xlu0 %v1915
        %v1917 = vpop.xlane.xlu0 %1916
        %v1918 = vsel %vm1380, %v1367, 0.0
        %1919 = vadd.xlane.f32.xlu0 %v1918
        %v1920 = vpop.xlane.xlu0 %1919
        %v1921 = vsel %vm1380, %v1368, 0.0
        %1922 = vadd.xlane.f32.xlu0 %v1921
        %v1923 = vpop.xlane.xlu0 %1922
        %v1924 = vsel %vm1380, %v1369, 0.0
        %1925 = vadd.xlane.f32.xlu0 %v1924
        %v1926 = vpop.xlane.xlu0 %1925
        %v1927 = vsel %vm1380, %v1370, 0.0
        %1928 = vadd.xlane.f32.xlu0 %v1927
        %v1929 = vpop.xlane.xlu0 %1928
        %v1930 = vsel %vm1380, %v1371, 0.0
        %1931 = vadd.xlane.f32.xlu0 %v1930
        %v1932 = vpop.xlane.xlu0 %1931
        %v1933 = vsel %vm1380, %v1372, 0.0
        %1934 = vadd.xlane.f32.xlu0 %v1933
        %v1935 = vpop.xlane.xlu0 %1934
        %v1936 = vsel %vm1380, %v1373, 0.0
        %1937 = vadd.xlane.f32.xlu0 %v1936
        %v1938 = vpop.xlane.xlu0 %1937
        %v1939 = vsel %vm1380, %v1374, 0.0
        %1940 = vadd.xlane.f32.xlu0 %v1939
        %v1941 = vpop.xlane.xlu0 %1940
        %v1942 = vsel %vm1380, %v1375, 0.0
        %1943 = vadd.xlane.f32.xlu0 %v1942
        %v1944 = vpop.xlane.xlu0 %1943
        %v1945 = vsel %vm1380, %v1376, 0.0
        %1946 = vadd.xlane.f32.xlu0 %v1945
        %v1947 = vpop.xlane.xlu0 %1946
        %v1948 = vsel %vm1380, %v1377, 0.0
        %1949 = vadd.xlane.f32.xlu0 %v1948
        %v1950 = vpop.xlane.xlu0 %1949
        %v1951 = vsel %vm1380, %v1378, 0.0
        %1952 = vadd.xlane.f32.xlu0 %v1951
        %v1953 = vpop.xlane.xlu0 %1952
        %v1954 = vsel %vm1380, %v1379, 0.0
        %1955 = vadd.xlane.f32.xlu0 %v1954
        %v1956 = vpop.xlane.xlu0 %1955
        %v1957 = vlaneseq
        %v1958 = vshrl.u32 %v1957, 7
        %vm1959 = vcmp.eq.s32.totalorder %v1958, 0
        %v1960 = vsub.f32 0.0, %v1383
        %v1961 = vsub.f32 0.0, %v1386
        %v1962 = vsub.f32 0.0, %v1389
        %v1963 = vsub.f32 0.0, %v1392
        %v1964 = vsub.f32 0.0, %v1395
        %v1965 = vsub.f32 0.0, %v1398
        %v1966 = vsub.f32 0.0, %v1401
        %v1967 = vsub.f32 0.0, %v1404
        %v1968 = vsub.f32 0.0, %v1407
        %v1969 = vsub.f32 0.0, %v1410
        %v1970 = vsub.f32 0.0, %v1413
        %v1971 = vsub.f32 0.0, %v1416
        %v1972 = vsub.f32 0.0, %v1419
        %v1973 = vsub.f32 0.0, %v1422
        %v1974 = vsub.f32 0.0, %v1425
        %v1975 = vsub.f32 0.0, %v1428
        %v1976 = vsub.f32 0.0, %v1431
        %v1977 = vsub.f32 0.0, %v1434
        %v1978 = vsub.f32 0.0, %v1437
        %v1979 = vsub.f32 0.0, %v1440
        %v1980 = vsub.f32 0.0, %v1443
        %v1981 = vsub.f32 0.0, %v1446
        %v1982 = vsub.f32 0.0, %v1449
        %v1983 = vsub.f32 0.0, %v1452
        %v1984 = vsub.f32 0.0, %v1455
        %v1985 = vsub.f32 0.0, %v1458
        %v1986 = vsub.f32 0.0, %v1461
        %v1987 = vsub.f32 0.0, %v1464
        %v1988 = vsub.f32 0.0, %v1467
        %v1989 = vsub.f32 0.0, %v1470
        %v1990 = vsub.f32 0.0, %v1473
        %v1991 = vsub.f32 0.0, %v1476
        %v1992 = vsub.f32 0.0, %v1479
        %v1993 = vsub.f32 0.0, %v1482
        %v1994 = vsub.f32 0.0, %v1485
        %v1995 = vsub.f32 0.0, %v1488
        %v1996 = vsub.f32 0.0, %v1491
        %v1997 = vsub.f32 0.0, %v1494
        %v1998 = vsub.f32 0.0, %v1497
        %v1999 = vsub.f32 0.0, %v1500
        %v2000 = vsub.f32 0.0, %v1503
        %v2001 = vsub.f32 0.0, %v1506
        %v2002 = vsub.f32 0.0, %v1509
        %v2003 = vsub.f32 0.0, %v1512
        %v2004 = vsub.f32 0.0, %v1515
        %v2005 = vsub.f32 0.0, %v1518
        %v2006 = vsub.f32 0.0, %v1521
        %v2007 = vsub.f32 0.0, %v1524
        %v2008 = vsub.f32 0.0, %v1527
        %v2009 = vsub.f32 0.0, %v1530
        %v2010 = vsub.f32 0.0, %v1533
        %v2011 = vsub.f32 0.0, %v1536
        %v2012 = vsub.f32 0.0, %v1539
        %v2013 = vsub.f32 0.0, %v1542
        %v2014 = vsub.f32 0.0, %v1545
        %v2015 = vsub.f32 0.0, %v1548
        %v2016 = vsub.f32 0.0, %v1551
        %v2017 = vsub.f32 0.0, %v1554
        %v2018 = vsub.f32 0.0, %v1557
        %v2019 = vsub.f32 0.0, %v1560
        %v2020 = vsub.f32 0.0, %v1563
        %v2021 = vsub.f32 0.0, %v1566
        %v2022 = vsub.f32 0.0, %v1569
        %v2023 = vsub.f32 0.0, %v1572
        %v2024 = vsub.f32 0.0, %v1575
        %v2025 = vsub.f32 0.0, %v1578
        %v2026 = vsub.f32 0.0, %v1581
        %v2027 = vsub.f32 0.0, %v1584
        %v2028 = vsub.f32 0.0, %v1587
        %v2029 = vsub.f32 0.0, %v1590
        %v2030 = vsub.f32 0.0, %v1593
        %v2031 = vsub.f32 0.0, %v1596
        %v2032 = vsub.f32 0.0, %v1599
        %v2033 = vsub.f32 0.0, %v1602
        %v2034 = vsub.f32 0.0, %v1605
        %v2035 = vsub.f32 0.0, %v1608
        %v2036 = vsub.f32 0.0, %v1611
        %v2037 = vsub.f32 0.0, %v1614
        %v2038 = vsub.f32 0.0, %v1617
        %v2039 = vsub.f32 0.0, %v1620
        %v2040 = vsub.f32 0.0, %v1623
        %v2041 = vsub.f32 0.0, %v1626
        %v2042 = vsub.f32 0.0, %v1629
        %v2043 = vsub.f32 0.0, %v1632
        %v2044 = vsub.f32 0.0, %v1635
        %v2045 = vsub.f32 0.0, %v1638
        %v2046 = vsub.f32 0.0, %v1641
        %v2047 = vsub.f32 0.0, %v1644
        %v2048 = vsub.f32 0.0, %v1647
        %v2049 = vsub.f32 0.0, %v1650
        %v2050 = vsub.f32 0.0, %v1653
        %v2051 = vsub.f32 0.0, %v1656
        %v2052 = vsub.f32 0.0, %v1659
        %v2053 = vsub.f32 0.0, %v1662
        %v2054 = vsub.f32 0.0, %v1665
        %v2055 = vsub.f32 0.0, %v1668
        %v2056 = vsub.f32 0.0, %v1671
        %v2057 = vsub.f32 0.0, %v1674
        %v2058 = vsub.f32 0.0, %v1677
        %v2059 = vsub.f32 0.0, %v1680
        %v2060 = vsub.f32 0.0, %v1683
        %v2061 = vsub.f32 0.0, %v1686
        %v2062 = vsub.f32 0.0, %v1689
        %v2063 = vsub.f32 0.0, %v1692
        %v2064 = vsub.f32 0.0, %v1695
        %v2065 = vsub.f32 0.0, %v1698
        %v2066 = vsub.f32 0.0, %v1701
        %v2067 = vsub.f32 0.0, %v1704
        %v2068 = vsub.f32 0.0, %v1707
        %v2069 = vsub.f32 0.0, %v1710
        %v2070 = vsub.f32 0.0, %v1713
        %v2071 = vsub.f32 0.0, %v1716
        %v2072 = vsub.f32 0.0, %v1719
        %v2073 = vsub.f32 0.0, %v1722
        %v2074 = vsub.f32 0.0, %v1725
        %v2075 = vsub.f32 0.0, %v1728
        %v2076 = vsub.f32 0.0, %v1731
        %v2077 = vsub.f32 0.0, %v1734
        %v2078 = vsub.f32 0.0, %v1737
        %v2079 = vsub.f32 0.0, %v1740
        %v2080 = vsub.f32 0.0, %v1743
        %v2081 = vsub.f32 0.0, %v1746
        %v2082 = vsub.f32 0.0, %v1749
        %v2083 = vsub.f32 0.0, %v1752
        %v2084 = vsub.f32 0.0, %v1755
        %v2085 = vsub.f32 0.0, %v1758
        %v2086 = vsub.f32 0.0, %v1761
        %v2087 = vsub.f32 0.0, %v1764
        %v2088 = vsub.f32 0.0, %v1767
        %v2089 = vsub.f32 0.0, %v1770
        %v2090 = vsub.f32 0.0, %v1773
        %v2091 = vsub.f32 0.0, %v1776
        %v2092 = vsub.f32 0.0, %v1779
        %v2093 = vsub.f32 0.0, %v1782
        %v2094 = vsub.f32 0.0, %v1785
        %v2095 = vsub.f32 0.0, %v1788
        %v2096 = vsub.f32 0.0, %v1791
        %v2097 = vsub.f32 0.0, %v1794
        %v2098 = vsub.f32 0.0, %v1797
        %v2099 = vsub.f32 0.0, %v1800
        %v2100 = vsub.f32 0.0, %v1803
        %v2101 = vsub.f32 0.0, %v1806
        %v2102 = vsub.f32 0.0, %v1809
        %v2103 = vsub.f32 0.0, %v1812
        %v2104 = vsub.f32 0.0, %v1815
        %v2105 = vsub.f32 0.0, %v1818
        %v2106 = vsub.f32 0.0, %v1821
        %v2107 = vsub.f32 0.0, %v1824
        %v2108 = vsub.f32 0.0, %v1827
        %v2109 = vsub.f32 0.0, %v1830
        %v2110 = vsub.f32 0.0, %v1833
        %v2111 = vsub.f32 0.0, %v1836
        %v2112 = vsub.f32 0.0, %v1839
        %v2113 = vsub.f32 0.0, %v1842
        %v2114 = vsub.f32 0.0, %v1845
        %v2115 = vsub.f32 0.0, %v1848
        %v2116 = vsub.f32 0.0, %v1851
        %v2117 = vsub.f32 0.0, %v1854
        %v2118 = vsub.f32 0.0, %v1857
        %v2119 = vsub.f32 0.0, %v1860
        %v2120 = vsub.f32 0.0, %v1863
        %v2121 = vsub.f32 0.0, %v1866
        %v2122 = vsub.f32 0.0, %v1869
        %v2123 = vsub.f32 0.0, %v1872
        %v2124 = vsub.f32 0.0, %v1875
        %v2125 = vsub.f32 0.0, %v1878
        %v2126 = vsub.f32 0.0, %v1881
        %v2127 = vsub.f32 0.0, %v1884
        %v2128 = vsub.f32 0.0, %v1887
        %v2129 = vsub.f32 0.0, %v1890
        %v2130 = vsub.f32 0.0, %v1893
        %v2131 = vsub.f32 0.0, %v1896
        %v2132 = vsub.f32 0.0, %v1899
        %v2133 = vsub.f32 0.0, %v1902
        %v2134 = vsub.f32 0.0, %v1905
        %v2135 = vsub.f32 0.0, %v1908
        %v2136 = vsub.f32 0.0, %v1911
        %v2137 = vsub.f32 0.0, %v1914
        %v2138 = vsub.f32 0.0, %v1917
        %v2139 = vsub.f32 0.0, %v1920
        %v2140 = vsub.f32 0.0, %v1923
        %v2141 = vsub.f32 0.0, %v1926
        %v2142 = vsub.f32 0.0, %v1929
        %v2143 = vsub.f32 0.0, %v1932
        %v2144 = vsub.f32 0.0, %v1935
        %v2145 = vsub.f32 0.0, %v1938
        %v2146 = vsub.f32 0.0, %v1941
        %v2147 = vsub.f32 0.0, %v1944
        %v2148 = vsub.f32 0.0, %v1947
        %v2149 = vsub.f32 0.0, %v1950
        %v2150 = vsub.f32 0.0, %v1953
        %v2151 = vsub.f32 0.0, %v1956
        %v2344 = vlaneseq
        %v2345 = vand.u32 %v2344, 127
        %v2346 = vperm.slane %v1383, %v2345
        %v2347 = vadd.s32 %v2345, 4294967288
        %v2348 = vperm.slane %v1386, %v2347
        %vm2349 = vcmask 130112
        %v2350 = vsel %vm2349, %v2348, %v2346
        %v2351 = vadd.s32 %v2345, 4294967280
        %v2352 = vperm.slane %v1389, %v2351
        %vm2353 = vcmask 195712
        %v2354 = vsel %vm2353, %v2352, %v2350
        %v2355 = vadd.s32 %v2345, 4294967272
        %v2356 = vperm.slane %v1392, %v2355
        %vm2357 = vcmask 261312
        %v2358 = vsel %vm2357, %v2356, %v2354
        %v2359 = vadd.s32 %v2345, 4294967264
        %v2360 = vperm.slane %v1395, %v2359
        %vm2361 = vcmask 326912
        %v2362 = vsel %vm2361, %v2360, %v2358
        %v2363 = vadd.s32 %v2345, 4294967256
        %v2364 = vperm.slane %v1398, %v2363
        %vm2365 = vcmask 392512
        %v2366 = vsel %vm2365, %v2364, %v2362
        %v2367 = vadd.s32 %v2345, 4294967248
        %v2368 = vperm.slane %v1401, %v2367
        %vm2369 = vcmask 458112
        %v2370 = vsel %vm2369, %v2368, %v2366
        %v2371 = vadd.s32 %v2345, 4294967240
        %v2372 = vperm.slane %v1404, %v2371
        %vm2373 = vcmask 523712
        %v2374 = vsel %vm2373, %v2372, %v2370
        %v2375 = vadd.s32 %v2345, 4294967232
        %v2376 = vperm.slane %v1407, %v2375
        %vm2377 = vcmask 589312
        %v2378 = vsel %vm2377, %v2376, %v2374
        %v2379 = vadd.s32 %v2345, 4294967224
        %v2380 = vperm.slane %v1410, %v2379
        %vm2381 = vcmask 654912
        %v2382 = vsel %vm2381, %v2380, %v2378
        %v2383 = vadd.s32 %v2345, 4294967216
        %v2384 = vperm.slane %v1413, %v2383
        %vm2385 = vcmask 720512
        %v2386 = vsel %vm2385, %v2384, %v2382
        %v2387 = vadd.s32 %v2345, 4294967208
        %v2388 = vperm.slane %v1416, %v2387
        %vm2389 = vcmask 786112
        %v2390 = vsel %vm2389, %v2388, %v2386
        %v2391 = vadd.s32 %v2345, 4294967200
        %v2392 = vperm.slane %v1419, %v2391
        %vm2393 = vcmask 851712
        %v2394 = vsel %vm2393, %v2392, %v2390
        %v2395 = vadd.s32 %v2345, 4294967192
        %v2396 = vperm.slane %v1422, %v2395
        %vm2397 = vcmask 917312
        %v2398 = vsel %vm2397, %v2396, %v2394
        %v2399 = vadd.s32 %v2345, 4294967184
        %v2400 = vperm.slane %v1425, %v2399
        %vm2401 = vcmask 982912
        %v2402 = vsel %vm2401, %v2400, %v2398
        %v2403 = vadd.s32 %v2345, 4294967176
        %v2404 = vperm.slane %v1428, %v2403
        %vm2405 = vcmask 1048512
        %v2406 = vsel %vm2405, %v2404, %v2402
        %v2407 = vperm.slane %v1431, %v2345
        %v2408 = vperm.slane %v1434, %v2347
        %v2409 = vsel %vm2349, %v2408, %v2407
        %v2410 = vperm.slane %v1437, %v2351
        %v2411 = vsel %vm2353, %v2410, %v2409
        %v2412 = vperm.slane %v1440, %v2355
        %v2413 = vsel %vm2357, %v2412, %v2411
        %v2414 = vperm.slane %v1443, %v2359
        %v2415 = vsel %vm2361, %v2414, %v2413
        %v2416 = vperm.slane %v1446, %v2363
        %v2417 = vsel %vm2365, %v2416, %v2415
        %v2418 = vperm.slane %v1449, %v2367
        %v2419 = vsel %vm2369, %v2418, %v2417
        %v2420 = vperm.slane %v1452, %v2371
        %v2421 = vsel %vm2373, %v2420, %v2419
        %v2422 = vperm.slane %v1455, %v2375
        %v2423 = vsel %vm2377, %v2422, %v2421
        %v2424 = vperm.slane %v1458, %v2379
        %v2425 = vsel %vm2381, %v2424, %v2423
        %v2426 = vperm.slane %v1461, %v2383
        %v2427 = vsel %vm2385, %v2426, %v2425
        %v2428 = vperm.slane %v1464, %v2387
        %v2429 = vsel %vm2389, %v2428, %v2427
        %v2430 = vperm.slane %v1467, %v2391
        %v2431 = vsel %vm2393, %v2430, %v2429
        %v2432 = vperm.slane %v1470, %v2395
        %v2433 = vsel %vm2397, %v2432, %v2431
        %v2434 = vperm.slane %v1473, %v2399
        %v2435 = vsel %vm2401, %v2434, %v2433
        %v2436 = vperm.slane %v1476, %v2403
        %v2437 = vsel %vm2405, %v2436, %v2435
        %v2438 = vperm.slane %v1479, %v2345
        %v2439 = vperm.slane %v1482, %v2347
        %v2440 = vsel %vm2349, %v2439, %v2438
        %v2441 = vperm.slane %v1485, %v2351
        %v2442 = vsel %vm2353, %v2441, %v2440
        %v2443 = vperm.slane %v1488, %v2355
        %v2444 = vsel %vm2357, %v2443, %v2442
        %v2445 = vperm.slane %v1491, %v2359
        %v2446 = vsel %vm2361, %v2445, %v2444
        %v2447 = vperm.slane %v1494, %v2363
        %v2448 = vsel %vm2365, %v2447, %v2446
        %v2449 = vperm.slane %v1497, %v2367
        %v2450 = vsel %vm2369, %v2449, %v2448
        %v2451 = vperm.slane %v1500, %v2371
        %v2452 = vsel %vm2373, %v2451, %v2450
        %v2453 = vperm.slane %v1503, %v2375
        %v2454 = vsel %vm2377, %v2453, %v2452
        %v2455 = vperm.slane %v1506, %v2379
        %v2456 = vsel %vm2381, %v2455, %v2454
        %v2457 = vperm.slane %v1509, %v2383
        %v2458 = vsel %vm2385, %v2457, %v2456
        %v2459 = vperm.slane %v1512, %v2387
        %v2460 = vsel %vm2389, %v2459, %v2458
        %v2461 = vperm.slane %v1515, %v2391
        %v2462 = vsel %vm2393, %v2461, %v2460
        %v2463 = vperm.slane %v1518, %v2395
        %v2464 = vsel %vm2397, %v2463, %v2462
        %v2465 = vperm.slane %v1521, %v2399
        %v2466 = vsel %vm2401, %v2465, %v2464
        %v2467 = vperm.slane %v1524, %v2403
        %v2468 = vsel %vm2405, %v2467, %v2466
        %v2469 = vperm.slane %v1527, %v2345
        %v2470 = vperm.slane %v1530, %v2347
        %v2471 = vsel %vm2349, %v2470, %v2469
        %v2472 = vperm.slane %v1533, %v2351
        %v2473 = vsel %vm2353, %v2472, %v2471
        %v2474 = vperm.slane %v1536, %v2355
        %v2475 = vsel %vm2357, %v2474, %v2473
        %v2476 = vperm.slane %v1539, %v2359
        %v2477 = vsel %vm2361, %v2476, %v2475
        %v2478 = vperm.slane %v1542, %v2363
        %v2479 = vsel %vm2365, %v2478, %v2477
        %v2480 = vperm.slane %v1545, %v2367
        %v2481 = vsel %vm2369, %v2480, %v2479
        %v2482 = vperm.slane %v1548, %v2371
        %v2483 = vsel %vm2373, %v2482, %v2481
        %v2484 = vperm.slane %v1551, %v2375
        %v2485 = vsel %vm2377, %v2484, %v2483
        %v2486 = vperm.slane %v1554, %v2379
        %v2487 = vsel %vm2381, %v2486, %v2485
        %v2488 = vperm.slane %v1557, %v2383
        %v2489 = vsel %vm2385, %v2488, %v2487
        %v2490 = vperm.slane %v1560, %v2387
        %v2491 = vsel %vm2389, %v2490, %v2489
        %v2492 = vperm.slane %v1563, %v2391
        %v2493 = vsel %vm2393, %v2492, %v2491
        %v2494 = vperm.slane %v1566, %v2395
        %v2495 = vsel %vm2397, %v2494, %v2493
        %v2496 = vperm.slane %v1569, %v2399
        %v2497 = vsel %vm2401, %v2496, %v2495
        %v2498 = vperm.slane %v1572, %v2403
        %v2499 = vsel %vm2405, %v2498, %v2497
        %v2500 = vperm.slane %v1575, %v2345
        %v2501 = vperm.slane %v1578, %v2347
        %v2502 = vsel %vm2349, %v2501, %v2500
        %v2503 = vperm.slane %v1581, %v2351
        %v2504 = vsel %vm2353, %v2503, %v2502
        %v2505 = vperm.slane %v1584, %v2355
        %v2506 = vsel %vm2357, %v2505, %v2504
        %v2507 = vperm.slane %v1587, %v2359
        %v2508 = vsel %vm2361, %v2507, %v2506
        %v2509 = vperm.slane %v1590, %v2363
        %v2510 = vsel %vm2365, %v2509, %v2508
        %v2511 = vperm.slane %v1593, %v2367
        %v2512 = vsel %vm2369, %v2511, %v2510
        %v2513 = vperm.slane %v1596, %v2371
        %v2514 = vsel %vm2373, %v2513, %v2512
        %v2515 = vperm.slane %v1599, %v2375
        %v2516 = vsel %vm2377, %v2515, %v2514
        %v2517 = vperm.slane %v1602, %v2379
        %v2518 = vsel %vm2381, %v2517, %v2516
        %v2519 = vperm.slane %v1605, %v2383
        %v2520 = vsel %vm2385, %v2519, %v2518
        %v2521 = vperm.slane %v1608, %v2387
        %v2522 = vsel %vm2389, %v2521, %v2520
        %v2523 = vperm.slane %v1611, %v2391
        %v2524 = vsel %vm2393, %v2523, %v2522
        %v2525 = vperm.slane %v1614, %v2395
        %v2526 = vsel %vm2397, %v2525, %v2524
        %v2527 = vperm.slane %v1617, %v2399
        %v2528 = vsel %vm2401, %v2527, %v2526
        %v2529 = vperm.slane %v1620, %v2403
        %v2530 = vsel %vm2405, %v2529, %v2528
        %v2531 = vperm.slane %v1623, %v2345
        %v2532 = vperm.slane %v1626, %v2347
        %v2533 = vsel %vm2349, %v2532, %v2531
        %v2534 = vperm.slane %v1629, %v2351
        %v2535 = vsel %vm2353, %v2534, %v2533
        %v2536 = vperm.slane %v1632, %v2355
        %v2537 = vsel %vm2357, %v2536, %v2535
        %v2538 = vperm.slane %v1635, %v2359
        %v2539 = vsel %vm2361, %v2538, %v2537
        %v2540 = vperm.slane %v1638, %v2363
        %v2541 = vsel %vm2365, %v2540, %v2539
        %v2542 = vperm.slane %v1641, %v2367
        %v2543 = vsel %vm2369, %v2542, %v2541
        %v2544 = vperm.slane %v1644, %v2371
        %v2545 = vsel %vm2373, %v2544, %v2543
        %v2546 = vperm.slane %v1647, %v2375
        %v2547 = vsel %vm2377, %v2546, %v2545
        %v2548 = vperm.slane %v1650, %v2379
        %v2549 = vsel %vm2381, %v2548, %v2547
        %v2550 = vperm.slane %v1653, %v2383
        %v2551 = vsel %vm2385, %v2550, %v2549
        %v2552 = vperm.slane %v1656, %v2387
        %v2553 = vsel %vm2389, %v2552, %v2551
        %v2554 = vperm.slane %v1659, %v2391
        %v2555 = vsel %vm2393, %v2554, %v2553
        %v2556 = vperm.slane %v1662, %v2395
        %v2557 = vsel %vm2397, %v2556, %v2555
        %v2558 = vperm.slane %v1665, %v2399
        %v2559 = vsel %vm2401, %v2558, %v2557
        %v2560 = vperm.slane %v1668, %v2403
        %v2561 = vsel %vm2405, %v2560, %v2559
        %v2562 = vperm.slane %v1671, %v2345
        %v2563 = vperm.slane %v1674, %v2347
        %v2564 = vsel %vm2349, %v2563, %v2562
        %v2565 = vperm.slane %v1677, %v2351
        %v2566 = vsel %vm2353, %v2565, %v2564
        %v2567 = vperm.slane %v1680, %v2355
        %v2568 = vsel %vm2357, %v2567, %v2566
        %v2569 = vperm.slane %v1683, %v2359
        %v2570 = vsel %vm2361, %v2569, %v2568
        %v2571 = vperm.slane %v1686, %v2363
        %v2572 = vsel %vm2365, %v2571, %v2570
        %v2573 = vperm.slane %v1689, %v2367
        %v2574 = vsel %vm2369, %v2573, %v2572
        %v2575 = vperm.slane %v1692, %v2371
        %v2576 = vsel %vm2373, %v2575, %v2574
        %v2577 = vperm.slane %v1695, %v2375
        %v2578 = vsel %vm2377, %v2577, %v2576
        %v2579 = vperm.slane %v1698, %v2379
        %v2580 = vsel %vm2381, %v2579, %v2578
        %v2581 = vperm.slane %v1701, %v2383
        %v2582 = vsel %vm2385, %v2581, %v2580
        %v2583 = vperm.slane %v1704, %v2387
        %v2584 = vsel %vm2389, %v2583, %v2582
        %v2585 = vperm.slane %v1707, %v2391
        %v2586 = vsel %vm2393, %v2585, %v2584
        %v2587 = vperm.slane %v1710, %v2395
        %v2588 = vsel %vm2397, %v2587, %v2586
        %v2589 = vperm.slane %v1713, %v2399
        %v2590 = vsel %vm2401, %v2589, %v2588
        %v2591 = vperm.slane %v1716, %v2403
        %v2592 = vsel %vm2405, %v2591, %v2590
        %v2593 = vperm.slane %v1719, %v2345
        %v2594 = vperm.slane %v1722, %v2347
        %v2595 = vsel %vm2349, %v2594, %v2593
        %v2596 = vperm.slane %v1725, %v2351
        %v2597 = vsel %vm2353, %v2596, %v2595
        %v2598 = vperm.slane %v1728, %v2355
        %v2599 = vsel %vm2357, %v2598, %v2597
        %v2600 = vperm.slane %v1731, %v2359
        %v2601 = vsel %vm2361, %v2600, %v2599
        %v2602 = vperm.slane %v1734, %v2363
        %v2603 = vsel %vm2365, %v2602, %v2601
        %v2604 = vperm.slane %v1737, %v2367
        %v2605 = vsel %vm2369, %v2604, %v2603
        %v2606 = vperm.slane %v1740, %v2371
        %v2607 = vsel %vm2373, %v2606, %v2605
        %v2608 = vperm.slane %v1743, %v2375
        %v2609 = vsel %vm2377, %v2608, %v2607
        %v2610 = vperm.slane %v1746, %v2379
        %v2611 = vsel %vm2381, %v2610, %v2609
        %v2612 = vperm.slane %v1749, %v2383
        %v2613 = vsel %vm2385, %v2612, %v2611
        %v2614 = vperm.slane %v1752, %v2387
        %v2615 = vsel %vm2389, %v2614, %v2613
        %v2616 = vperm.slane %v1755, %v2391
        %v2617 = vsel %vm2393, %v2616, %v2615
        %v2618 = vperm.slane %v1758, %v2395
        %v2619 = vsel %vm2397, %v2618, %v2617
        %v2620 = vperm.slane %v1761, %v2399
        %v2621 = vsel %vm2401, %v2620, %v2619
        %v2622 = vperm.slane %v1764, %v2403
        %v2623 = vsel %vm2405, %v2622, %v2621
        %v2624 = vperm.slane %v1767, %v2345
        %v2625 = vperm.slane %v1770, %v2347
        %v2626 = vsel %vm2349, %v2625, %v2624
        %v2627 = vperm.slane %v1773, %v2351
        %v2628 = vsel %vm2353, %v2627, %v2626
        %v2629 = vperm.slane %v1776, %v2355
        %v2630 = vsel %vm2357, %v2629, %v2628
        %v2631 = vperm.slane %v1779, %v2359
        %v2632 = vsel %vm2361, %v2631, %v2630
        %v2633 = vperm.slane %v1782, %v2363
        %v2634 = vsel %vm2365, %v2633, %v2632
        %v2635 = vperm.slane %v1785, %v2367
        %v2636 = vsel %vm2369, %v2635, %v2634
        %v2637 = vperm.slane %v1788, %v2371
        %v2638 = vsel %vm2373, %v2637, %v2636
        %v2639 = vperm.slane %v1791, %v2375
        %v2640 = vsel %vm2377, %v2639, %v2638
        %v2641 = vperm.slane %v1794, %v2379
        %v2642 = vsel %vm2381, %v2641, %v2640
        %v2643 = vperm.slane %v1797, %v2383
        %v2644 = vsel %vm2385, %v2643, %v2642
        %v2645 = vperm.slane %v1800, %v2387
        %v2646 = vsel %vm2389, %v2645, %v2644
        %v2647 = vperm.slane %v1803, %v2391
        %v2648 = vsel %vm2393, %v2647, %v2646
        %v2649 = vperm.slane %v1806, %v2395
        %v2650 = vsel %vm2397, %v2649, %v2648
        %v2651 = vperm.slane %v1809, %v2399
        %v2652 = vsel %vm2401, %v2651, %v2650
        %v2653 = vperm.slane %v1812, %v2403
        %v2654 = vsel %vm2405, %v2653, %v2652
        %v2655 = vperm.slane %v1815, %v2345
        %v2656 = vperm.slane %v1818, %v2347
        %v2657 = vsel %vm2349, %v2656, %v2655
        %v2658 = vperm.slane %v1821, %v2351
        %v2659 = vsel %vm2353, %v2658, %v2657
        %v2660 = vperm.slane %v1824, %v2355
        %v2661 = vsel %vm2357, %v2660, %v2659
        %v2662 = vperm.slane %v1827, %v2359
        %v2663 = vsel %vm2361, %v2662, %v2661
        %v2664 = vperm.slane %v1830, %v2363
        %v2665 = vsel %vm2365, %v2664, %v2663
        %v2666 = vperm.slane %v1833, %v2367
        %v2667 = vsel %vm2369, %v2666, %v2665
        %v2668 = vperm.slane %v1836, %v2371
        %v2669 = vsel %vm2373, %v2668, %v2667
        %v2670 = vperm.slane %v1839, %v2375
        %v2671 = vsel %vm2377, %v2670, %v2669
        %v2672 = vperm.slane %v1842, %v2379
        %v2673 = vsel %vm2381, %v2672, %v2671
        %v2674 = vperm.slane %v1845, %v2383
        %v2675 = vsel %vm2385, %v2674, %v2673
        %v2676 = vperm.slane %v1848, %v2387
        %v2677 = vsel %vm2389, %v2676, %v2675
        %v2678 = vperm.slane %v1851, %v2391
        %v2679 = vsel %vm2393, %v2678, %v2677
        %v2680 = vperm.slane %v1854, %v2395
        %v2681 = vsel %vm2397, %v2680, %v2679
        %v2682 = vperm.slane %v1857, %v2399
        %v2683 = vsel %vm2401, %v2682, %v2681
        %v2684 = vperm.slane %v1860, %v2403
        %v2685 = vsel %vm2405, %v2684, %v2683
        %v2686 = vperm.slane %v1863, %v2345
        %v2687 = vperm.slane %v1866, %v2347
        %v2688 = vsel %vm2349, %v2687, %v2686
        %v2689 = vperm.slane %v1869, %v2351
        %v2690 = vsel %vm2353, %v2689, %v2688
        %v2691 = vperm.slane %v1872, %v2355
        %v2692 = vsel %vm2357, %v2691, %v2690
        %v2693 = vperm.slane %v1875, %v2359
        %v2694 = vsel %vm2361, %v2693, %v2692
        %v2695 = vperm.slane %v1878, %v2363
        %v2696 = vsel %vm2365, %v2695, %v2694
        %v2697 = vperm.slane %v1881, %v2367
        %v2698 = vsel %vm2369, %v2697, %v2696
        %v2699 = vperm.slane %v1884, %v2371
        %v2700 = vsel %vm2373, %v2699, %v2698
        %v2701 = vperm.slane %v1887, %v2375
        %v2702 = vsel %vm2377, %v2701, %v2700
        %v2703 = vperm.slane %v1890, %v2379
        %v2704 = vsel %vm2381, %v2703, %v2702
        %v2705 = vperm.slane %v1893, %v2383
        %v2706 = vsel %vm2385, %v2705, %v2704
        %v2707 = vperm.slane %v1896, %v2387
        %v2708 = vsel %vm2389, %v2707, %v2706
        %v2709 = vperm.slane %v1899, %v2391
        %v2710 = vsel %vm2393, %v2709, %v2708
        %v2711 = vperm.slane %v1902, %v2395
        %v2712 = vsel %vm2397, %v2711, %v2710
        %v2713 = vperm.slane %v1905, %v2399
        %v2714 = vsel %vm2401, %v2713, %v2712
        %v2715 = vperm.slane %v1908, %v2403
        %v2716 = vsel %vm2405, %v2715, %v2714
        %v2717 = vperm.slane %v1911, %v2345
        %v2718 = vperm.slane %v1914, %v2347
        %v2719 = vsel %vm2349, %v2718, %v2717
        %v2720 = vperm.slane %v1917, %v2351
        %v2721 = vsel %vm2353, %v2720, %v2719
        %v2722 = vperm.slane %v1920, %v2355
        %v2723 = vsel %vm2357, %v2722, %v2721
        %v2724 = vperm.slane %v1923, %v2359
        %v2725 = vsel %vm2361, %v2724, %v2723
        %v2726 = vperm.slane %v1926, %v2363
        %v2727 = vsel %vm2365, %v2726, %v2725
        %v2728 = vperm.slane %v1929, %v2367
        %v2729 = vsel %vm2369, %v2728, %v2727
        %v2730 = vperm.slane %v1932, %v2371
        %v2731 = vsel %vm2373, %v2730, %v2729
        %v2732 = vperm.slane %v1935, %v2375
        %v2733 = vsel %vm2377, %v2732, %v2731
        %v2734 = vperm.slane %v1938, %v2379
        %v2735 = vsel %vm2381, %v2734, %v2733
        %v2736 = vperm.slane %v1941, %v2383
        %v2737 = vsel %vm2385, %v2736, %v2735
        %v2738 = vperm.slane %v1944, %v2387
        %v2739 = vsel %vm2389, %v2738, %v2737
        %v2740 = vperm.slane %v1947, %v2391
        %v2741 = vsel %vm2393, %v2740, %v2739
        %v2742 = vperm.slane %v1950, %v2395
        %v2743 = vsel %vm2397, %v2742, %v2741
        %v2744 = vperm.slane %v1953, %v2399
        %v2745 = vsel %vm2401, %v2744, %v2743
        %v2746 = vperm.slane %v1956, %v2403
        %v2747 = vsel %vm2405, %v2746, %v2745
        %vm2748 = vcmask 1041409
        %v2749 = vsel %vm2748, %v2468, %v2406
        %vm2750 = vcmask 1042434
        %v2751 = vsel %vm2750, %v2530, %v2749
        %vm2752 = vcmask 1043459
        %v2753 = vsel %vm2752, %v2592, %v2751
        %vm2754 = vcmask 1044484
        %v2755 = vsel %vm2754, %v2654, %v2753
        %vm2756 = vcmask 1045509
        %v2757 = vsel %vm2756, %v2716, %v2755
        %v2758 = vsel %vm2748, %v2499, %v2437
        %v2759 = vsel %vm2750, %v2561, %v2758
        %v2760 = vsel %vm2752, %v2623, %v2759
        %v2761 = vsel %vm2754, %v2685, %v2760
        %v2762 = vsel %vm2756, %v2747, %v2761
        %v2957 = vperm.slane %v1960, %v2345
        %v2958 = vperm.slane %v1961, %v2347
        %v2959 = vsel %vm2349, %v2958, %v2957
        %v2960 = vperm.slane %v1962, %v2351
        %v2961 = vsel %vm2353, %v2960, %v2959
        %v2962 = vperm.slane %v1963, %v2355
        %v2963 = vsel %vm2357, %v2962, %v2961
        %v2964 = vperm.slane %v1964, %v2359
        %v2965 = vsel %vm2361, %v2964, %v2963
        %v2966 = vperm.slane %v1965, %v2363
        %v2967 = vsel %vm2365, %v2966, %v2965
        %v2968 = vperm.slane %v1966, %v2367
        %v2969 = vsel %vm2369, %v2968, %v2967
        %v2970 = vperm.slane %v1967, %v2371
        %v2971 = vsel %vm2373, %v2970, %v2969
        %v2972 = vperm.slane %v1968, %v2375
        %v2973 = vsel %vm2377, %v2972, %v2971
        %v2974 = vperm.slane %v1969, %v2379
        %v2975 = vsel %vm2381, %v2974, %v2973
        %v2976 = vperm.slane %v1970, %v2383
        %v2977 = vsel %vm2385, %v2976, %v2975
        %v2978 = vperm.slane %v1971, %v2387
        %v2979 = vsel %vm2389, %v2978, %v2977
        %v2980 = vperm.slane %v1972, %v2391
        %v2981 = vsel %vm2393, %v2980, %v2979
        %v2982 = vperm.slane %v1973, %v2395
        %v2983 = vsel %vm2397, %v2982, %v2981
        %v2984 = vperm.slane %v1974, %v2399
        %v2985 = vsel %vm2401, %v2984, %v2983
        %v2986 = vperm.slane %v1975, %v2403
        %v2987 = vsel %vm2405, %v2986, %v2985
        %v2988 = vperm.slane %v1976, %v2345
        %v2989 = vperm.slane %v1977, %v2347
        %v2990 = vsel %vm2349, %v2989, %v2988
        %v2991 = vperm.slane %v1978, %v2351
        %v2992 = vsel %vm2353, %v2991, %v2990
        %v2993 = vperm.slane %v1979, %v2355
        %v2994 = vsel %vm2357, %v2993, %v2992
        %v2995 = vperm.slane %v1980, %v2359
        %v2996 = vsel %vm2361, %v2995, %v2994
        %v2997 = vperm.slane %v1981, %v2363
        %v2998 = vsel %vm2365, %v2997, %v2996
        %v2999 = vperm.slane %v1982, %v2367
        %v3000 = vsel %vm2369, %v2999, %v2998
        %v3001 = vperm.slane %v1983, %v2371
        %v3002 = vsel %vm2373, %v3001, %v3000
        %v3003 = vperm.slane %v1984, %v2375
        %v3004 = vsel %vm2377, %v3003, %v3002
        %v3005 = vperm.slane %v1985, %v2379
        %v3006 = vsel %vm2381, %v3005, %v3004
        %v3007 = vperm.slane %v1986, %v2383
        %v3008 = vsel %vm2385, %v3007, %v3006
        %v3009 = vperm.slane %v1987, %v2387
        %v3010 = vsel %vm2389, %v3009, %v3008
        %v3011 = vperm.slane %v1988, %v2391
        %v3012 = vsel %vm2393, %v3011, %v3010
        %v3013 = vperm.slane %v1989, %v2395
        %v3014 = vsel %vm2397, %v3013, %v3012
        %v3015 = vperm.slane %v1990, %v2399
        %v3016 = vsel %vm2401, %v3015, %v3014
        %v3017 = vperm.slane %v1991, %v2403
        %v3018 = vsel %vm2405, %v3017, %v3016
        %v3019 = vperm.slane %v1992, %v2345
        %v3020 = vperm.slane %v1993, %v2347
        %v3021 = vsel %vm2349, %v3020, %v3019
        %v3022 = vperm.slane %v1994, %v2351
        %v3023 = vsel %vm2353, %v3022, %v3021
        %v3024 = vperm.slane %v1995, %v2355
        %v3025 = vsel %vm2357, %v3024, %v3023
        %v3026 = vperm.slane %v1996, %v2359
        %v3027 = vsel %vm2361, %v3026, %v3025
        %v3028 = vperm.slane %v1997, %v2363
        %v3029 = vsel %vm2365, %v3028, %v3027
        %v3030 = vperm.slane %v1998, %v2367
        %v3031 = vsel %vm2369, %v3030, %v3029
        %v3032 = vperm.slane %v1999, %v2371
        %v3033 = vsel %vm2373, %v3032, %v3031
        %v3034 = vperm.slane %v2000, %v2375
        %v3035 = vsel %vm2377, %v3034, %v3033
        %v3036 = vperm.slane %v2001, %v2379
        %v3037 = vsel %vm2381, %v3036, %v3035
        %v3038 = vperm.slane %v2002, %v2383
        %v3039 = vsel %vm2385, %v3038, %v3037
        %v3040 = vperm.slane %v2003, %v2387
        %v3041 = vsel %vm2389, %v3040, %v3039
        %v3042 = vperm.slane %v2004, %v2391
        %v3043 = vsel %vm2393, %v3042, %v3041
        %v3044 = vperm.slane %v2005, %v2395
        %v3045 = vsel %vm2397, %v3044, %v3043
        %v3046 = vperm.slane %v2006, %v2399
        %v3047 = vsel %vm2401, %v3046, %v3045
        %v3048 = vperm.slane %v2007, %v2403
        %v3049 = vsel %vm2405, %v3048, %v3047
        %v3050 = vperm.slane %v2008, %v2345
        %v3051 = vperm.slane %v2009, %v2347
        %v3052 = vsel %vm2349, %v3051, %v3050
        %v3053 = vperm.slane %v2010, %v2351
        %v3054 = vsel %vm2353, %v3053, %v3052
        %v3055 = vperm.slane %v2011, %v2355
        %v3056 = vsel %vm2357, %v3055, %v3054
        %v3057 = vperm.slane %v2012, %v2359
        %v3058 = vsel %vm2361, %v3057, %v3056
        %v3059 = vperm.slane %v2013, %v2363
        %v3060 = vsel %vm2365, %v3059, %v3058
        %v3061 = vperm.slane %v2014, %v2367
        %v3062 = vsel %vm2369, %v3061, %v3060
        %v3063 = vperm.slane %v2015, %v2371
        %v3064 = vsel %vm2373, %v3063, %v3062
        %v3065 = vperm.slane %v2016, %v2375
        %v3066 = vsel %vm2377, %v3065, %v3064
        %v3067 = vperm.slane %v2017, %v2379
        %v3068 = vsel %vm2381, %v3067, %v3066
        %v3069 = vperm.slane %v2018, %v2383
        %v3070 = vsel %vm2385, %v3069, %v3068
        %v3071 = vperm.slane %v2019, %v2387
        %v3072 = vsel %vm2389, %v3071, %v3070
        %v3073 = vperm.slane %v2020, %v2391
        %v3074 = vsel %vm2393, %v3073, %v3072
        %v3075 = vperm.slane %v2021, %v2395
        %v3076 = vsel %vm2397, %v3075, %v3074
        %v3077 = vperm.slane %v2022, %v2399
        %v3078 = vsel %vm2401, %v3077, %v3076
        %v3079 = vperm.slane %v2023, %v2403
        %v3080 = vsel %vm2405, %v3079, %v3078
        %v3081 = vperm.slane %v2024, %v2345
        %v3082 = vperm.slane %v2025, %v2347
        %v3083 = vsel %vm2349, %v3082, %v3081
        %v3084 = vperm.slane %v2026, %v2351
        %v3085 = vsel %vm2353, %v3084, %v3083
        %v3086 = vperm.slane %v2027, %v2355
        %v3087 = vsel %vm2357, %v3086, %v3085
        %v3088 = vperm.slane %v2028, %v2359
        %v3089 = vsel %vm2361, %v3088, %v3087
        %v3090 = vperm.slane %v2029, %v2363
        %v3091 = vsel %vm2365, %v3090, %v3089
        %v3092 = vperm.slane %v2030, %v2367
        %v3093 = vsel %vm2369, %v3092, %v3091
        %v3094 = vperm.slane %v2031, %v2371
        %v3095 = vsel %vm2373, %v3094, %v3093
        %v3096 = vperm.slane %v2032, %v2375
        %v3097 = vsel %vm2377, %v3096, %v3095
        %v3098 = vperm.slane %v2033, %v2379
        %v3099 = vsel %vm2381, %v3098, %v3097
        %v3100 = vperm.slane %v2034, %v2383
        %v3101 = vsel %vm2385, %v3100, %v3099
        %v3102 = vperm.slane %v2035, %v2387
        %v3103 = vsel %vm2389, %v3102, %v3101
        %v3104 = vperm.slane %v2036, %v2391
        %v3105 = vsel %vm2393, %v3104, %v3103
        %v3106 = vperm.slane %v2037, %v2395
        %v3107 = vsel %vm2397, %v3106, %v3105
        %v3108 = vperm.slane %v2038, %v2399
        %v3109 = vsel %vm2401, %v3108, %v3107
        %v3110 = vperm.slane %v2039, %v2403
        %v3111 = vsel %vm2405, %v3110, %v3109
        %v3112 = vperm.slane %v2040, %v2345
        %v3113 = vperm.slane %v2041, %v2347
        %v3114 = vsel %vm2349, %v3113, %v3112
        %v3115 = vperm.slane %v2042, %v2351
        %v3116 = vsel %vm2353, %v3115, %v3114
        %v3117 = vperm.slane %v2043, %v2355
        %v3118 = vsel %vm2357, %v3117, %v3116
        %v3119 = vperm.slane %v2044, %v2359
        %v3120 = vsel %vm2361, %v3119, %v3118
        %v3121 = vperm.slane %v2045, %v2363
        %v3122 = vsel %vm2365, %v3121, %v3120
        %v3123 = vperm.slane %v2046, %v2367
        %v3124 = vsel %vm2369, %v3123, %v3122
        %v3125 = vperm.slane %v2047, %v2371
        %v3126 = vsel %vm2373, %v3125, %v3124
        %v3127 = vperm.slane %v2048, %v2375
        %v3128 = vsel %vm2377, %v3127, %v3126
        %v3129 = vperm.slane %v2049, %v2379
        %v3130 = vsel %vm2381, %v3129, %v3128
        %v3131 = vperm.slane %v2050, %v2383
        %v3132 = vsel %vm2385, %v3131, %v3130
        %v3133 = vperm.slane %v2051, %v2387
        %v3134 = vsel %vm2389, %v3133, %v3132
        %v3135 = vperm.slane %v2052, %v2391
        %v3136 = vsel %vm2393, %v3135, %v3134
        %v3137 = vperm.slane %v2053, %v2395
        %v3138 = vsel %vm2397, %v3137, %v3136
        %v3139 = vperm.slane %v2054, %v2399
        %v3140 = vsel %vm2401, %v3139, %v3138
        %v3141 = vperm.slane %v2055, %v2403
        %v3142 = vsel %vm2405, %v3141, %v3140
        %v3143 = vperm.slane %v2056, %v2345
        %v3144 = vperm.slane %v2057, %v2347
        %v3145 = vsel %vm2349, %v3144, %v3143
        %v3146 = vperm.slane %v2058, %v2351
        %v3147 = vsel %vm2353, %v3146, %v3145
        %v3148 = vperm.slane %v2059, %v2355
        %v3149 = vsel %vm2357, %v3148, %v3147
        %v3150 = vperm.slane %v2060, %v2359
        %v3151 = vsel %vm2361, %v3150, %v3149
        %v3152 = vperm.slane %v2061, %v2363
        %v3153 = vsel %vm2365, %v3152, %v3151
        %v3154 = vperm.slane %v2062, %v2367
        %v3155 = vsel %vm2369, %v3154, %v3153
        %v3156 = vperm.slane %v2063, %v2371
        %v3157 = vsel %vm2373, %v3156, %v3155
        %v3158 = vperm.slane %v2064, %v2375
        %v3159 = vsel %vm2377, %v3158, %v3157
        %v3160 = vperm.slane %v2065, %v2379
        %v3161 = vsel %vm2381, %v3160, %v3159
        %v3162 = vperm.slane %v2066, %v2383
        %v3163 = vsel %vm2385, %v3162, %v3161
        %v3164 = vperm.slane %v2067, %v2387
        %v3165 = vsel %vm2389, %v3164, %v3163
        %v3166 = vperm.slane %v2068, %v2391
        %v3167 = vsel %vm2393, %v3166, %v3165
        %v3168 = vperm.slane %v2069, %v2395
        %v3169 = vsel %vm2397, %v3168, %v3167
        %v3170 = vperm.slane %v2070, %v2399
        %v3171 = vsel %vm2401, %v3170, %v3169
        %v3172 = vperm.slane %v2071, %v2403
        %v3173 = vsel %vm2405, %v3172, %v3171
        %v3174 = vperm.slane %v2072, %v2345
        %v3175 = vperm.slane %v2073, %v2347
        %v3176 = vsel %vm2349, %v3175, %v3174
        %v3177 = vperm.slane %v2074, %v2351
        %v3178 = vsel %vm2353, %v3177, %v3176
        %v3179 = vperm.slane %v2075, %v2355
        %v3180 = vsel %vm2357, %v3179, %v3178
        %v3181 = vperm.slane %v2076, %v2359
        %v3182 = vsel %vm2361, %v3181, %v3180
        %v3183 = vperm.slane %v2077, %v2363
        %v3184 = vsel %vm2365, %v3183, %v3182
        %v3185 = vperm.slane %v2078, %v2367
        %v3186 = vsel %vm2369, %v3185, %v3184
        %v3187 = vperm.slane %v2079, %v2371
        %v3188 = vsel %vm2373, %v3187, %v3186
        %v3189 = vperm.slane %v2080, %v2375
        %v3190 = vsel %vm2377, %v3189, %v3188
        %v3191 = vperm.slane %v2081, %v2379
        %v3192 = vsel %vm2381, %v3191, %v3190
        %v3193 = vperm.slane %v2082, %v2383
        %v3194 = vsel %vm2385, %v3193, %v3192
        %v3195 = vperm.slane %v2083, %v2387
        %v3196 = vsel %vm2389, %v3195, %v3194
        %v3197 = vperm.slane %v2084, %v2391
        %v3198 = vsel %vm2393, %v3197, %v3196
        %v3199 = vperm.slane %v2085, %v2395
        %v3200 = vsel %vm2397, %v3199, %v3198
        %v3201 = vperm.slane %v2086, %v2399
        %v3202 = vsel %vm2401, %v3201, %v3200
        %v3203 = vperm.slane %v2087, %v2403
        %v3204 = vsel %vm2405, %v3203, %v3202
        %v3205 = vperm.slane %v2088, %v2345
        %v3206 = vperm.slane %v2089, %v2347
        %v3207 = vsel %vm2349, %v3206, %v3205
        %v3208 = vperm.slane %v2090, %v2351
        %v3209 = vsel %vm2353, %v3208, %v3207
        %v3210 = vperm.slane %v2091, %v2355
        %v3211 = vsel %vm2357, %v3210, %v3209
        %v3212 = vperm.slane %v2092, %v2359
        %v3213 = vsel %vm2361, %v3212, %v3211
        %v3214 = vperm.slane %v2093, %v2363
        %v3215 = vsel %vm2365, %v3214, %v3213
        %v3216 = vperm.slane %v2094, %v2367
        %v3217 = vsel %vm2369, %v3216, %v3215
        %v3218 = vperm.slane %v2095, %v2371
        %v3219 = vsel %vm2373, %v3218, %v3217
        %v3220 = vperm.slane %v2096, %v2375
        %v3221 = vsel %vm2377, %v3220, %v3219
        %v3222 = vperm.slane %v2097, %v2379
        %v3223 = vsel %vm2381, %v3222, %v3221
        %v3224 = vperm.slane %v2098, %v2383
        %v3225 = vsel %vm2385, %v3224, %v3223
        %v3226 = vperm.slane %v2099, %v2387
        %v3227 = vsel %vm2389, %v3226, %v3225
        %v3228 = vperm.slane %v2100, %v2391
        %v3229 = vsel %vm2393, %v3228, %v3227
        %v3230 = vperm.slane %v2101, %v2395
        %v3231 = vsel %vm2397, %v3230, %v3229
        %v3232 = vperm.slane %v2102, %v2399
        %v3233 = vsel %vm2401, %v3232, %v3231
        %v3234 = vperm.slane %v2103, %v2403
        %v3235 = vsel %vm2405, %v3234, %v3233
        %v3236 = vperm.slane %v2104, %v2345
        %v3237 = vperm.slane %v2105, %v2347
        %v3238 = vsel %vm2349, %v3237, %v3236
        %v3239 = vperm.slane %v2106, %v2351
        %v3240 = vsel %vm2353, %v3239, %v3238
        %v3241 = vperm.slane %v2107, %v2355
        %v3242 = vsel %vm2357, %v3241, %v3240
        %v3243 = vperm.slane %v2108, %v2359
        %v3244 = vsel %vm2361, %v3243, %v3242
        %v3245 = vperm.slane %v2109, %v2363
        %v3246 = vsel %vm2365, %v3245, %v3244
        %v3247 = vperm.slane %v2110, %v2367
        %v3248 = vsel %vm2369, %v3247, %v3246
        %v3249 = vperm.slane %v2111, %v2371
        %v3250 = vsel %vm2373, %v3249, %v3248
        %v3251 = vperm.slane %v2112, %v2375
        %v3252 = vsel %vm2377, %v3251, %v3250
        %v3253 = vperm.slane %v2113, %v2379
        %v3254 = vsel %vm2381, %v3253, %v3252
        %v3255 = vperm.slane %v2114, %v2383
        %v3256 = vsel %vm2385, %v3255, %v3254
        %v3257 = vperm.slane %v2115, %v2387
        %v3258 = vsel %vm2389, %v3257, %v3256
        %v3259 = vperm.slane %v2116, %v2391
        %v3260 = vsel %vm2393, %v3259, %v3258
        %v3261 = vperm.slane %v2117, %v2395
        %v3262 = vsel %vm2397, %v3261, %v3260
        %v3263 = vperm.slane %v2118, %v2399
        %v3264 = vsel %vm2401, %v3263, %v3262
        %v3265 = vperm.slane %v2119, %v2403
        %v3266 = vsel %vm2405, %v3265, %v3264
        %v3267 = vperm.slane %v2120, %v2345
        %v3268 = vperm.slane %v2121, %v2347
        %v3269 = vsel %vm2349, %v3268, %v3267
        %v3270 = vperm.slane %v2122, %v2351
        %v3271 = vsel %vm2353, %v3270, %v3269
        %v3272 = vperm.slane %v2123, %v2355
        %v3273 = vsel %vm2357, %v3272, %v3271
        %v3274 = vperm.slane %v2124, %v2359
        %v3275 = vsel %vm2361, %v3274, %v3273
        %v3276 = vperm.slane %v2125, %v2363
        %v3277 = vsel %vm2365, %v3276, %v3275
        %v3278 = vperm.slane %v2126, %v2367
        %v3279 = vsel %vm2369, %v3278, %v3277
        %v3280 = vperm.slane %v2127, %v2371
        %v3281 = vsel %vm2373, %v3280, %v3279
        %v3282 = vperm.slane %v2128, %v2375
        %v3283 = vsel %vm2377, %v3282, %v3281
        %v3284 = vperm.slane %v2129, %v2379
        %v3285 = vsel %vm2381, %v3284, %v3283
        %v3286 = vperm.slane %v2130, %v2383
        %v3287 = vsel %vm2385, %v3286, %v3285
        %v3288 = vperm.slane %v2131, %v2387
        %v3289 = vsel %vm2389, %v3288, %v3287
        %v3290 = vperm.slane %v2132, %v2391
        %v3291 = vsel %vm2393, %v3290, %v3289
        %v3292 = vperm.slane %v2133, %v2395
        %v3293 = vsel %vm2397, %v3292, %v3291
        %v3294 = vperm.slane %v2134, %v2399
        %v3295 = vsel %vm2401, %v3294, %v3293
        %v3296 = vperm.slane %v2135, %v2403
        %v3297 = vsel %vm2405, %v3296, %v3295
        %v3298 = vperm.slane %v2136, %v2345
        %v3299 = vperm.slane %v2137, %v2347
        %v3300 = vsel %vm2349, %v3299, %v3298
        %v3301 = vperm.slane %v2138, %v2351
        %v3302 = vsel %vm2353, %v3301, %v3300
        %v3303 = vperm.slane %v2139, %v2355
        %v3304 = vsel %vm2357, %v3303, %v3302
        %v3305 = vperm.slane %v2140, %v2359
        %v3306 = vsel %vm2361, %v3305, %v3304
        %v3307 = vperm.slane %v2141, %v2363
        %v3308 = vsel %vm2365, %v3307, %v3306
        %v3309 = vperm.slane %v2142, %v2367
        %v3310 = vsel %vm2369, %v3309, %v3308
        %v3311 = vperm.slane %v2143, %v2371
        %v3312 = vsel %vm2373, %v3311, %v3310
        %v3313 = vperm.slane %v2144, %v2375
        %v3314 = vsel %vm2377, %v3313, %v3312
        %v3315 = vperm.slane %v2145, %v2379
        %v3316 = vsel %vm2381, %v3315, %v3314
        %v3317 = vperm.slane %v2146, %v2383
        %v3318 = vsel %vm2385, %v3317, %v3316
        %v3319 = vperm.slane %v2147, %v2387
        %v3320 = vsel %vm2389, %v3319, %v3318
        %v3321 = vperm.slane %v2148, %v2391
        %v3322 = vsel %vm2393, %v3321, %v3320
        %v3323 = vperm.slane %v2149, %v2395
        %v3324 = vsel %vm2397, %v3323, %v3322
        %v3325 = vperm.slane %v2150, %v2399
        %v3326 = vsel %vm2401, %v3325, %v3324
        %v3327 = vperm.slane %v2151, %v2403
        %v3328 = vsel %vm2405, %v3327, %v3326
        %v3329 = vsel %vm2748, %v3049, %v2987
        %v3330 = vsel %vm2750, %v3111, %v3329
        %v3331 = vsel %vm2752, %v3173, %v3330
        %v3332 = vsel %vm2754, %v3235, %v3331
        %v3333 = vsel %vm2756, %v3297, %v3332
        %v3334 = vsel %vm2748, %v3080, %v3018
        %v3335 = vsel %vm2750, %v3142, %v3334
        %v3336 = vsel %vm2752, %v3204, %v3335
        %v3337 = vsel %vm2754, %v3266, %v3336
        %v3338 = vsel %vm2756, %v3328, %v3337
        %v3341 = vsel %vm1959, %v2757, %v3333
        %v3342 = vsel %vm1959, %v2762, %v3338
        %v3343 = vmin.f32 %v3341, 0.0
        %v3344 = vmin.f32 %v3342, 0.0
        %v3345 = vand.u32 2147483647, %v3341
        %v3346 = vand.u32 2147483647, %v3342
        %v3347 = vsub.f32 0.0, %v3345
        %v3348 = vsub.f32 0.0, %v3346
        %v3349 = vmul.f32 %v3347, 1.442695
        %v3350 = vpow.pop %v3349
        %v3351 = vmul.f32 %v3348, 1.442695
        %v3352 = vpow.pop %v3351
        %v3353 = vadd.f32 %v3350, 1.0
        %v3354 = vlog2.pop %v3353
        %v3355 = vmul.f32 %v3354, 0.6931472
        %v3356 = vmul.f32 -0.5, %v3350
        %v3357 = vadd.f32 %v3356, 1.0
        %v3358 = vmul.f32 %v3357, %v3350
        %v3359 = vand.u32 2147483647, %v3350
        %vm3360 = vcmp.lt.f32.partialorder %v3359, 0.0004427343
        %v3361 = vsel %vm3360, %v3358, %v3355
        %v3362 = vadd.f32 %v3352, 1.0
        %v3363 = vlog2.pop %v3362
        %v3364 = vmul.f32 %v3363, 0.6931472
        %v3365 = vmul.f32 -0.5, %v3352
        %v3366 = vadd.f32 %v3365, 1.0
        %v3367 = vmul.f32 %v3366, %v3352
        %v3368 = vand.u32 2147483647, %v3352
        %vm3369 = vcmp.lt.f32.partialorder %v3368, 0.0004427343
        %v3370 = vsel %vm3369, %v3367, %v3364
        %v3371 = vsub.f32 %v3343, %v3361
        %v3372 = vsub.f32 %v3344, %v3370
        %vm3373 = vcmask 1045504
        %v3374 = vsel %vm3373, %v3371, 0.0
        %v3375 = vsel %vm3373, %v3372, 0.0
        %v3376 = vadd.f32 %v3374, %v3375
        %3377 = vadd.xlane.f32.xlu0 %v3376
        %v3378 = vpop.xlane.xlu0 %3377
        %v3379 = vrot.slane %v3378, 4
        %v3380 = vadd.f32 %v3378, %v3379
        %v3381 = vrot.slane %v3380, 2
        %v3382 = vadd.f32 %v3380, %v3381
        %v3383 = vrot.slane %v3382, 1
        %v3384 = vadd.f32 %v3382, %v3383
        %s3385 = vtos %v3384
        %s3386 = ssub.f32 0.0, %s3385
        %v3387 = vstv %s3386
        %3388 = vst [vmem:[%s956] sm:$0x1] %v3387
        %s3389 = sand.u32 %s76, 1
        %s3390 = scalar_lea.sflag [#allocation4], %s3389
        %s3391 = sand.u32 %s76, 1
        %s3392 = scalar_lea.vmem [#allocation3], %s3391
        // Predicated region
        $region67: #{tpu_custom_call.1} parent=61 // pred_check
          %p3393 = pneg %p86
        $region68: #{tpu_custom_call.1} parent=61 // pred_check_branch
          %3395 = sbr.rel (%p3393) target = $region70
        $region69: #{tpu_custom_call.1} parent=61 // pred_region
          %3397 = vsyncadd %s3390, 0
          %s3398 = scalar_lea.hbm %s2, %s16
          %s3400 = sshll.u32 %s3392, 4
          %s3401 = int_to_ptr.vmem [resolvable:$true] %s3400
          %s3402 = sshll.u32 %s3398, 4
          %s3403 = int_to_ptr.hbm [resolvable:$true] %s3402
          %3405 = dma.vmem_to_hbm [thread:$0]  %s3401, 16, %s3403, %s3390
        $region70: #{tpu_custom_call.1} parent=61 // pred_fallthru
          _
      $region62: #{tpu_custom_call.1} parent=5 // pred_fallthru
        _
      %p3406 = scmp.le.s32.totalorder 2, %s11
      // Predicated region
      $region71: #{tpu_custom_call.1} parent=5 // pred_check
        %p3407 = pneg %p3406
      $region72: #{tpu_custom_call.1} parent=5 // pred_check_branch
        %3409 = sbr.rel (%p3407) target = $region74
      $region73: #{tpu_custom_call.1} parent=5 // pred_region
        %s3410 = ssub.s32 %s11, 2
        // Predicated region
        $region75: #{tpu_custom_call.1} parent=73 // pred_check
          %p3411 = pneg %p92
        $region76: #{tpu_custom_call.1} parent=73 // pred_check_branch
          %3413 = sbr.rel (%p3411) target = $region78
        $region77: #{tpu_custom_call.1} parent=73 // pred_region
          %s3414 = sand.u32 %s77, 1
          %s3415 = scalar_lea.sflag [#allocation4], %s3414
          %s3416 = sand.u32 %s77, 1
          %s3417 = scalar_lea.vmem [#allocation3], %s3416
          %3419 = dma.done %s3415, 16
        $region78: #{tpu_custom_call.1} parent=73 // pred_fallthru
          _
      $region74: #{tpu_custom_call.1} parent=5 // pred_fallthru
        _
    $region6: #{tpu_custom_call.1} parent=1 // loop_footer
      %s15 = sadd.s32 1, %s11
    $region7: #{tpu_custom_call.1} parent=1 // loop_footer_branch
      %10 = sbr.rel target = $region3
    $region8: #{tpu_custom_call.1} parent=1 // loop_exit
      _
    %3420 = vsyncpa [#allocation4], 1
    %s3421 = scalar_lea.sflag [#allocation4], 1
    %3422 = vsyncpa %s3421, 1

</llo_original>
